<compile_context>
chip_gen: v7x
topology: tpu7x:2x2x1
jax: 0.10.0
libtpu: 0.0.40
codegen_flags: <defaults>
</compile_context>

<pallas_src>
import functools

import jax
import jax.numpy as jnp
from jax.experimental import pallas as pl
from jax.experimental.pallas import tpu as pltpu

LANE = 128
# PyTorch LSTM gate order is (i, f, g, o); we store columns as (i, f, o, g) so one
# sigmoid covers the first 3*Hp lanes and one tanh covers the last Hp lanes.
GATE_PERM = (0, 1, 3, 2)


def _round_up(n, m):
    return ((n + m - 1) // m) * m


# ---------------------------------------------------------------------------
# Fused kernel: all LSTM layers (wavefront-interleaved) + FC head, fully VMEM
# resident.  No grid, no scratch.
#   inputs : x_flat (T*B, Dp) bf16  (time-major, lane-padded)
#            per layer: wx (Din_p, 4*Hp) bf16, wh (Hp, 4*Hp) bf16, b (1, 4*Hp) f32
#            wfc (Hp, Op) bf16, bfc (1, Op) f32
#   output : (T*B, Op) f32   (padded columns are zero; wrapper slices them off)
# ---------------------------------------------------------------------------
def _fused_lstm_fc_kernel(*refs, num_layers, seq_len, batch):
    n_in = 1 + 3 * num_layers + 2
    x_ref = refs[0]
    layer_refs = refs[1:1 + 3 * num_layers]
    wfc_ref = refs[1 + 3 * num_layers]
    bfc_ref = refs[2 + 3 * num_layers]
    out_ref = refs[n_in]

    L, T, B = num_layers, seq_len, batch
    Hp = layer_refs[1].shape[0]          # wh is (Hp, 4*Hp)
    bf16 = jnp.bfloat16

    wx = [layer_refs[3 * l][...] for l in range(L)]        # bf16
    wh = [layer_refs[3 * l + 1][...] for l in range(L)]    # bf16
    bias = [layer_refs[3 * l + 2][...] for l in range(L)]  # f32 (1, 4*Hp)

    # Hoisted layer-0 input projection: one MXU matmul for the whole sequence.
    xp0 = jnp.dot(x_ref[...], wx[0], preferred_element_type=jnp.float32) + bias[0]

    def cell(g, c_prev):
        # gate columns: [i | f | o | g], each a lane-aligned Hp-wide block.
        sig = jax.nn.sigmoid(g[:, :3 * Hp])                # i, f, o in one pass
        i_g = sig[:, 0 * Hp:1 * Hp]
        f_g = sig[:, 1 * Hp:2 * Hp]
        o_g = sig[:, 2 * Hp:3 * Hp]
        g_g = jnp.tanh(g[:, 3 * Hp:4 * Hp])
        c_new = f_g * c_prev + i_g * g_g                   # f32 elementwise carry
        h_new = o_g * jnp.tanh(c_new)
        return h_new, c_new

    h = [jnp.zeros((B, Hp), jnp.float32) for _ in range(L)]
    c = [jnp.zeros((B, Hp), jnp.float32) for _ in range(L)]
    outs = []

    # Wavefront over (layer, time): step s runs layer l at t = s - l.  Every active
    # layer reads only the step-(s-1) snapshot, so the matmuls of different layers
    # within one step are independent and overlap on the MXU/EUP.
    for s in range(T + L - 1):
        h_in = list(h)
        c_in = list(c)
        for l in range(L):
            t = s - l
            if not (0 <= t < T):
                continue
            if l == 0:
                g = xp0[t * B:(t + 1) * B, :] + jnp.dot(
                    h_in[0].astype(bf16), wh[0], preferred_element_type=jnp.float32)
            else:
                g = (jnp.dot(h_in[l - 1].astype(bf16), wx[l],
                             preferred_element_type=jnp.float32)
                     + jnp.dot(h_in[l].astype(bf16), wh[l],
                               preferred_element_type=jnp.float32)
                     + bias[l])
            h[l], c[l] = cell(g, c_in[l])
            if l == L - 1:
                outs.append(h[l])

    hs = jnp.concatenate(outs, axis=0)                      # (T*B, Hp) time-major
    out_ref[...] = (jnp.dot(hs.astype(bf16), wfc_ref[...],
                            preferred_element_type=jnp.float32)
                    + bfc_ref[...])                         # lane-dense store


# ---------------------------------------------------------------------------
# Wrapper (jitted).  kparams hold padded bf16 weights; output is sliced back to O.
# ---------------------------------------------------------------------------
@functools.partial(jax.jit, static_argnums=(2,))
def forward(kparams, x, output_size):
    B, T, Din = x.shape
    num_layers = len(kparams["layers"])
    Hp = kparams["layers"][0][1].shape[0]    # wh is (Hp, 4*Hp)
    Dp = kparams["layers"][0][0].shape[0]    # layer-0 wx is (Dp, 4*Hp)
    Op = kparams["w_fc"].shape[1]

    # time-major flat layout, lane-padded to Dp so the layer-0 projection is lane-dense
    x_tb = jnp.transpose(x, (1, 0, 2)).reshape(T * B, Din)
    x_tb = jnp.pad(x_tb, ((0, 0), (0, Dp - Din))).astype(jnp.bfloat16)

    args = [x_tb]
    for wx, wh, b in kparams["layers"]:
        args.extend([wx, wh, b])
    args.extend([kparams["w_fc"], kparams["b_fc"]])

    out = pl.pallas_call(
        functools.partial(_fused_lstm_fc_kernel,
                          num_layers=num_layers, seq_len=T, batch=B),
        out_shape=jax.ShapeDtypeStruct((T * B, Op), jnp.float32),
        compiler_params=pltpu.CompilerParams(vmem_limit_bytes=32 * 1024 * 1024),
    )(*args)

    out = out.reshape(T, B, Op).transpose(1, 0, 2)
    return out[:, :, :output_size]


# ---------------------------------------------------------------------------
# Parameter init (mimics PyTorch uniform(-1/sqrt(H), 1/sqrt(H)), gate order i,f,g,o)
# ---------------------------------------------------------------------------
def init_params(key, input_size, hidden_size, num_layers, output_size):
    k = 1.0 / float(hidden_size) ** 0.5
    layers = []
    for l in range(num_layers):
        d_in = input_size if l == 0 else hidden_size
        key, k1, k2, k3, k4 = jax.random.split(key, 5)
        w_ih = jax.random.uniform(k1, (4 * hidden_size, d_in), jnp.float32, -k, k)
        w_hh = jax.random.uniform(k2, (4 * hidden_size, hidden_size), jnp.float32, -k, k)
        b_ih = jax.random.uniform(k3, (4 * hidden_size,), jnp.float32, -k, k)
        b_hh = jax.random.uniform(k4, (4 * hidden_size,), jnp.float32, -k, k)
        layers.append((w_ih, w_hh, b_ih + b_hh))
    key, k5, k6 = jax.random.split(key, 3)
    w_fc = jax.random.uniform(k5, (output_size, hidden_size), jnp.float32, -k, k)
    b_fc = jax.random.uniform(k6, (output_size,), jnp.float32, -k, k)
    return {"layers": layers, "w_fc": w_fc, "b_fc": b_fc}


def _pad_gate_cols(w_t, H, Hp):
    """(Din, 4H) PyTorch order (i,f,g,o) -> (Din, 4*Hp) stored order (i,f,o,g),
    each gate block zero-padded to Hp lanes."""
    blocks = [jnp.pad(w_t[:, g * H:(g + 1) * H], ((0, 0), (0, Hp - H)))
              for g in GATE_PERM]
    return jnp.concatenate(blocks, axis=1)


def prepare_kernel_params(params, input_size):
    """Pad to lane-aligned per-gate blocks (order i,f,o,g) and cast matmul weights
    to bf16.  All padding is zeros, which keeps padded hidden lanes identically
    zero through the recurrence (g_pad = 0 => c_pad = 0, h_pad = 0)."""
    layers_k = []
    for l, (w_ih, w_hh, b) in enumerate(params["layers"]):
        H = w_hh.shape[1]
        Hp = _round_up(H, LANE)
        d_in = w_ih.shape[1]
        d_in_p = _round_up(d_in, LANE)                       # layer 0: Dp; else Hp
        wx = _pad_gate_cols(w_ih.T, H, Hp)                   # (d_in, 4*Hp)
        wx = jnp.pad(wx, ((0, d_in_p - d_in), (0, 0)))       # (d_in_p, 4*Hp)
        wh = _pad_gate_cols(w_hh.T, H, Hp)
        wh = jnp.pad(wh, ((0, Hp - H), (0, 0)))              # (Hp, 4*Hp)
        bp = jnp.pad(b.reshape(4, H), ((0, 0), (0, Hp - H)))[list(GATE_PERM), :]
        bp = bp.reshape(1, 4 * Hp)
        layers_k.append((wx.astype(jnp.bfloat16), wh.astype(jnp.bfloat16),
                         bp.astype(jnp.float32)))
    w_fc, b_fc = params["w_fc"], params["b_fc"]              # (O, H), (O,)
    O, H = w_fc.shape
    Hp, Op = _round_up(H, LANE), _round_up(O, LANE)
    wfc = jnp.pad(w_fc.T, ((0, Hp - H), (0, Op - O))).astype(jnp.bfloat16)
    bfc = jnp.pad(b_fc, (0, Op - O)).reshape(1, Op).astype(jnp.float32)
    return {"layers": layers_k, "w_fc": wfc, "b_fc": bfc}


# ---------------------------------------------------------------------------
# Pure-JAX reference mirroring the kernel's numerics (bf16 matmul operands,
# f32 accumulation / elementwise) for the correctness check.
# ---------------------------------------------------------------------------
def forward_ref(params, x):
    B, T, _ = x.shape
    bf = jnp.bfloat16
    seq = jnp.transpose(x, (1, 0, 2))            # (T, B, Din)
    for (w_ih, w_hh, b) in params["layers"]:
        H = w_hh.shape[1]
        wx = w_ih.T.astype(bf)
        wh = w_hh.T.astype(bf)

        def step(carry, x_t, wx=wx, wh=wh, b=b, H=H):
            h, c = carry
            gates = (jnp.dot(x_t.astype(bf), wx, preferred_element_type=jnp.float32)
                     + jnp.dot(h.astype(bf), wh, preferred_element_type=jnp.float32)
                     + b)
            i = jax.nn.sigmoid(gates[:, 0 * H:1 * H])
            f = jax.nn.sigmoid(gates[:, 1 * H:2 * H])
            g = jnp.tanh(gates[:, 2 * H:3 * H])
            o = jax.nn.sigmoid(gates[:, 3 * H:4 * H])
            c = f * c + i * g
            h = o * jnp.tanh(c)
            return (h, c), h

        init = (jnp.zeros((B, H), jnp.float32), jnp.zeros((B, H), jnp.float32))
        _, seq = jax.lax.scan(step, init, seq)
    H = params["layers"][-1][1].shape[1]
    out = (jnp.dot(seq.reshape(T * B, H).astype(bf), params["w_fc"].T.astype(bf),
                   preferred_element_type=jnp.float32) + params["b_fc"])
    return out.reshape(T, B, -1).transpose(1, 0, 2)


if __name__ == "__main__":
    INPUT_SIZE, HIDDEN_SIZE, NUM_LAYERS, OUTPUT_SIZE = 16, 32, 2, 8
    B, T = 2, 8

    key = jax.random.PRNGKey(0)
    key, pkey, xkey = jax.random.split(key, 3)
    params = init_params(pkey, INPUT_SIZE, HIDDEN_SIZE, NUM_LAYERS, OUTPUT_SIZE)
    kparams = prepare_kernel_params(params, INPUT_SIZE)
    x = jax.random.normal(xkey, (B, T, INPUT_SIZE), jnp.float32)

    out = forward(kparams, x, OUTPUT_SIZE)
    jax.block_until_ready(out)
    assert out.shape == (B, T, OUTPUT_SIZE), out.shape

    ref = forward_ref(params, x)
    err = float(jnp.max(jnp.abs(out - ref)))
    # bf16 MXU operands => compare against a bf16-mirrored reference with a small tolerance
    assert err < 1e-2, err

    print("KERNEL_OK")
</pallas_src>

<mosaic_0001>
module attributes {stable_mosaic.version = 11 : i64} {
  func.func @_fused_lstm_fc_kernel(%arg0: memref<16x128xbf16, #tpu.memory_space<vmem>>, %arg1: memref<128x512xbf16, #tpu.memory_space<vmem>>, %arg2: memref<128x512xbf16, #tpu.memory_space<vmem>>, %arg3: memref<1x512xf32, #tpu.memory_space<vmem>>, %arg4: memref<128x512xbf16, #tpu.memory_space<vmem>>, %arg5: memref<128x512xbf16, #tpu.memory_space<vmem>>, %arg6: memref<1x512xf32, #tpu.memory_space<vmem>>, %arg7: memref<128x128xbf16, #tpu.memory_space<vmem>>, %arg8: memref<1x128xf32, #tpu.memory_space<vmem>>, %arg9: memref<16x128xf32, #tpu.memory_space<vmem>>) attributes {dimension_semantics = [], scalar_prefetch = 0 : i64, scratch_operands = 0 : i64, tpu.core_type = #tpu.core_type<tc>} {
    %c0 = arith.constant 0 : index
    %c0_0 = arith.constant 0 : index
    %0 = vector.load %arg1[%c0, %c0_0] : memref<128x512xbf16, #tpu.memory_space<vmem>>, vector<128x512xbf16>
    %c0_1 = arith.constant 0 : index
    %c0_2 = arith.constant 0 : index
    %1 = vector.load %arg4[%c0_1, %c0_2] : memref<128x512xbf16, #tpu.memory_space<vmem>>, vector<128x512xbf16>
    %c0_3 = arith.constant 0 : index
    %c0_4 = arith.constant 0 : index
    %2 = vector.load %arg2[%c0_3, %c0_4] : memref<128x512xbf16, #tpu.memory_space<vmem>>, vector<128x512xbf16>
    %c0_5 = arith.constant 0 : index
    %c0_6 = arith.constant 0 : index
    %3 = vector.load %arg5[%c0_5, %c0_6] : memref<128x512xbf16, #tpu.memory_space<vmem>>, vector<128x512xbf16>
    %c0_7 = arith.constant 0 : index
    %c0_8 = arith.constant 0 : index
    %4 = vector.load %arg3[%c0_7, %c0_8] : memref<1x512xf32, #tpu.memory_space<vmem>>, vector<1x512xf32>
    %c0_9 = arith.constant 0 : index
    %c0_10 = arith.constant 0 : index
    %5 = vector.load %arg6[%c0_9, %c0_10] : memref<1x512xf32, #tpu.memory_space<vmem>>, vector<1x512xf32>
    %c0_11 = arith.constant 0 : index
    %c0_12 = arith.constant 0 : index
    %6 = vector.load %arg0[%c0_11, %c0_12] : memref<16x128xbf16, #tpu.memory_space<vmem>>, vector<16x128xbf16>
    %cst = arith.constant dense<0.000000e+00> : vector<16x512xf32>
    %7 = tpu.matmul %6, %0, %cst {dimension_numbers = #tpu.dot_dimension_numbers<[1], [0], [0], [1], [0, 0, 1, 1], [], []>} : vector<16x128xbf16>, vector<128x512xbf16>, vector<16x512xf32> -> vector<16x512xf32>
    %8 = vector.broadcast %4 : vector<1x512xf32> to vector<16x512xf32>
    %9 = arith.addf %7, %8 : vector<16x512xf32>
    %cst_13 = arith.constant 0.000000e+00 : f32
    %10 = vector.broadcast %cst_13 : f32 to vector<2x128xf32>
    %cst_14 = arith.constant 0.000000e+00 : f32
    %11 = vector.broadcast %cst_14 : f32 to vector<2x128xf32>
    %cst_15 = arith.constant 0.000000e+00 : f32
    %12 = vector.broadcast %cst_15 : f32 to vector<2x128xf32>
    %cst_16 = arith.constant 0.000000e+00 : f32
    %13 = vector.broadcast %cst_16 : f32 to vector<2x128xf32>
    %14 = vector.extract_strided_slice %9 {offsets = [0, 0], sizes = [2, 512], strides = [1, 1]} : vector<16x512xf32> to vector<2x512xf32>
    %15 = arith.truncf %10 : vector<2x128xf32> to vector<2x128xbf16>
    %cst_17 = arith.constant dense<0.000000e+00> : vector<2x512xf32>
    %16 = tpu.matmul %15, %2, %cst_17 {dimension_numbers = #tpu.dot_dimension_numbers<[1], [0], [0], [1], [0, 0, 1, 1], [], []>} : vector<2x128xbf16>, vector<128x512xbf16>, vector<2x512xf32> -> vector<2x512xf32>
    %17 = arith.addf %14, %16 : vector<2x512xf32>
    %18 = vector.extract_strided_slice %17 {offsets = [0, 0], sizes = [2, 384], strides = [1, 1]} : vector<2x512xf32> to vector<2x384xf32>
    %19 = arith.negf %18 : vector<2x384xf32>
    %20 = math.exp %19 : vector<2x384xf32>
    %cst_18 = arith.constant 1.000000e+00 : f32
    %21 = vector.broadcast %cst_18 : f32 to vector<2x384xf32>
    %22 = arith.addf %21, %20 : vector<2x384xf32>
    %23 = arith.divf %21, %22 : vector<2x384xf32>
    %24 = vector.extract_strided_slice %23 {offsets = [0, 0], sizes = [2, 128], strides = [1, 1]} : vector<2x384xf32> to vector<2x128xf32>
    %25 = vector.extract_strided_slice %23 {offsets = [0, 128], sizes = [2, 128], strides = [1, 1]} : vector<2x384xf32> to vector<2x128xf32>
    %26 = vector.extract_strided_slice %23 {offsets = [0, 256], sizes = [2, 128], strides = [1, 1]} : vector<2x384xf32> to vector<2x128xf32>
    %27 = vector.extract_strided_slice %17 {offsets = [0, 384], sizes = [2, 128], strides = [1, 1]} : vector<2x512xf32> to vector<2x128xf32>
    %28 = math.tanh %27 : vector<2x128xf32>
    %29 = arith.mulf %25, %12 : vector<2x128xf32>
    %30 = arith.mulf %24, %28 : vector<2x128xf32>
    %31 = arith.addf %29, %30 : vector<2x128xf32>
    %32 = math.tanh %31 : vector<2x128xf32>
    %33 = arith.mulf %26, %32 : vector<2x128xf32>
    %34 = vector.extract_strided_slice %9 {offsets = [2, 0], sizes = [2, 512], strides = [1, 1]} : vector<16x512xf32> to vector<2x512xf32>
    %35 = arith.truncf %33 : vector<2x128xf32> to vector<2x128xbf16>
    %cst_19 = arith.constant dense<0.000000e+00> : vector<2x512xf32>
    %36 = tpu.matmul %35, %2, %cst_19 {dimension_numbers = #tpu.dot_dimension_numbers<[1], [0], [0], [1], [0, 0, 1, 1], [], []>} : vector<2x128xbf16>, vector<128x512xbf16>, vector<2x512xf32> -> vector<2x512xf32>
    %37 = arith.addf %34, %36 : vector<2x512xf32>
    %38 = vector.extract_strided_slice %37 {offsets = [0, 0], sizes = [2, 384], strides = [1, 1]} : vector<2x512xf32> to vector<2x384xf32>
    %39 = arith.negf %38 : vector<2x384xf32>
    %40 = math.exp %39 : vector<2x384xf32>
    %cst_20 = arith.constant 1.000000e+00 : f32
    %41 = vector.broadcast %cst_20 : f32 to vector<2x384xf32>
    %42 = arith.addf %41, %40 : vector<2x384xf32>
    %43 = arith.divf %41, %42 : vector<2x384xf32>
    %44 = vector.extract_strided_slice %43 {offsets = [0, 0], sizes = [2, 128], strides = [1, 1]} : vector<2x384xf32> to vector<2x128xf32>
    %45 = vector.extract_strided_slice %43 {offsets = [0, 128], sizes = [2, 128], strides = [1, 1]} : vector<2x384xf32> to vector<2x128xf32>
    %46 = vector.extract_strided_slice %43 {offsets = [0, 256], sizes = [2, 128], strides = [1, 1]} : vector<2x384xf32> to vector<2x128xf32>
    %47 = vector.extract_strided_slice %37 {offsets = [0, 384], sizes = [2, 128], strides = [1, 1]} : vector<2x512xf32> to vector<2x128xf32>
    %48 = math.tanh %47 : vector<2x128xf32>
    %49 = arith.mulf %45, %31 : vector<2x128xf32>
    %50 = arith.mulf %44, %48 : vector<2x128xf32>
    %51 = arith.addf %49, %50 : vector<2x128xf32>
    %52 = math.tanh %51 : vector<2x128xf32>
    %53 = arith.mulf %46, %52 : vector<2x128xf32>
    %54 = arith.truncf %33 : vector<2x128xf32> to vector<2x128xbf16>
    %cst_21 = arith.constant dense<0.000000e+00> : vector<2x512xf32>
    %55 = tpu.matmul %54, %1, %cst_21 {dimension_numbers = #tpu.dot_dimension_numbers<[1], [0], [0], [1], [0, 0, 1, 1], [], []>} : vector<2x128xbf16>, vector<128x512xbf16>, vector<2x512xf32> -> vector<2x512xf32>
    %56 = arith.truncf %11 : vector<2x128xf32> to vector<2x128xbf16>
    %cst_22 = arith.constant dense<0.000000e+00> : vector<2x512xf32>
    %57 = tpu.matmul %56, %3, %cst_22 {dimension_numbers = #tpu.dot_dimension_numbers<[1], [0], [0], [1], [0, 0, 1, 1], [], []>} : vector<2x128xbf16>, vector<128x512xbf16>, vector<2x512xf32> -> vector<2x512xf32>
    %58 = arith.addf %55, %57 : vector<2x512xf32>
    %59 = vector.broadcast %5 : vector<1x512xf32> to vector<2x512xf32>
    %60 = arith.addf %58, %59 : vector<2x512xf32>
    %61 = vector.extract_strided_slice %60 {offsets = [0, 0], sizes = [2, 384], strides = [1, 1]} : vector<2x512xf32> to vector<2x384xf32>
    %62 = arith.negf %61 : vector<2x384xf32>
    %63 = math.exp %62 : vector<2x384xf32>
    %cst_23 = arith.constant 1.000000e+00 : f32
    %64 = vector.broadcast %cst_23 : f32 to vector<2x384xf32>
    %65 = arith.addf %64, %63 : vector<2x384xf32>
    %66 = arith.divf %64, %65 : vector<2x384xf32>
    %67 = vector.extract_strided_slice %66 {offsets = [0, 0], sizes = [2, 128], strides = [1, 1]} : vector<2x384xf32> to vector<2x128xf32>
    %68 = vector.extract_strided_slice %66 {offsets = [0, 128], sizes = [2, 128], strides = [1, 1]} : vector<2x384xf32> to vector<2x128xf32>
    %69 = vector.extract_strided_slice %66 {offsets = [0, 256], sizes = [2, 128], strides = [1, 1]} : vector<2x384xf32> to vector<2x128xf32>
    %70 = vector.extract_strided_slice %60 {offsets = [0, 384], sizes = [2, 128], strides = [1, 1]} : vector<2x512xf32> to vector<2x128xf32>
    %71 = math.tanh %70 : vector<2x128xf32>
    %72 = arith.mulf %68, %13 : vector<2x128xf32>
    %73 = arith.mulf %67, %71 : vector<2x128xf32>
    %74 = arith.addf %72, %73 : vector<2x128xf32>
    %75 = math.tanh %74 : vector<2x128xf32>
    %76 = arith.mulf %69, %75 : vector<2x128xf32>
    %77 = vector.extract_strided_slice %9 {offsets = [4, 0], sizes = [2, 512], strides = [1, 1]} : vector<16x512xf32> to vector<2x512xf32>
    %78 = arith.truncf %53 : vector<2x128xf32> to vector<2x128xbf16>
    %cst_24 = arith.constant dense<0.000000e+00> : vector<2x512xf32>
    %79 = tpu.matmul %78, %2, %cst_24 {dimension_numbers = #tpu.dot_dimension_numbers<[1], [0], [0], [1], [0, 0, 1, 1], [], []>} : vector<2x128xbf16>, vector<128x512xbf16>, vector<2x512xf32> -> vector<2x512xf32>
    %80 = arith.addf %77, %79 : vector<2x512xf32>
    %81 = vector.extract_strided_slice %80 {offsets = [0, 0], sizes = [2, 384], strides = [1, 1]} : vector<2x512xf32> to vector<2x384xf32>
    %82 = arith.negf %81 : vector<2x384xf32>
    %83 = math.exp %82 : vector<2x384xf32>
    %cst_25 = arith.constant 1.000000e+00 : f32
    %84 = vector.broadcast %cst_25 : f32 to vector<2x384xf32>
    %85 = arith.addf %84, %83 : vector<2x384xf32>
    %86 = arith.divf %84, %85 : vector<2x384xf32>
    %87 = vector.extract_strided_slice %86 {offsets = [0, 0], sizes = [2, 128], strides = [1, 1]} : vector<2x384xf32> to vector<2x128xf32>
    %88 = vector.extract_strided_slice %86 {offsets = [0, 128], sizes = [2, 128], strides = [1, 1]} : vector<2x384xf32> to vector<2x128xf32>
    %89 = vector.extract_strided_slice %86 {offsets = [0, 256], sizes = [2, 128], strides = [1, 1]} : vector<2x384xf32> to vector<2x128xf32>
    %90 = vector.extract_strided_slice %80 {offsets = [0, 384], sizes = [2, 128], strides = [1, 1]} : vector<2x512xf32> to vector<2x128xf32>
    %91 = math.tanh %90 : vector<2x128xf32>
    %92 = arith.mulf %88, %51 : vector<2x128xf32>
    %93 = arith.mulf %87, %91 : vector<2x128xf32>
    %94 = arith.addf %92, %93 : vector<2x128xf32>
    %95 = math.tanh %94 : vector<2x128xf32>
    %96 = arith.mulf %89, %95 : vector<2x128xf32>
    %97 = arith.truncf %53 : vector<2x128xf32> to vector<2x128xbf16>
    %cst_26 = arith.constant dense<0.000000e+00> : vector<2x512xf32>
    %98 = tpu.matmul %97, %1, %cst_26 {dimension_numbers = #tpu.dot_dimension_numbers<[1], [0], [0], [1], [0, 0, 1, 1], [], []>} : vector<2x128xbf16>, vector<128x512xbf16>, vector<2x512xf32> -> vector<2x512xf32>
    %99 = arith.truncf %76 : vector<2x128xf32> to vector<2x128xbf16>
    %cst_27 = arith.constant dense<0.000000e+00> : vector<2x512xf32>
    %100 = tpu.matmul %99, %3, %cst_27 {dimension_numbers = #tpu.dot_dimension_numbers<[1], [0], [0], [1], [0, 0, 1, 1], [], []>} : vector<2x128xbf16>, vector<128x512xbf16>, vector<2x512xf32> -> vector<2x512xf32>
    %101 = arith.addf %98, %100 : vector<2x512xf32>
    %102 = vector.broadcast %5 : vector<1x512xf32> to vector<2x512xf32>
    %103 = arith.addf %101, %102 : vector<2x512xf32>
    %104 = vector.extract_strided_slice %103 {offsets = [0, 0], sizes = [2, 384], strides = [1, 1]} : vector<2x512xf32> to vector<2x384xf32>
    %105 = arith.negf %104 : vector<2x384xf32>
    %106 = math.exp %105 : vector<2x384xf32>
    %cst_28 = arith.constant 1.000000e+00 : f32
    %107 = vector.broadcast %cst_28 : f32 to vector<2x384xf32>
    %108 = arith.addf %107, %106 : vector<2x384xf32>
    %109 = arith.divf %107, %108 : vector<2x384xf32>
    %110 = vector.extract_strided_slice %109 {offsets = [0, 0], sizes = [2, 128], strides = [1, 1]} : vector<2x384xf32> to vector<2x128xf32>
    %111 = vector.extract_strided_slice %109 {offsets = [0, 128], sizes = [2, 128], strides = [1, 1]} : vector<2x384xf32> to vector<2x128xf32>
    %112 = vector.extract_strided_slice %109 {offsets = [0, 256], sizes = [2, 128], strides = [1, 1]} : vector<2x384xf32> to vector<2x128xf32>
    %113 = vector.extract_strided_slice %103 {offsets = [0, 384], sizes = [2, 128], strides = [1, 1]} : vector<2x512xf32> to vector<2x128xf32>
    %114 = math.tanh %113 : vector<2x128xf32>
    %115 = arith.mulf %111, %74 : vector<2x128xf32>
    %116 = arith.mulf %110, %114 : vector<2x128xf32>
    %117 = arith.addf %115, %116 : vector<2x128xf32>
    %118 = math.tanh %117 : vector<2x128xf32>
    %119 = arith.mulf %112, %118 : vector<2x128xf32>
    %120 = vector.extract_strided_slice %9 {offsets = [6, 0], sizes = [2, 512], strides = [1, 1]} : vector<16x512xf32> to vector<2x512xf32>
    %121 = arith.truncf %96 : vector<2x128xf32> to vector<2x128xbf16>
    %cst_29 = arith.constant dense<0.000000e+00> : vector<2x512xf32>
    %122 = tpu.matmul %121, %2, %cst_29 {dimension_numbers = #tpu.dot_dimension_numbers<[1], [0], [0], [1], [0, 0, 1, 1], [], []>} : vector<2x128xbf16>, vector<128x512xbf16>, vector<2x512xf32> -> vector<2x512xf32>
    %123 = arith.addf %120, %122 : vector<2x512xf32>
    %124 = vector.extract_strided_slice %123 {offsets = [0, 0], sizes = [2, 384], strides = [1, 1]} : vector<2x512xf32> to vector<2x384xf32>
    %125 = arith.negf %124 : vector<2x384xf32>
    %126 = math.exp %125 : vector<2x384xf32>
    %cst_30 = arith.constant 1.000000e+00 : f32
    %127 = vector.broadcast %cst_30 : f32 to vector<2x384xf32>
    %128 = arith.addf %127, %126 : vector<2x384xf32>
    %129 = arith.divf %127, %128 : vector<2x384xf32>
    %130 = vector.extract_strided_slice %129 {offsets = [0, 0], sizes = [2, 128], strides = [1, 1]} : vector<2x384xf32> to vector<2x128xf32>
    %131 = vector.extract_strided_slice %129 {offsets = [0, 128], sizes = [2, 128], strides = [1, 1]} : vector<2x384xf32> to vector<2x128xf32>
    %132 = vector.extract_strided_slice %129 {offsets = [0, 256], sizes = [2, 128], strides = [1, 1]} : vector<2x384xf32> to vector<2x128xf32>
    %133 = vector.extract_strided_slice %123 {offsets = [0, 384], sizes = [2, 128], strides = [1, 1]} : vector<2x512xf32> to vector<2x128xf32>
    %134 = math.tanh %133 : vector<2x128xf32>
    %135 = arith.mulf %131, %94 : vector<2x128xf32>
    %136 = arith.mulf %130, %134 : vector<2x128xf32>
    %137 = arith.addf %135, %136 : vector<2x128xf32>
    %138 = math.tanh %137 : vector<2x128xf32>
    %139 = arith.mulf %132, %138 : vector<2x128xf32>
    %140 = arith.truncf %96 : vector<2x128xf32> to vector<2x128xbf16>
    %cst_31 = arith.constant dense<0.000000e+00> : vector<2x512xf32>
    %141 = tpu.matmul %140, %1, %cst_31 {dimension_numbers = #tpu.dot_dimension_numbers<[1], [0], [0], [1], [0, 0, 1, 1], [], []>} : vector<2x128xbf16>, vector<128x512xbf16>, vector<2x512xf32> -> vector<2x512xf32>
    %142 = arith.truncf %119 : vector<2x128xf32> to vector<2x128xbf16>
    %cst_32 = arith.constant dense<0.000000e+00> : vector<2x512xf32>
    %143 = tpu.matmul %142, %3, %cst_32 {dimension_numbers = #tpu.dot_dimension_numbers<[1], [0], [0], [1], [0, 0, 1, 1], [], []>} : vector<2x128xbf16>, vector<128x512xbf16>, vector<2x512xf32> -> vector<2x512xf32>
    %144 = arith.addf %141, %143 : vector<2x512xf32>
    %145 = vector.broadcast %5 : vector<1x512xf32> to vector<2x512xf32>
    %146 = arith.addf %144, %145 : vector<2x512xf32>
    %147 = vector.extract_strided_slice %146 {offsets = [0, 0], sizes = [2, 384], strides = [1, 1]} : vector<2x512xf32> to vector<2x384xf32>
    %148 = arith.negf %147 : vector<2x384xf32>
    %149 = math.exp %148 : vector<2x384xf32>
    %cst_33 = arith.constant 1.000000e+00 : f32
    %150 = vector.broadcast %cst_33 : f32 to vector<2x384xf32>
    %151 = arith.addf %150, %149 : vector<2x384xf32>
    %152 = arith.divf %150, %151 : vector<2x384xf32>
    %153 = vector.extract_strided_slice %152 {offsets = [0, 0], sizes = [2, 128], strides = [1, 1]} : vector<2x384xf32> to vector<2x128xf32>
    %154 = vector.extract_strided_slice %152 {offsets = [0, 128], sizes = [2, 128], strides = [1, 1]} : vector<2x384xf32> to vector<2x128xf32>
    %155 = vector.extract_strided_slice %152 {offsets = [0, 256], sizes = [2, 128], strides = [1, 1]} : vector<2x384xf32> to vector<2x128xf32>
    %156 = vector.extract_strided_slice %146 {offsets = [0, 384], sizes = [2, 128], strides = [1, 1]} : vector<2x512xf32> to vector<2x128xf32>
    %157 = math.tanh %156 : vector<2x128xf32>
    %158 = arith.mulf %154, %117 : vector<2x128xf32>
    %159 = arith.mulf %153, %157 : vector<2x128xf32>
    %160 = arith.addf %158, %159 : vector<2x128xf32>
    %161 = math.tanh %160 : vector<2x128xf32>
    %162 = arith.mulf %155, %161 : vector<2x128xf32>
    %163 = vector.extract_strided_slice %9 {offsets = [8, 0], sizes = [2, 512], strides = [1, 1]} : vector<16x512xf32> to vector<2x512xf32>
    %164 = arith.truncf %139 : vector<2x128xf32> to vector<2x128xbf16>
    %cst_34 = arith.constant dense<0.000000e+00> : vector<2x512xf32>
    %165 = tpu.matmul %164, %2, %cst_34 {dimension_numbers = #tpu.dot_dimension_numbers<[1], [0], [0], [1], [0, 0, 1, 1], [], []>} : vector<2x128xbf16>, vector<128x512xbf16>, vector<2x512xf32> -> vector<2x512xf32>
    %166 = arith.addf %163, %165 : vector<2x512xf32>
    %167 = vector.extract_strided_slice %166 {offsets = [0, 0], sizes = [2, 384], strides = [1, 1]} : vector<2x512xf32> to vector<2x384xf32>
    %168 = arith.negf %167 : vector<2x384xf32>
    %169 = math.exp %168 : vector<2x384xf32>
    %cst_35 = arith.constant 1.000000e+00 : f32
    %170 = vector.broadcast %cst_35 : f32 to vector<2x384xf32>
    %171 = arith.addf %170, %169 : vector<2x384xf32>
    %172 = arith.divf %170, %171 : vector<2x384xf32>
    %173 = vector.extract_strided_slice %172 {offsets = [0, 0], sizes = [2, 128], strides = [1, 1]} : vector<2x384xf32> to vector<2x128xf32>
    %174 = vector.extract_strided_slice %172 {offsets = [0, 128], sizes = [2, 128], strides = [1, 1]} : vector<2x384xf32> to vector<2x128xf32>
    %175 = vector.extract_strided_slice %172 {offsets = [0, 256], sizes = [2, 128], strides = [1, 1]} : vector<2x384xf32> to vector<2x128xf32>
    %176 = vector.extract_strided_slice %166 {offsets = [0, 384], sizes = [2, 128], strides = [1, 1]} : vector<2x512xf32> to vector<2x128xf32>
    %177 = math.tanh %176 : vector<2x128xf32>
    %178 = arith.mulf %174, %137 : vector<2x128xf32>
    %179 = arith.mulf %173, %177 : vector<2x128xf32>
    %180 = arith.addf %178, %179 : vector<2x128xf32>
    %181 = math.tanh %180 : vector<2x128xf32>
    %182 = arith.mulf %175, %181 : vector<2x128xf32>
    %183 = arith.truncf %139 : vector<2x128xf32> to vector<2x128xbf16>
    %cst_36 = arith.constant dense<0.000000e+00> : vector<2x512xf32>
    %184 = tpu.matmul %183, %1, %cst_36 {dimension_numbers = #tpu.dot_dimension_numbers<[1], [0], [0], [1], [0, 0, 1, 1], [], []>} : vector<2x128xbf16>, vector<128x512xbf16>, vector<2x512xf32> -> vector<2x512xf32>
    %185 = arith.truncf %162 : vector<2x128xf32> to vector<2x128xbf16>
    %cst_37 = arith.constant dense<0.000000e+00> : vector<2x512xf32>
    %186 = tpu.matmul %185, %3, %cst_37 {dimension_numbers = #tpu.dot_dimension_numbers<[1], [0], [0], [1], [0, 0, 1, 1], [], []>} : vector<2x128xbf16>, vector<128x512xbf16>, vector<2x512xf32> -> vector<2x512xf32>
    %187 = arith.addf %184, %186 : vector<2x512xf32>
    %188 = vector.broadcast %5 : vector<1x512xf32> to vector<2x512xf32>
    %189 = arith.addf %187, %188 : vector<2x512xf32>
    %190 = vector.extract_strided_slice %189 {offsets = [0, 0], sizes = [2, 384], strides = [1, 1]} : vector<2x512xf32> to vector<2x384xf32>
    %191 = arith.negf %190 : vector<2x384xf32>
    %192 = math.exp %191 : vector<2x384xf32>
    %cst_38 = arith.constant 1.000000e+00 : f32
    %193 = vector.broadcast %cst_38 : f32 to vector<2x384xf32>
    %194 = arith.addf %193, %192 : vector<2x384xf32>
    %195 = arith.divf %193, %194 : vector<2x384xf32>
    %196 = vector.extract_strided_slice %195 {offsets = [0, 0], sizes = [2, 128], strides = [1, 1]} : vector<2x384xf32> to vector<2x128xf32>
    %197 = vector.extract_strided_slice %195 {offsets = [0, 128], sizes = [2, 128], strides = [1, 1]} : vector<2x384xf32> to vector<2x128xf32>
    %198 = vector.extract_strided_slice %195 {offsets = [0, 256], sizes = [2, 128], strides = [1, 1]} : vector<2x384xf32> to vector<2x128xf32>
    %199 = vector.extract_strided_slice %189 {offsets = [0, 384], sizes = [2, 128], strides = [1, 1]} : vector<2x512xf32> to vector<2x128xf32>
    %200 = math.tanh %199 : vector<2x128xf32>
    %201 = arith.mulf %197, %160 : vector<2x128xf32>
    %202 = arith.mulf %196, %200 : vector<2x128xf32>
    %203 = arith.addf %201, %202 : vector<2x128xf32>
    %204 = math.tanh %203 : vector<2x128xf32>
    %205 = arith.mulf %198, %204 : vector<2x128xf32>
    %206 = vector.extract_strided_slice %9 {offsets = [10, 0], sizes = [2, 512], strides = [1, 1]} : vector<16x512xf32> to vector<2x512xf32>
    %207 = arith.truncf %182 : vector<2x128xf32> to vector<2x128xbf16>
    %cst_39 = arith.constant dense<0.000000e+00> : vector<2x512xf32>
    %208 = tpu.matmul %207, %2, %cst_39 {dimension_numbers = #tpu.dot_dimension_numbers<[1], [0], [0], [1], [0, 0, 1, 1], [], []>} : vector<2x128xbf16>, vector<128x512xbf16>, vector<2x512xf32> -> vector<2x512xf32>
    %209 = arith.addf %206, %208 : vector<2x512xf32>
    %210 = vector.extract_strided_slice %209 {offsets = [0, 0], sizes = [2, 384], strides = [1, 1]} : vector<2x512xf32> to vector<2x384xf32>
    %211 = arith.negf %210 : vector<2x384xf32>
    %212 = math.exp %211 : vector<2x384xf32>
    %cst_40 = arith.constant 1.000000e+00 : f32
    %213 = vector.broadcast %cst_40 : f32 to vector<2x384xf32>
    %214 = arith.addf %213, %212 : vector<2x384xf32>
    %215 = arith.divf %213, %214 : vector<2x384xf32>
    %216 = vector.extract_strided_slice %215 {offsets = [0, 0], sizes = [2, 128], strides = [1, 1]} : vector<2x384xf32> to vector<2x128xf32>
    %217 = vector.extract_strided_slice %215 {offsets = [0, 128], sizes = [2, 128], strides = [1, 1]} : vector<2x384xf32> to vector<2x128xf32>
    %218 = vector.extract_strided_slice %215 {offsets = [0, 256], sizes = [2, 128], strides = [1, 1]} : vector<2x384xf32> to vector<2x128xf32>
    %219 = vector.extract_strided_slice %209 {offsets = [0, 384], sizes = [2, 128], strides = [1, 1]} : vector<2x512xf32> to vector<2x128xf32>
    %220 = math.tanh %219 : vector<2x128xf32>
    %221 = arith.mulf %217, %180 : vector<2x128xf32>
    %222 = arith.mulf %216, %220 : vector<2x128xf32>
    %223 = arith.addf %221, %222 : vector<2x128xf32>
    %224 = math.tanh %223 : vector<2x128xf32>
    %225 = arith.mulf %218, %224 : vector<2x128xf32>
    %226 = arith.truncf %182 : vector<2x128xf32> to vector<2x128xbf16>
    %cst_41 = arith.constant dense<0.000000e+00> : vector<2x512xf32>
    %227 = tpu.matmul %226, %1, %cst_41 {dimension_numbers = #tpu.dot_dimension_numbers<[1], [0], [0], [1], [0, 0, 1, 1], [], []>} : vector<2x128xbf16>, vector<128x512xbf16>, vector<2x512xf32> -> vector<2x512xf32>
    %228 = arith.truncf %205 : vector<2x128xf32> to vector<2x128xbf16>
    %cst_42 = arith.constant dense<0.000000e+00> : vector<2x512xf32>
    %229 = tpu.matmul %228, %3, %cst_42 {dimension_numbers = #tpu.dot_dimension_numbers<[1], [0], [0], [1], [0, 0, 1, 1], [], []>} : vector<2x128xbf16>, vector<128x512xbf16>, vector<2x512xf32> -> vector<2x512xf32>
    %230 = arith.addf %227, %229 : vector<2x512xf32>
    %231 = vector.broadcast %5 : vector<1x512xf32> to vector<2x512xf32>
    %232 = arith.addf %230, %231 : vector<2x512xf32>
    %233 = vector.extract_strided_slice %232 {offsets = [0, 0], sizes = [2, 384], strides = [1, 1]} : vector<2x512xf32> to vector<2x384xf32>
    %234 = arith.negf %233 : vector<2x384xf32>
    %235 = math.exp %234 : vector<2x384xf32>
    %cst_43 = arith.constant 1.000000e+00 : f32
    %236 = vector.broadcast %cst_43 : f32 to vector<2x384xf32>
    %237 = arith.addf %236, %235 : vector<2x384xf32>
    %238 = arith.divf %236, %237 : vector<2x384xf32>
    %239 = vector.extract_strided_slice %238 {offsets = [0, 0], sizes = [2, 128], strides = [1, 1]} : vector<2x384xf32> to vector<2x128xf32>
    %240 = vector.extract_strided_slice %238 {offsets = [0, 128], sizes = [2, 128], strides = [1, 1]} : vector<2x384xf32> to vector<2x128xf32>
    %241 = vector.extract_strided_slice %238 {offsets = [0, 256], sizes = [2, 128], strides = [1, 1]} : vector<2x384xf32> to vector<2x128xf32>
    %242 = vector.extract_strided_slice %232 {offsets = [0, 384], sizes = [2, 128], strides = [1, 1]} : vector<2x512xf32> to vector<2x128xf32>
    %243 = math.tanh %242 : vector<2x128xf32>
    %244 = arith.mulf %240, %203 : vector<2x128xf32>
    %245 = arith.mulf %239, %243 : vector<2x128xf32>
    %246 = arith.addf %244, %245 : vector<2x128xf32>
    %247 = math.tanh %246 : vector<2x128xf32>
    %248 = arith.mulf %241, %247 : vector<2x128xf32>
    %249 = vector.extract_strided_slice %9 {offsets = [12, 0], sizes = [2, 512], strides = [1, 1]} : vector<16x512xf32> to vector<2x512xf32>
    %250 = arith.truncf %225 : vector<2x128xf32> to vector<2x128xbf16>
    %cst_44 = arith.constant dense<0.000000e+00> : vector<2x512xf32>
    %251 = tpu.matmul %250, %2, %cst_44 {dimension_numbers = #tpu.dot_dimension_numbers<[1], [0], [0], [1], [0, 0, 1, 1], [], []>} : vector<2x128xbf16>, vector<128x512xbf16>, vector<2x512xf32> -> vector<2x512xf32>
    %252 = arith.addf %249, %251 : vector<2x512xf32>
    %253 = vector.extract_strided_slice %252 {offsets = [0, 0], sizes = [2, 384], strides = [1, 1]} : vector<2x512xf32> to vector<2x384xf32>
    %254 = arith.negf %253 : vector<2x384xf32>
    %255 = math.exp %254 : vector<2x384xf32>
    %cst_45 = arith.constant 1.000000e+00 : f32
    %256 = vector.broadcast %cst_45 : f32 to vector<2x384xf32>
    %257 = arith.addf %256, %255 : vector<2x384xf32>
    %258 = arith.divf %256, %257 : vector<2x384xf32>
    %259 = vector.extract_strided_slice %258 {offsets = [0, 0], sizes = [2, 128], strides = [1, 1]} : vector<2x384xf32> to vector<2x128xf32>
    %260 = vector.extract_strided_slice %258 {offsets = [0, 128], sizes = [2, 128], strides = [1, 1]} : vector<2x384xf32> to vector<2x128xf32>
    %261 = vector.extract_strided_slice %258 {offsets = [0, 256], sizes = [2, 128], strides = [1, 1]} : vector<2x384xf32> to vector<2x128xf32>
    %262 = vector.extract_strided_slice %252 {offsets = [0, 384], sizes = [2, 128], strides = [1, 1]} : vector<2x512xf32> to vector<2x128xf32>
    %263 = math.tanh %262 : vector<2x128xf32>
    %264 = arith.mulf %260, %223 : vector<2x128xf32>
    %265 = arith.mulf %259, %263 : vector<2x128xf32>
    %266 = arith.addf %264, %265 : vector<2x128xf32>
    %267 = math.tanh %266 : vector<2x128xf32>
    %268 = arith.mulf %261, %267 : vector<2x128xf32>
    %269 = arith.truncf %225 : vector<2x128xf32> to vector<2x128xbf16>
    %cst_46 = arith.constant dense<0.000000e+00> : vector<2x512xf32>
    %270 = tpu.matmul %269, %1, %cst_46 {dimension_numbers = #tpu.dot_dimension_numbers<[1], [0], [0], [1], [0, 0, 1, 1], [], []>} : vector<2x128xbf16>, vector<128x512xbf16>, vector<2x512xf32> -> vector<2x512xf32>
    %271 = arith.truncf %248 : vector<2x128xf32> to vector<2x128xbf16>
    %cst_47 = arith.constant dense<0.000000e+00> : vector<2x512xf32>
    %272 = tpu.matmul %271, %3, %cst_47 {dimension_numbers = #tpu.dot_dimension_numbers<[1], [0], [0], [1], [0, 0, 1, 1], [], []>} : vector<2x128xbf16>, vector<128x512xbf16>, vector<2x512xf32> -> vector<2x512xf32>
    %273 = arith.addf %270, %272 : vector<2x512xf32>
    %274 = vector.broadcast %5 : vector<1x512xf32> to vector<2x512xf32>
    %275 = arith.addf %273, %274 : vector<2x512xf32>
    %276 = vector.extract_strided_slice %275 {offsets = [0, 0], sizes = [2, 384], strides = [1, 1]} : vector<2x512xf32> to vector<2x384xf32>
    %277 = arith.negf %276 : vector<2x384xf32>
    %278 = math.exp %277 : vector<2x384xf32>
    %cst_48 = arith.constant 1.000000e+00 : f32
    %279 = vector.broadcast %cst_48 : f32 to vector<2x384xf32>
    %280 = arith.addf %279, %278 : vector<2x384xf32>
    %281 = arith.divf %279, %280 : vector<2x384xf32>
    %282 = vector.extract_strided_slice %281 {offsets = [0, 0], sizes = [2, 128], strides = [1, 1]} : vector<2x384xf32> to vector<2x128xf32>
    %283 = vector.extract_strided_slice %281 {offsets = [0, 128], sizes = [2, 128], strides = [1, 1]} : vector<2x384xf32> to vector<2x128xf32>
    %284 = vector.extract_strided_slice %281 {offsets = [0, 256], sizes = [2, 128], strides = [1, 1]} : vector<2x384xf32> to vector<2x128xf32>
    %285 = vector.extract_strided_slice %275 {offsets = [0, 384], sizes = [2, 128], strides = [1, 1]} : vector<2x512xf32> to vector<2x128xf32>
    %286 = math.tanh %285 : vector<2x128xf32>
    %287 = arith.mulf %283, %246 : vector<2x128xf32>
    %288 = arith.mulf %282, %286 : vector<2x128xf32>
    %289 = arith.addf %287, %288 : vector<2x128xf32>
    %290 = math.tanh %289 : vector<2x128xf32>
    %291 = arith.mulf %284, %290 : vector<2x128xf32>
    %292 = vector.extract_strided_slice %9 {offsets = [14, 0], sizes = [2, 512], strides = [1, 1]} : vector<16x512xf32> to vector<2x512xf32>
    %293 = arith.truncf %268 : vector<2x128xf32> to vector<2x128xbf16>
    %cst_49 = arith.constant dense<0.000000e+00> : vector<2x512xf32>
    %294 = tpu.matmul %293, %2, %cst_49 {dimension_numbers = #tpu.dot_dimension_numbers<[1], [0], [0], [1], [0, 0, 1, 1], [], []>} : vector<2x128xbf16>, vector<128x512xbf16>, vector<2x512xf32> -> vector<2x512xf32>
    %295 = arith.addf %292, %294 : vector<2x512xf32>
    %296 = vector.extract_strided_slice %295 {offsets = [0, 0], sizes = [2, 384], strides = [1, 1]} : vector<2x512xf32> to vector<2x384xf32>
    %297 = arith.negf %296 : vector<2x384xf32>
    %298 = math.exp %297 : vector<2x384xf32>
    %cst_50 = arith.constant 1.000000e+00 : f32
    %299 = vector.broadcast %cst_50 : f32 to vector<2x384xf32>
    %300 = arith.addf %299, %298 : vector<2x384xf32>
    %301 = arith.divf %299, %300 : vector<2x384xf32>
    %302 = vector.extract_strided_slice %301 {offsets = [0, 0], sizes = [2, 128], strides = [1, 1]} : vector<2x384xf32> to vector<2x128xf32>
    %303 = vector.extract_strided_slice %301 {offsets = [0, 128], sizes = [2, 128], strides = [1, 1]} : vector<2x384xf32> to vector<2x128xf32>
    %304 = vector.extract_strided_slice %301 {offsets = [0, 256], sizes = [2, 128], strides = [1, 1]} : vector<2x384xf32> to vector<2x128xf32>
    %305 = vector.extract_strided_slice %295 {offsets = [0, 384], sizes = [2, 128], strides = [1, 1]} : vector<2x512xf32> to vector<2x128xf32>
    %306 = math.tanh %305 : vector<2x128xf32>
    %307 = arith.mulf %303, %266 : vector<2x128xf32>
    %308 = arith.mulf %302, %306 : vector<2x128xf32>
    %309 = arith.addf %307, %308 : vector<2x128xf32>
    %310 = math.tanh %309 : vector<2x128xf32>
    %311 = arith.mulf %304, %310 : vector<2x128xf32>
    %312 = arith.truncf %268 : vector<2x128xf32> to vector<2x128xbf16>
    %cst_51 = arith.constant dense<0.000000e+00> : vector<2x512xf32>
    %313 = tpu.matmul %312, %1, %cst_51 {dimension_numbers = #tpu.dot_dimension_numbers<[1], [0], [0], [1], [0, 0, 1, 1], [], []>} : vector<2x128xbf16>, vector<128x512xbf16>, vector<2x512xf32> -> vector<2x512xf32>
    %314 = arith.truncf %291 : vector<2x128xf32> to vector<2x128xbf16>
    %cst_52 = arith.constant dense<0.000000e+00> : vector<2x512xf32>
    %315 = tpu.matmul %314, %3, %cst_52 {dimension_numbers = #tpu.dot_dimension_numbers<[1], [0], [0], [1], [0, 0, 1, 1], [], []>} : vector<2x128xbf16>, vector<128x512xbf16>, vector<2x512xf32> -> vector<2x512xf32>
    %316 = arith.addf %313, %315 : vector<2x512xf32>
    %317 = vector.broadcast %5 : vector<1x512xf32> to vector<2x512xf32>
    %318 = arith.addf %316, %317 : vector<2x512xf32>
    %319 = vector.extract_strided_slice %318 {offsets = [0, 0], sizes = [2, 384], strides = [1, 1]} : vector<2x512xf32> to vector<2x384xf32>
    %320 = arith.negf %319 : vector<2x384xf32>
    %321 = math.exp %320 : vector<2x384xf32>
    %cst_53 = arith.constant 1.000000e+00 : f32
    %322 = vector.broadcast %cst_53 : f32 to vector<2x384xf32>
    %323 = arith.addf %322, %321 : vector<2x384xf32>
    %324 = arith.divf %322, %323 : vector<2x384xf32>
    %325 = vector.extract_strided_slice %324 {offsets = [0, 0], sizes = [2, 128], strides = [1, 1]} : vector<2x384xf32> to vector<2x128xf32>
    %326 = vector.extract_strided_slice %324 {offsets = [0, 128], sizes = [2, 128], strides = [1, 1]} : vector<2x384xf32> to vector<2x128xf32>
    %327 = vector.extract_strided_slice %324 {offsets = [0, 256], sizes = [2, 128], strides = [1, 1]} : vector<2x384xf32> to vector<2x128xf32>
    %328 = vector.extract_strided_slice %318 {offsets = [0, 384], sizes = [2, 128], strides = [1, 1]} : vector<2x512xf32> to vector<2x128xf32>
    %329 = math.tanh %328 : vector<2x128xf32>
    %330 = arith.mulf %326, %289 : vector<2x128xf32>
    %331 = arith.mulf %325, %329 : vector<2x128xf32>
    %332 = arith.addf %330, %331 : vector<2x128xf32>
    %333 = math.tanh %332 : vector<2x128xf32>
    %334 = arith.mulf %327, %333 : vector<2x128xf32>
    %335 = arith.truncf %311 : vector<2x128xf32> to vector<2x128xbf16>
    %cst_54 = arith.constant dense<0.000000e+00> : vector<2x512xf32>
    %336 = tpu.matmul %335, %1, %cst_54 {dimension_numbers = #tpu.dot_dimension_numbers<[1], [0], [0], [1], [0, 0, 1, 1], [], []>} : vector<2x128xbf16>, vector<128x512xbf16>, vector<2x512xf32> -> vector<2x512xf32>
    %337 = arith.truncf %334 : vector<2x128xf32> to vector<2x128xbf16>
    %cst_55 = arith.constant dense<0.000000e+00> : vector<2x512xf32>
    %338 = tpu.matmul %337, %3, %cst_55 {dimension_numbers = #tpu.dot_dimension_numbers<[1], [0], [0], [1], [0, 0, 1, 1], [], []>} : vector<2x128xbf16>, vector<128x512xbf16>, vector<2x512xf32> -> vector<2x512xf32>
    %339 = arith.addf %336, %338 : vector<2x512xf32>
    %340 = vector.broadcast %5 : vector<1x512xf32> to vector<2x512xf32>
    %341 = arith.addf %339, %340 : vector<2x512xf32>
    %342 = vector.extract_strided_slice %341 {offsets = [0, 0], sizes = [2, 384], strides = [1, 1]} : vector<2x512xf32> to vector<2x384xf32>
    %343 = arith.negf %342 : vector<2x384xf32>
    %344 = math.exp %343 : vector<2x384xf32>
    %cst_56 = arith.constant 1.000000e+00 : f32
    %345 = vector.broadcast %cst_56 : f32 to vector<2x384xf32>
    %346 = arith.addf %345, %344 : vector<2x384xf32>
    %347 = arith.divf %345, %346 : vector<2x384xf32>
    %348 = vector.extract_strided_slice %347 {offsets = [0, 0], sizes = [2, 128], strides = [1, 1]} : vector<2x384xf32> to vector<2x128xf32>
    %349 = vector.extract_strided_slice %347 {offsets = [0, 128], sizes = [2, 128], strides = [1, 1]} : vector<2x384xf32> to vector<2x128xf32>
    %350 = vector.extract_strided_slice %347 {offsets = [0, 256], sizes = [2, 128], strides = [1, 1]} : vector<2x384xf32> to vector<2x128xf32>
    %351 = vector.extract_strided_slice %341 {offsets = [0, 384], sizes = [2, 128], strides = [1, 1]} : vector<2x512xf32> to vector<2x128xf32>
    %352 = math.tanh %351 : vector<2x128xf32>
    %353 = arith.mulf %349, %332 : vector<2x128xf32>
    %354 = arith.mulf %348, %352 : vector<2x128xf32>
    %355 = arith.addf %353, %354 : vector<2x128xf32>
    %356 = math.tanh %355 : vector<2x128xf32>
    %357 = arith.mulf %350, %356 : vector<2x128xf32>
    %358 = tpu.concatenate %76, %119, %162, %205, %248, %291, %334, %357 in 0 : vector<2x128xf32>, vector<2x128xf32>, vector<2x128xf32>, vector<2x128xf32>, vector<2x128xf32>, vector<2x128xf32>, vector<2x128xf32>, vector<2x128xf32> -> vector<16x128xf32>
    %359 = arith.truncf %358 : vector<16x128xf32> to vector<16x128xbf16>
    %c0_57 = arith.constant 0 : index
    %c0_58 = arith.constant 0 : index
    %360 = vector.load %arg7[%c0_57, %c0_58] : memref<128x128xbf16, #tpu.memory_space<vmem>>, vector<128x128xbf16>
    %cst_59 = arith.constant dense<0.000000e+00> : vector<16x128xf32>
    %361 = tpu.matmul %359, %360, %cst_59 {dimension_numbers = #tpu.dot_dimension_numbers<[1], [0], [0], [1], [0, 0, 1, 1], [], []>} : vector<16x128xbf16>, vector<128x128xbf16>, vector<16x128xf32> -> vector<16x128xf32>
    %c0_60 = arith.constant 0 : index
    %c0_61 = arith.constant 0 : index
    %362 = vector.load %arg8[%c0_60, %c0_61] : memref<1x128xf32, #tpu.memory_space<vmem>>, vector<1x128xf32>
    %363 = vector.broadcast %362 : vector<1x128xf32> to vector<16x128xf32>
    %364 = arith.addf %361, %363 : vector<16x128xf32>
    %c0_62 = arith.constant 0 : index
    %c0_63 = arith.constant 0 : index
    %365 = vector.load %arg9[%c0_62, %c0_63] : memref<16x128xf32, #tpu.memory_space<vmem>>, vector<16x128xf32>
    tpu.vector_store %arg9[%c0_62, %c0_63], %364 {strides = array<i32>} : memref<16x128xf32, #tpu.memory_space<vmem>>, vector<16x128xf32>,
    return
  }
}

</mosaic_0001>

<llo_original>
// kernel: forward.1
$region0: #{forward.1}
  #allocation0 [shape = 'u32[]', space=smem, size = 0x4, offset = 0x4, fixed_abs, tag = 'smem constant byte address 0x4 - core index']
  #allocation1 [shape = 'u32[144,128]{1,0:T(1,128)}', space=vmem, size = 0x12000, scoped, tag = 'internal scratch']
  %s0 = inlined_call_operand.vmem [shape: bf16[16,128], index: 0, kind: input, shape index: {}]
  %s1 = inlined_call_operand.hbm [shape: bf16[128,512], index: 1, kind: input, shape index: {}]
  %s2 = inlined_call_operand.hbm [shape: bf16[128,512], index: 2, kind: input, shape index: {}]
  %s3 = inlined_call_operand.vmem [shape: f32[1,512], index: 3, kind: input, shape index: {}]
  %s4 = inlined_call_operand.hbm [shape: bf16[128,512], index: 4, kind: input, shape index: {}]
  %s5 = inlined_call_operand.hbm [shape: bf16[128,512], index: 5, kind: input, shape index: {}]
  %s6 = inlined_call_operand.vmem [shape: f32[1,512], index: 6, kind: input, shape index: {}]
  %s7 = inlined_call_operand.vmem [shape: bf16[128,128], index: 7, kind: input, shape index: {}]
  %s8 = inlined_call_operand.vmem [shape: f32[1,128], index: 8, kind: input, shape index: {}]
  %s9 = inlined_call_operand.vmem [shape: f32[16,128], index: 9, kind: output, shape index: {}]
  %s10 = sld [smem:[#allocation0]]
  $region62: #{forward.1} parent=0
    _
  %s12 = ssub.s32 1, %s10
  %s13 = scalar_select 0, %s12, %s10
  $region1: #{forward.1} parent=0
    #allocation2 [shape = 'u8[131072]{0}', space=vmem, size = 0x20000, scoped, tag = 'input window, operand 1, single buffered']
    #allocation3 [shape = 's32[1]{0}', space=sflag, size = 0x4, scoped, tag = 'scoped memory for forward.1']
    #allocation4 [shape = 'u8[131072]{0}', space=vmem, size = 0x20000, scoped, tag = 'input window, operand 2, single buffered']
    #allocation5 [shape = 's32[1]{0}', space=sflag, size = 0x4, scoped, tag = 'scoped memory for forward.1']
    #allocation6 [shape = 'u8[131072]{0}', space=vmem, size = 0x20000, scoped, tag = 'input window, operand 4, single buffered']
    #allocation7 [shape = 'u8[131072]{0}', space=vmem, size = 0x20000, scoped, tag = 'input window, operand 5, single buffered']
    #allocation8 [shape = 's32[1]{0}', space=sflag, size = 0x4, scoped, tag = 'scoped memory for forward.1']
    %14 = vsyncpa [#allocation3], 0
    %15 = vsyncpa [#allocation5], 0
    %16 = vsyncpa [#allocation8], 0
    // Predicated region
    $region2: #{forward.1} parent=1 // pred_check
      _
    $region3: #{forward.1} parent=1 // pred_check_branch
      %18 = sbr.rel (0) target = $region5
    $region4: #{forward.1} parent=1 // pred_region
      _
    $region5: #{forward.1} parent=1 // pred_fallthru
      _
    // Predicated region
    $region6: #{forward.1} parent=1 // pred_check
      _
    $region7: #{forward.1} parent=1 // pred_check_branch
      %20 = sbr.rel (0) target = $region9
    $region8: #{forward.1} parent=1 // pred_region
      %s22 = ssub.s32 4096, 4096
      %23 = vsyncadd [#allocation3], %s22
      %s24 = sshll.u32 [#allocation2], 4
      %s25 = int_to_ptr.vmem [resolvable:$true] %s24
      %30 = dma.hbm_to_vmem [thread:$0]  %s1, 4096, %s25, [#allocation3], 256, 256, 16
    $region9: #{forward.1} parent=1 // pred_fallthru
      _
    // Predicated region
    $region10: #{forward.1} parent=1 // pred_check
      _
    $region11: #{forward.1} parent=1 // pred_check_branch
      %32 = sbr.rel (0) target = $region13
    $region12: #{forward.1} parent=1 // pred_region
      %s34 = ssub.s32 4096, 4096
      %35 = vsyncadd [#allocation5], %s34
      %s36 = sshll.u32 [#allocation4], 4
      %s37 = int_to_ptr.vmem [resolvable:$true] %s36
      %42 = dma.hbm_to_vmem [thread:$0]  %s2, 4096, %s37, [#allocation5], 256, 256, 16
    $region13: #{forward.1} parent=1 // pred_fallthru
      _
    // Predicated region
    $region14: #{forward.1} parent=1 // pred_check
      _
    $region15: #{forward.1} parent=1 // pred_check_branch
      %44 = sbr.rel (0) target = $region17
    $region16: #{forward.1} parent=1 // pred_region
      _
    $region17: #{forward.1} parent=1 // pred_fallthru
      _
    // Predicated region
    $region18: #{forward.1} parent=1 // pred_check
      _
    $region19: #{forward.1} parent=1 // pred_check_branch
      %46 = sbr.rel (0) target = $region21
    $region20: #{forward.1} parent=1 // pred_region
      %s48 = ssub.s32 4096, 4096
      %49 = vsyncadd [#allocation5], %s48
      %s50 = sshll.u32 [#allocation6], 4
      %s51 = int_to_ptr.vmem [resolvable:$true] %s50
      %56 = dma.hbm_to_vmem [thread:$0]  %s4, 4096, %s51, [#allocation5], 256, 256, 16
    $region21: #{forward.1} parent=1 // pred_fallthru
      _
    // Predicated region
    $region22: #{forward.1} parent=1 // pred_check
      _
    $region23: #{forward.1} parent=1 // pred_check_branch
      %58 = sbr.rel (0) target = $region25
    $region24: #{forward.1} parent=1 // pred_region
      %s60 = ssub.s32 4096, 4096
      %61 = vsyncadd [#allocation8], %s60
      %s62 = sshll.u32 [#allocation7], 4
      %s63 = int_to_ptr.vmem [resolvable:$true] %s62
      %68 = dma.hbm_to_vmem [thread:$0]  %s5, 4096, %s63, [#allocation8], 256, 256, 16
    $region25: #{forward.1} parent=1 // pred_fallthru
      _
    // Predicated region
    $region26: #{forward.1} parent=1 // pred_check
      _
    $region27: #{forward.1} parent=1 // pred_check_branch
      %70 = sbr.rel (0) target = $region29
    $region28: #{forward.1} parent=1 // pred_region
      _
    $region29: #{forward.1} parent=1 // pred_fallthru
      _
    // Predicated region
    $region30: #{forward.1} parent=1 // pred_check
      _
    $region31: #{forward.1} parent=1 // pred_check_branch
      %72 = sbr.rel (0) target = $region33
    $region32: #{forward.1} parent=1 // pred_region
      _
    $region33: #{forward.1} parent=1 // pred_fallthru
      _
    // Predicated region
    $region34: #{forward.1} parent=1 // pred_check
      _
    $region35: #{forward.1} parent=1 // pred_check_branch
      %74 = sbr.rel (0) target = $region37
    $region36: #{forward.1} parent=1 // pred_region
      _
    $region37: #{forward.1} parent=1 // pred_fallthru
      _
    // Predicated region
    $region38: #{forward.1} parent=1 // pred_check
      _
    $region39: #{forward.1} parent=1 // pred_check_branch
      %76 = sbr.rel (0) target = $region41
    $region40: #{forward.1} parent=1 // pred_region
      %77 = dma.done [#allocation3], 4096
    $region41: #{forward.1} parent=1 // pred_fallthru
      _
    // Predicated region
    $region42: #{forward.1} parent=1 // pred_check
      _
    $region43: #{forward.1} parent=1 // pred_check_branch
      %79 = sbr.rel (0) target = $region45
    $region44: #{forward.1} parent=1 // pred_region
      %80 = dma.done [#allocation5], 4096
    $region45: #{forward.1} parent=1 // pred_fallthru
      _
    // Predicated region
    $region46: #{forward.1} parent=1 // pred_check
      _
    $region47: #{forward.1} parent=1 // pred_check_branch
      %82 = sbr.rel (0) target = $region49
    $region48: #{forward.1} parent=1 // pred_region
      %83 = dma.done [#allocation5], 4096
    $region49: #{forward.1} parent=1 // pred_fallthru
      _
    // Predicated region
    $region50: #{forward.1} parent=1 // pred_check
      _
    $region51: #{forward.1} parent=1 // pred_check_branch
      %85 = sbr.rel (0) target = $region53
    $region52: #{forward.1} parent=1 // pred_region
      %86 = dma.done [#allocation8], 4096
    $region53: #{forward.1} parent=1 // pred_fallthru
      _
    %v88 = vld [vmem:[#allocation2] sm:$0xff]
    %v89 = vld [vmem:[#allocation2 + $0x8] sm:$0xff]
    %v90 = vld [vmem:[#allocation2 + $0x10] sm:$0xff]
    %v91 = vld [vmem:[#allocation2 + $0x18] sm:$0xff]
    %v92 = vld [vmem:[#allocation2 + $0x20] sm:$0xff]
    %v93 = vld [vmem:[#allocation2 + $0x28] sm:$0xff]
    %v94 = vld [vmem:[#allocation2 + $0x30] sm:$0xff]
    %v95 = vld [vmem:[#allocation2 + $0x38] sm:$0xff]
    %v96 = vld [vmem:[#allocation2 + $0x40] sm:$0xff]
    %v97 = vld [vmem:[#allocation2 + $0x48] sm:$0xff]
    %v98 = vld [vmem:[#allocation2 + $0x50] sm:$0xff]
    %v99 = vld [vmem:[#allocation2 + $0x58] sm:$0xff]
    %v100 = vld [vmem:[#allocation2 + $0x60] sm:$0xff]
    %v101 = vld [vmem:[#allocation2 + $0x68] sm:$0xff]
    %v102 = vld [vmem:[#allocation2 + $0x70] sm:$0xff]
    %v103 = vld [vmem:[#allocation2 + $0x78] sm:$0xff]
    %v104 = vld [vmem:[#allocation2 + $0x80] sm:$0xff]
    %v105 = vld [vmem:[#allocation2 + $0x88] sm:$0xff]
    %v106 = vld [vmem:[#allocation2 + $0x90] sm:$0xff]
    %v107 = vld [vmem:[#allocation2 + $0x98] sm:$0xff]
    %v108 = vld [vmem:[#allocation2 + $0xa0] sm:$0xff]
    %v109 = vld [vmem:[#allocation2 + $0xa8] sm:$0xff]
    %v110 = vld [vmem:[#allocation2 + $0xb0] sm:$0xff]
    %v111 = vld [vmem:[#allocation2 + $0xb8] sm:$0xff]
    %v112 = vld [vmem:[#allocation2 + $0xc0] sm:$0xff]
    %v113 = vld [vmem:[#allocation2 + $0xc8] sm:$0xff]
    %v114 = vld [vmem:[#allocation2 + $0xd0] sm:$0xff]
    %v115 = vld [vmem:[#allocation2 + $0xd8] sm:$0xff]
    %v116 = vld [vmem:[#allocation2 + $0xe0] sm:$0xff]
    %v117 = vld [vmem:[#allocation2 + $0xe8] sm:$0xff]
    %v118 = vld [vmem:[#allocation2 + $0xf0] sm:$0xff]
    %v119 = vld [vmem:[#allocation2 + $0xf8] sm:$0xff]
    %v120 = vld [vmem:[#allocation6] sm:$0xff]
    %v121 = vld [vmem:[#allocation6 + $0x8] sm:$0xff]
    %v122 = vld [vmem:[#allocation6 + $0x10] sm:$0xff]
    %v123 = vld [vmem:[#allocation6 + $0x18] sm:$0xff]
    %v124 = vld [vmem:[#allocation6 + $0x20] sm:$0xff]
    %v125 = vld [vmem:[#allocation6 + $0x28] sm:$0xff]
    %v126 = vld [vmem:[#allocation6 + $0x30] sm:$0xff]
    %v127 = vld [vmem:[#allocation6 + $0x38] sm:$0xff]
    %v128 = vld [vmem:[#allocation6 + $0x40] sm:$0xff]
    %v129 = vld [vmem:[#allocation6 + $0x48] sm:$0xff]
    %v130 = vld [vmem:[#allocation6 + $0x50] sm:$0xff]
    %v131 = vld [vmem:[#allocation6 + $0x58] sm:$0xff]
    %v132 = vld [vmem:[#allocation6 + $0x60] sm:$0xff]
    %v133 = vld [vmem:[#allocation6 + $0x68] sm:$0xff]
    %v134 = vld [vmem:[#allocation6 + $0x70] sm:$0xff]
    %v135 = vld [vmem:[#allocation6 + $0x78] sm:$0xff]
    %v136 = vld [vmem:[#allocation6 + $0x80] sm:$0xff]
    %v137 = vld [vmem:[#allocation6 + $0x88] sm:$0xff]
    %v138 = vld [vmem:[#allocation6 + $0x90] sm:$0xff]
    %v139 = vld [vmem:[#allocation6 + $0x98] sm:$0xff]
    %v140 = vld [vmem:[#allocation6 + $0xa0] sm:$0xff]
    %v141 = vld [vmem:[#allocation6 + $0xa8] sm:$0xff]
    %v142 = vld [vmem:[#allocation6 + $0xb0] sm:$0xff]
    %v143 = vld [vmem:[#allocation6 + $0xb8] sm:$0xff]
    %v144 = vld [vmem:[#allocation6 + $0xc0] sm:$0xff]
    %v145 = vld [vmem:[#allocation6 + $0xc8] sm:$0xff]
    %v146 = vld [vmem:[#allocation6 + $0xd0] sm:$0xff]
    %v147 = vld [vmem:[#allocation6 + $0xd8] sm:$0xff]
    %v148 = vld [vmem:[#allocation6 + $0xe0] sm:$0xff]
    %v149 = vld [vmem:[#allocation6 + $0xe8] sm:$0xff]
    %v150 = vld [vmem:[#allocation6 + $0xf0] sm:$0xff]
    %v151 = vld [vmem:[#allocation6 + $0xf8] sm:$0xff]
    %v152 = vld [vmem:[#allocation4] sm:$0xff]
    %v153 = vld [vmem:[#allocation4 + $0x8] sm:$0xff]
    %v154 = vld [vmem:[#allocation4 + $0x10] sm:$0xff]
    %v155 = vld [vmem:[#allocation4 + $0x18] sm:$0xff]
    %v156 = vld [vmem:[#allocation4 + $0x20] sm:$0xff]
    %v157 = vld [vmem:[#allocation4 + $0x28] sm:$0xff]
    %v158 = vld [vmem:[#allocation4 + $0x30] sm:$0xff]
    %v159 = vld [vmem:[#allocation4 + $0x38] sm:$0xff]
    %v160 = vld [vmem:[#allocation4 + $0x40] sm:$0xff]
    %v161 = vld [vmem:[#allocation4 + $0x48] sm:$0xff]
    %v162 = vld [vmem:[#allocation4 + $0x50] sm:$0xff]
    %v163 = vld [vmem:[#allocation4 + $0x58] sm:$0xff]
    %v164 = vld [vmem:[#allocation4 + $0x60] sm:$0xff]
    %v165 = vld [vmem:[#allocation4 + $0x68] sm:$0xff]
    %v166 = vld [vmem:[#allocation4 + $0x70] sm:$0xff]
    %v167 = vld [vmem:[#allocation4 + $0x78] sm:$0xff]
    %v168 = vld [vmem:[#allocation4 + $0x80] sm:$0xff]
    %v169 = vld [vmem:[#allocation4 + $0x88] sm:$0xff]
    %v170 = vld [vmem:[#allocation4 + $0x90] sm:$0xff]
    %v171 = vld [vmem:[#allocation4 + $0x98] sm:$0xff]
    %v172 = vld [vmem:[#allocation4 + $0xa0] sm:$0xff]
    %v173 = vld [vmem:[#allocation4 + $0xa8] sm:$0xff]
    %v174 = vld [vmem:[#allocation4 + $0xb0] sm:$0xff]
    %v175 = vld [vmem:[#allocation4 + $0xb8] sm:$0xff]
    %v176 = vld [vmem:[#allocation4 + $0xc0] sm:$0xff]
    %v177 = vld [vmem:[#allocation4 + $0xc8] sm:$0xff]
    %v178 = vld [vmem:[#allocation4 + $0xd0] sm:$0xff]
    %v179 = vld [vmem:[#allocation4 + $0xd8] sm:$0xff]
    %v180 = vld [vmem:[#allocation4 + $0xe0] sm:$0xff]
    %v181 = vld [vmem:[#allocation4 + $0xe8] sm:$0xff]
    %v182 = vld [vmem:[#allocation4 + $0xf0] sm:$0xff]
    %v183 = vld [vmem:[#allocation4 + $0xf8] sm:$0xff]
    %v184 = vld [vmem:[#allocation7] sm:$0xff]
    %v185 = vld [vmem:[#allocation7 + $0x8] sm:$0xff]
    %v186 = vld [vmem:[#allocation7 + $0x10] sm:$0xff]
    %v187 = vld [vmem:[#allocation7 + $0x18] sm:$0xff]
    %v188 = vld [vmem:[#allocation7 + $0x20] sm:$0xff]
    %v189 = vld [vmem:[#allocation7 + $0x28] sm:$0xff]
    %v190 = vld [vmem:[#allocation7 + $0x30] sm:$0xff]
    %v191 = vld [vmem:[#allocation7 + $0x38] sm:$0xff]
    %v192 = vld [vmem:[#allocation7 + $0x40] sm:$0xff]
    %v193 = vld [vmem:[#allocation7 + $0x48] sm:$0xff]
    %v194 = vld [vmem:[#allocation7 + $0x50] sm:$0xff]
    %v195 = vld [vmem:[#allocation7 + $0x58] sm:$0xff]
    %v196 = vld [vmem:[#allocation7 + $0x60] sm:$0xff]
    %v197 = vld [vmem:[#allocation7 + $0x68] sm:$0xff]
    %v198 = vld [vmem:[#allocation7 + $0x70] sm:$0xff]
    %v199 = vld [vmem:[#allocation7 + $0x78] sm:$0xff]
    %v200 = vld [vmem:[#allocation7 + $0x80] sm:$0xff]
    %v201 = vld [vmem:[#allocation7 + $0x88] sm:$0xff]
    %v202 = vld [vmem:[#allocation7 + $0x90] sm:$0xff]
    %v203 = vld [vmem:[#allocation7 + $0x98] sm:$0xff]
    %v204 = vld [vmem:[#allocation7 + $0xa0] sm:$0xff]
    %v205 = vld [vmem:[#allocation7 + $0xa8] sm:$0xff]
    %v206 = vld [vmem:[#allocation7 + $0xb0] sm:$0xff]
    %v207 = vld [vmem:[#allocation7 + $0xb8] sm:$0xff]
    %v208 = vld [vmem:[#allocation7 + $0xc0] sm:$0xff]
    %v209 = vld [vmem:[#allocation7 + $0xc8] sm:$0xff]
    %v210 = vld [vmem:[#allocation7 + $0xd0] sm:$0xff]
    %v211 = vld [vmem:[#allocation7 + $0xd8] sm:$0xff]
    %v212 = vld [vmem:[#allocation7 + $0xe0] sm:$0xff]
    %v213 = vld [vmem:[#allocation7 + $0xe8] sm:$0xff]
    %v214 = vld [vmem:[#allocation7 + $0xf0] sm:$0xff]
    %v215 = vld [vmem:[#allocation7 + $0xf8] sm:$0xff]
    %v216 = vld [vmem:[%s3] sm:$0xf]
    %v217 = vld [vmem:[%s6] sm:$0xf]
    %v218 = vld [vmem:[%s0] sm:$0xf]
    %v219 = vld [vmem:[%s0 + $0x4] sm:$0xf]
    %v221 = vlaneseq
    %v222 = vshrl.u32 %v221, 7
    %v223 = vsub.s32 0, %v222
    %v224 = vrot.slane %v216, %v223
    %v225 = vlaneseq
    %v226 = vshrl.u32 %v225, 7
    %v227 = vsub.s32 1, %v226
    %v228 = vrot.slane %v216, %v227
    %v229 = vlaneseq
    %v230 = vshrl.u32 %v229, 7
    %v231 = vsub.s32 2, %v230
    %v232 = vrot.slane %v216, %v231
    %v233 = vlaneseq
    %v234 = vshrl.u32 %v233, 7
    %v235 = vsub.s32 3, %v234
    %v236 = vrot.slane %v216, %v235
    %v243 = vunpack.c.l.b16 %v218
    %v244 = vunpack.c.l.b16 %v219
    %v245 = vpack.c.b16 %v244, %v243
    %v279 = vunpack.c.l.b16 %v88
    %v280 = vunpack.c.h.b16 %v88
    %v281 = vunpack.c.l.b16 %v89
    %v282 = vunpack.c.h.b16 %v89
    %v283 = vunpack.c.l.b16 %v90
    %v284 = vunpack.c.h.b16 %v90
    %v285 = vunpack.c.l.b16 %v91
    %v286 = vunpack.c.h.b16 %v91
    %v287 = vunpack.c.l.b16 %v92
    %v288 = vunpack.c.h.b16 %v92
    %v289 = vunpack.c.l.b16 %v93
    %v290 = vunpack.c.h.b16 %v93
    %v291 = vunpack.c.l.b16 %v94
    %v292 = vunpack.c.h.b16 %v94
    %v293 = vunpack.c.l.b16 %v95
    %v294 = vunpack.c.h.b16 %v95
    %v295 = vunpack.c.l.b16 %v96
    %v296 = vunpack.c.h.b16 %v96
    %v297 = vunpack.c.l.b16 %v97
    %v298 = vunpack.c.h.b16 %v97
    %v299 = vunpack.c.l.b16 %v98
    %v300 = vunpack.c.h.b16 %v98
    %v301 = vunpack.c.l.b16 %v99
    %v302 = vunpack.c.h.b16 %v99
    %v303 = vunpack.c.l.b16 %v100
    %v304 = vunpack.c.h.b16 %v100
    %v305 = vunpack.c.l.b16 %v101
    %v306 = vunpack.c.h.b16 %v101
    %v307 = vunpack.c.l.b16 %v102
    %v308 = vunpack.c.h.b16 %v102
    %v309 = vunpack.c.l.b16 %v103
    %v310 = vunpack.c.h.b16 %v103
    %v311 = vunpack.c.l.b16 %v104
    %v312 = vunpack.c.h.b16 %v104
    %v313 = vunpack.c.l.b16 %v105
    %v314 = vunpack.c.h.b16 %v105
    %v315 = vunpack.c.l.b16 %v106
    %v316 = vunpack.c.h.b16 %v106
    %v317 = vunpack.c.l.b16 %v107
    %v318 = vunpack.c.h.b16 %v107
    %v319 = vunpack.c.l.b16 %v108
    %v320 = vunpack.c.h.b16 %v108
    %v321 = vunpack.c.l.b16 %v109
    %v322 = vunpack.c.h.b16 %v109
    %v323 = vunpack.c.l.b16 %v110
    %v324 = vunpack.c.h.b16 %v110
    %v325 = vunpack.c.l.b16 %v111
    %v326 = vunpack.c.h.b16 %v111
    %v327 = vunpack.c.l.b16 %v112
    %v328 = vunpack.c.h.b16 %v112
    %v329 = vunpack.c.l.b16 %v113
    %v330 = vunpack.c.h.b16 %v113
    %v331 = vunpack.c.l.b16 %v114
    %v332 = vunpack.c.h.b16 %v114
    %v333 = vunpack.c.l.b16 %v115
    %v334 = vunpack.c.h.b16 %v115
    %v335 = vunpack.c.l.b16 %v116
    %v336 = vunpack.c.h.b16 %v116
    %v337 = vunpack.c.l.b16 %v117
    %v338 = vunpack.c.h.b16 %v117
    %v339 = vunpack.c.l.b16 %v118
    %v340 = vunpack.c.h.b16 %v118
    %v341 = vunpack.c.l.b16 %v119
    %v342 = vunpack.c.h.b16 %v119
    %v343 = vpack.c.b16 %v283, %v279
    %v344 = vpack.c.b16 %v284, %v280
    %v345 = vpack.c.b16 %v285, %v281
    %v346 = vpack.c.b16 %v286, %v282
    %v347 = vpack.c.b16 %v291, %v287
    %v348 = vpack.c.b16 %v292, %v288
    %v349 = vpack.c.b16 %v293, %v289
    %v350 = vpack.c.b16 %v294, %v290
    %v351 = vpack.c.b16 %v299, %v295
    %v352 = vpack.c.b16 %v300, %v296
    %v353 = vpack.c.b16 %v301, %v297
    %v354 = vpack.c.b16 %v302, %v298
    %v355 = vpack.c.b16 %v307, %v303
    %v356 = vpack.c.b16 %v308, %v304
    %v357 = vpack.c.b16 %v309, %v305
    %v358 = vpack.c.b16 %v310, %v306
    %v359 = vpack.c.b16 %v315, %v311
    %v360 = vpack.c.b16 %v316, %v312
    %v361 = vpack.c.b16 %v317, %v313
    %v362 = vpack.c.b16 %v318, %v314
    %v363 = vpack.c.b16 %v323, %v319
    %v364 = vpack.c.b16 %v324, %v320
    %v365 = vpack.c.b16 %v325, %v321
    %v366 = vpack.c.b16 %v326, %v322
    %v367 = vpack.c.b16 %v331, %v327
    %v368 = vpack.c.b16 %v332, %v328
    %v369 = vpack.c.b16 %v333, %v329
    %v370 = vpack.c.b16 %v334, %v330
    %v371 = vpack.c.b16 %v339, %v335
    %v372 = vpack.c.b16 %v340, %v336
    %v373 = vpack.c.b16 %v341, %v337
    %v374 = vpack.c.b16 %v342, %v338
    %407 = vmatprep.subr.bf16.mxu0 %v344
    %408 = vmatpush1.bf16.msra.mxu0 %v343
    %409 = vmatprep.subr.bf16.mxu0 %v348
    %410 = vmatpush1.bf16.msra.mxu0 %v347
    %411 = vmatprep.subr.bf16.mxu0 %v352
    %412 = vmatpush1.bf16.msra.mxu0 %v351
    %413 = vmatprep.subr.bf16.mxu0 %v356
    %414 = vmatpush1.bf16.msra.mxu0 %v355
    %415 = vmatprep.subr.bf16.mxu0 %v360
    %416 = vmatpush1.bf16.msra.mxu0 %v359
    %417 = vmatprep.subr.bf16.mxu0 %v364
    %418 = vmatpush1.bf16.msra.mxu0 %v363
    %419 = vmatprep.subr.bf16.mxu0 %v368
    %420 = vmatpush1.bf16.msra.mxu0 %v367
    %421 = vmatprep.subr.bf16.mxu0 %v372
    %422 = vmatpush1.bf16.msra.mxu0 %v371
    %423 = vmatprep.subr.bf16.mxu0 0
    %424 = vmatpush1.bf16.msra.mxu0 0
    %425 = vmatprep.subr.bf16.mxu0 0
    %426 = vmatpush1.bf16.msra.mxu0 0
    %427 = vmatprep.subr.bf16.mxu0 0
    %428 = vmatpush1.bf16.msra.mxu0 0
    %429 = vmatprep.subr.bf16.mxu0 0
    %430 = vmatpush1.bf16.msra.mxu0 0
    %431 = vmatprep.subr.bf16.mxu0 0
    %432 = vmatpush1.bf16.msra.mxu0 0
    %433 = vmatprep.subr.bf16.mxu0 0
    %434 = vmatpush1.bf16.msra.mxu0 0
    %435 = vmatprep.subr.bf16.mxu0 0
    %436 = vmatpush1.bf16.msra.mxu0 0
    %437 = vmatprep.subr.bf16.mxu0 0
    %438 = vmatpush1.bf16.msra.mxu0 0
    %439 = vmatprep.mubr.bf16.mxu0 0
    %440 = vmatmul.mubr.bf16.gmra.mrb[0].mxu0 %v245
    %v441 = vpop.f32.mrb[0].mxu0
    %v442 = vadd.f32 %v224, %v441
    %v443 = vpop.f32.mrb[0].mxu0
    %v444 = vadd.f32 %v228, %v443
    %v445 = vpop.f32.mrb[0].mxu0
    %v446 = vadd.f32 %v224, %v445
    %v447 = vpop.f32.mrb[0].mxu0
    %v448 = vadd.f32 %v228, %v447
    %449 = vdwg.mxu0
    %450 = vmatprep.subr.bf16.mxu0 %v346
    %451 = vmatpush1.bf16.msra.mxu0 %v345
    %452 = vmatprep.subr.bf16.mxu0 %v350
    %453 = vmatpush1.bf16.msra.mxu0 %v349
    %454 = vmatprep.subr.bf16.mxu0 %v354
    %455 = vmatpush1.bf16.msra.mxu0 %v353
    %456 = vmatprep.subr.bf16.mxu0 %v358
    %457 = vmatpush1.bf16.msra.mxu0 %v357
    %458 = vmatprep.subr.bf16.mxu0 %v362
    %459 = vmatpush1.bf16.msra.mxu0 %v361
    %460 = vmatprep.subr.bf16.mxu0 %v366
    %461 = vmatpush1.bf16.msra.mxu0 %v365
    %462 = vmatprep.subr.bf16.mxu0 %v370
    %463 = vmatpush1.bf16.msra.mxu0 %v369
    %464 = vmatprep.subr.bf16.mxu0 %v374
    %465 = vmatpush1.bf16.msra.mxu0 %v373
    %466 = vmatprep.subr.bf16.mxu0 0
    %467 = vmatpush1.bf16.msra.mxu0 0
    %468 = vmatprep.subr.bf16.mxu0 0
    %469 = vmatpush1.bf16.msra.mxu0 0
    %470 = vmatprep.subr.bf16.mxu0 0
    %471 = vmatpush1.bf16.msra.mxu0 0
    %472 = vmatprep.subr.bf16.mxu0 0
    %473 = vmatpush1.bf16.msra.mxu0 0
    %474 = vmatprep.subr.bf16.mxu0 0
    %475 = vmatpush1.bf16.msra.mxu0 0
    %476 = vmatprep.subr.bf16.mxu0 0
    %477 = vmatpush1.bf16.msra.mxu0 0
    %478 = vmatprep.subr.bf16.mxu0 0
    %479 = vmatpush1.bf16.msra.mxu0 0
    %480 = vmatprep.subr.bf16.mxu0 0
    %481 = vmatpush1.bf16.msra.mxu0 0
    %482 = vmatprep.mubr.bf16.mxu0 0
    %483 = vmatmul.mubr.bf16.gmra.mrb[0].mxu0 %v245
    %v484 = vpop.f32.mrb[0].mxu0
    %v485 = vadd.f32 %v232, %v484
    %v486 = vpop.f32.mrb[0].mxu0
    %v487 = vadd.f32 %v236, %v486
    %v488 = vpop.f32.mrb[0].mxu0
    %v489 = vadd.f32 %v232, %v488
    %v490 = vpop.f32.mrb[0].mxu0
    %v491 = vadd.f32 %v236, %v490
    %492 = vdwg.mxu0
    %v525 = vunpack.c.l.b16 %v152
    %v526 = vunpack.c.h.b16 %v152
    %v527 = vunpack.c.l.b16 %v153
    %v528 = vunpack.c.h.b16 %v153
    %v529 = vunpack.c.l.b16 %v154
    %v530 = vunpack.c.h.b16 %v154
    %v531 = vunpack.c.l.b16 %v155
    %v532 = vunpack.c.h.b16 %v155
    %v533 = vunpack.c.l.b16 %v156
    %v534 = vunpack.c.h.b16 %v156
    %v535 = vunpack.c.l.b16 %v157
    %v536 = vunpack.c.h.b16 %v157
    %v537 = vunpack.c.l.b16 %v158
    %v538 = vunpack.c.h.b16 %v158
    %v539 = vunpack.c.l.b16 %v159
    %v540 = vunpack.c.h.b16 %v159
    %v541 = vunpack.c.l.b16 %v160
    %v542 = vunpack.c.h.b16 %v160
    %v543 = vunpack.c.l.b16 %v161
    %v544 = vunpack.c.h.b16 %v161
    %v545 = vunpack.c.l.b16 %v162
    %v546 = vunpack.c.h.b16 %v162
    %v547 = vunpack.c.l.b16 %v163
    %v548 = vunpack.c.h.b16 %v163
    %v549 = vunpack.c.l.b16 %v164
    %v550 = vunpack.c.h.b16 %v164
    %v551 = vunpack.c.l.b16 %v165
    %v552 = vunpack.c.h.b16 %v165
    %v553 = vunpack.c.l.b16 %v166
    %v554 = vunpack.c.h.b16 %v166
    %v555 = vunpack.c.l.b16 %v167
    %v556 = vunpack.c.h.b16 %v167
    %v557 = vunpack.c.l.b16 %v168
    %v558 = vunpack.c.h.b16 %v168
    %v559 = vunpack.c.l.b16 %v169
    %v560 = vunpack.c.h.b16 %v169
    %v561 = vunpack.c.l.b16 %v170
    %v562 = vunpack.c.h.b16 %v170
    %v563 = vunpack.c.l.b16 %v171
    %v564 = vunpack.c.h.b16 %v171
    %v565 = vunpack.c.l.b16 %v172
    %v566 = vunpack.c.h.b16 %v172
    %v567 = vunpack.c.l.b16 %v173
    %v568 = vunpack.c.h.b16 %v173
    %v569 = vunpack.c.l.b16 %v174
    %v570 = vunpack.c.h.b16 %v174
    %v571 = vunpack.c.l.b16 %v175
    %v572 = vunpack.c.h.b16 %v175
    %v573 = vunpack.c.l.b16 %v176
    %v574 = vunpack.c.h.b16 %v176
    %v575 = vunpack.c.l.b16 %v177
    %v576 = vunpack.c.h.b16 %v177
    %v577 = vunpack.c.l.b16 %v178
    %v578 = vunpack.c.h.b16 %v178
    %v579 = vunpack.c.l.b16 %v179
    %v580 = vunpack.c.h.b16 %v179
    %v581 = vunpack.c.l.b16 %v180
    %v582 = vunpack.c.h.b16 %v180
    %v583 = vunpack.c.l.b16 %v181
    %v584 = vunpack.c.h.b16 %v181
    %v585 = vunpack.c.l.b16 %v182
    %v586 = vunpack.c.h.b16 %v182
    %v587 = vunpack.c.l.b16 %v183
    %v588 = vunpack.c.h.b16 %v183
    %v589 = vpack.c.b16 %v529, %v525
    %v590 = vpack.c.b16 %v530, %v526
    %v591 = vpack.c.b16 %v531, %v527
    %v592 = vpack.c.b16 %v532, %v528
    %v593 = vpack.c.b16 %v537, %v533
    %v594 = vpack.c.b16 %v538, %v534
    %v595 = vpack.c.b16 %v539, %v535
    %v596 = vpack.c.b16 %v540, %v536
    %v597 = vpack.c.b16 %v545, %v541
    %v598 = vpack.c.b16 %v546, %v542
    %v599 = vpack.c.b16 %v547, %v543
    %v600 = vpack.c.b16 %v548, %v544
    %v601 = vpack.c.b16 %v553, %v549
    %v602 = vpack.c.b16 %v554, %v550
    %v603 = vpack.c.b16 %v555, %v551
    %v604 = vpack.c.b16 %v556, %v552
    %v605 = vpack.c.b16 %v561, %v557
    %v606 = vpack.c.b16 %v562, %v558
    %v607 = vpack.c.b16 %v563, %v559
    %v608 = vpack.c.b16 %v564, %v560
    %v609 = vpack.c.b16 %v569, %v565
    %v610 = vpack.c.b16 %v570, %v566
    %v611 = vpack.c.b16 %v571, %v567
    %v612 = vpack.c.b16 %v572, %v568
    %v613 = vpack.c.b16 %v577, %v573
    %v614 = vpack.c.b16 %v578, %v574
    %v615 = vpack.c.b16 %v579, %v575
    %v616 = vpack.c.b16 %v580, %v576
    %v617 = vpack.c.b16 %v585, %v581
    %v618 = vpack.c.b16 %v586, %v582
    %v619 = vpack.c.b16 %v587, %v583
    %v620 = vpack.c.b16 %v588, %v584
    %653 = vmatprep.subr.bf16.mxu0 %v590
    %654 = vmatpush1.bf16.msra.mxu0 %v589
    %655 = vmatprep.subr.bf16.mxu0 %v594
    %656 = vmatpush1.bf16.msra.mxu0 %v593
    %657 = vmatprep.subr.bf16.mxu0 %v598
    %658 = vmatpush1.bf16.msra.mxu0 %v597
    %659 = vmatprep.subr.bf16.mxu0 %v602
    %660 = vmatpush1.bf16.msra.mxu0 %v601
    %661 = vmatprep.subr.bf16.mxu0 %v606
    %662 = vmatpush1.bf16.msra.mxu0 %v605
    %663 = vmatprep.subr.bf16.mxu0 %v610
    %664 = vmatpush1.bf16.msra.mxu0 %v609
    %665 = vmatprep.subr.bf16.mxu0 %v614
    %666 = vmatpush1.bf16.msra.mxu0 %v613
    %667 = vmatprep.subr.bf16.mxu0 %v618
    %668 = vmatpush1.bf16.msra.mxu0 %v617
    %669 = vmatprep.subr.bf16.mxu0 0
    %670 = vmatpush1.bf16.msra.mxu0 0
    %671 = vmatprep.subr.bf16.mxu0 0
    %672 = vmatpush1.bf16.msra.mxu0 0
    %673 = vmatprep.subr.bf16.mxu0 0
    %674 = vmatpush1.bf16.msra.mxu0 0
    %675 = vmatprep.subr.bf16.mxu0 0
    %676 = vmatpush1.bf16.msra.mxu0 0
    %677 = vmatprep.subr.bf16.mxu0 0
    %678 = vmatpush1.bf16.msra.mxu0 0
    %679 = vmatprep.subr.bf16.mxu0 0
    %680 = vmatpush1.bf16.msra.mxu0 0
    %681 = vmatprep.subr.bf16.mxu0 0
    %682 = vmatpush1.bf16.msra.mxu0 0
    %683 = vmatprep.subr.bf16.mxu0 0
    %684 = vmatpush1.bf16.msra.mxu0 0
    %685 = vmatprep.mubr.bf16.mxu0 0
    %686 = vmatmul.mubr.bf16.gmra.mrb[0].mxu0 0
    %v687 = vpop.f32.mrb[0].mxu0
    %v688 = vadd.f32 0.0, %v687
    %v689 = vpop.f32.mrb[0].mxu0
    %v690 = vadd.f32 0.0, %v689
    %v691 = vpop.f32.mrb[0].mxu0
    %v692 = vpop.f32.mrb[0].mxu0
    %693 = vdwg.mxu0
    %694 = vmatprep.subr.bf16.mxu0 %v592
    %695 = vmatpush1.bf16.msra.mxu0 %v591
    %696 = vmatprep.subr.bf16.mxu0 %v596
    %697 = vmatpush1.bf16.msra.mxu0 %v595
    %698 = vmatprep.subr.bf16.mxu0 %v600
    %699 = vmatpush1.bf16.msra.mxu0 %v599
    %700 = vmatprep.subr.bf16.mxu0 %v604
    %701 = vmatpush1.bf16.msra.mxu0 %v603
    %702 = vmatprep.subr.bf16.mxu0 %v608
    %703 = vmatpush1.bf16.msra.mxu0 %v607
    %704 = vmatprep.subr.bf16.mxu0 %v612
    %705 = vmatpush1.bf16.msra.mxu0 %v611
    %706 = vmatprep.subr.bf16.mxu0 %v616
    %707 = vmatpush1.bf16.msra.mxu0 %v615
    %708 = vmatprep.subr.bf16.mxu0 %v620
    %709 = vmatpush1.bf16.msra.mxu0 %v619
    %710 = vmatprep.subr.bf16.mxu0 0
    %711 = vmatpush1.bf16.msra.mxu0 0
    %712 = vmatprep.subr.bf16.mxu0 0
    %713 = vmatpush1.bf16.msra.mxu0 0
    %714 = vmatprep.subr.bf16.mxu0 0
    %715 = vmatpush1.bf16.msra.mxu0 0
    %716 = vmatprep.subr.bf16.mxu0 0
    %717 = vmatpush1.bf16.msra.mxu0 0
    %718 = vmatprep.subr.bf16.mxu0 0
    %719 = vmatpush1.bf16.msra.mxu0 0
    %720 = vmatprep.subr.bf16.mxu0 0
    %721 = vmatpush1.bf16.msra.mxu0 0
    %722 = vmatprep.subr.bf16.mxu0 0
    %723 = vmatpush1.bf16.msra.mxu0 0
    %724 = vmatprep.subr.bf16.mxu0 0
    %725 = vmatpush1.bf16.msra.mxu0 0
    %726 = vmatprep.mubr.bf16.mxu0 0
    %727 = vmatmul.mubr.bf16.gmra.mrb[0].mxu0 0
    %v728 = vpop.f32.mrb[0].mxu0
    %v729 = vadd.f32 0.0, %v728
    %v730 = vpop.f32.mrb[0].mxu0
    %v731 = vadd.f32 0.0, %v730
    %v732 = vpop.f32.mrb[0].mxu0
    %v733 = vpop.f32.mrb[0].mxu0
    %734 = vdwg.mxu0
    %v735 = vadd.f32 %v442, %v688
    %v736 = vadd.f32 %v444, %v690
    %v737 = vadd.f32 %v485, %v729
    %v738 = vadd.f32 %v487, %v731
    %v739 = vxor.u32 %v735, 2147483648
    %v740 = vxor.u32 %v736, 2147483648
    %v741 = vxor.u32 %v737, 2147483648
    %v742 = vmul.f32 %v739, 1.442695
    %v743 = vpow.pop %v742
    %v744 = vmul.f32 %v740, 1.442695
    %v745 = vpow.pop %v744
    %v746 = vmul.f32 %v741, 1.442695
    %v747 = vpow.pop %v746
    %v748 = vadd.f32 %v743, 1.0
    %v749 = vadd.f32 %v745, 1.0
    %v750 = vadd.f32 %v747, 1.0
    %v751 = vrcp.pop %v748
    %v752 = vmul.f32 1.0, %v751
    %v753 = vrcp.pop %v749
    %v754 = vmul.f32 1.0, %v753
    %v755 = vrcp.pop %v750
    %v756 = vmul.f32 1.0, %v755
    %v757 = vtanh.pop %v738
    %v758 = vmul.f32 %v754, 0.0
    %v759 = vmul.f32 %v752, %v757
    %v760 = vadd.f32 %v758, %v759
    %v761 = vtanh.pop %v760
    %v762 = vmul.f32 %v756, %v761
    %v763 = vpack.c.bf16 %v762, %v762
    %764 = vmatprep.subr.bf16.mxu0 %v590
    %765 = vmatpush1.bf16.msra.mxu0 %v589
    %766 = vmatprep.subr.bf16.mxu0 %v594
    %767 = vmatpush1.bf16.msra.mxu0 %v593
    %768 = vmatprep.subr.bf16.mxu0 %v598
    %769 = vmatpush1.bf16.msra.mxu0 %v597
    %770 = vmatprep.subr.bf16.mxu0 %v602
    %771 = vmatpush1.bf16.msra.mxu0 %v601
    %772 = vmatprep.subr.bf16.mxu0 %v606
    %773 = vmatpush1.bf16.msra.mxu0 %v605
    %774 = vmatprep.subr.bf16.mxu0 %v610
    %775 = vmatpush1.bf16.msra.mxu0 %v609
    %776 = vmatprep.subr.bf16.mxu0 %v614
    %777 = vmatpush1.bf16.msra.mxu0 %v613
    %778 = vmatprep.subr.bf16.mxu0 %v618
    %779 = vmatpush1.bf16.msra.mxu0 %v617
    %780 = vmatprep.subr.bf16.mxu0 0
    %781 = vmatpush1.bf16.msra.mxu0 0
    %782 = vmatprep.subr.bf16.mxu0 0
    %783 = vmatpush1.bf16.msra.mxu0 0
    %784 = vmatprep.subr.bf16.mxu0 0
    %785 = vmatpush1.bf16.msra.mxu0 0
    %786 = vmatprep.subr.bf16.mxu0 0
    %787 = vmatpush1.bf16.msra.mxu0 0
    %788 = vmatprep.subr.bf16.mxu0 0
    %789 = vmatpush1.bf16.msra.mxu0 0
    %790 = vmatprep.subr.bf16.mxu0 0
    %791 = vmatpush1.bf16.msra.mxu0 0
    %792 = vmatprep.subr.bf16.mxu0 0
    %793 = vmatpush1.bf16.msra.mxu0 0
    %794 = vmatprep.subr.bf16.mxu0 0
    %795 = vmatpush1.bf16.msra.mxu0 0
    %796 = vmatprep.mubr.bf16.mxu0 0
    %797 = vmatmul.mubr.bf16.gmra.mrb[0].mxu0 %v763
    %v798 = vpop.f32.mrb[0].mxu0
    %v799 = vadd.f32 0.0, %v798
    %v800 = vpop.f32.mrb[0].mxu0
    %v801 = vadd.f32 0.0, %v800
    %v802 = vpop.f32.mrb[0].mxu0
    %v803 = vpop.f32.mrb[0].mxu0
    %804 = vdwg.mxu0
    %805 = vmatprep.subr.bf16.mxu0 %v592
    %806 = vmatpush1.bf16.msra.mxu0 %v591
    %807 = vmatprep.subr.bf16.mxu0 %v596
    %808 = vmatpush1.bf16.msra.mxu0 %v595
    %809 = vmatprep.subr.bf16.mxu0 %v600
    %810 = vmatpush1.bf16.msra.mxu0 %v599
    %811 = vmatprep.subr.bf16.mxu0 %v604
    %812 = vmatpush1.bf16.msra.mxu0 %v603
    %813 = vmatprep.subr.bf16.mxu0 %v608
    %814 = vmatpush1.bf16.msra.mxu0 %v607
    %815 = vmatprep.subr.bf16.mxu0 %v612
    %816 = vmatpush1.bf16.msra.mxu0 %v611
    %817 = vmatprep.subr.bf16.mxu0 %v616
    %818 = vmatpush1.bf16.msra.mxu0 %v615
    %819 = vmatprep.subr.bf16.mxu0 %v620
    %820 = vmatpush1.bf16.msra.mxu0 %v619
    %821 = vmatprep.subr.bf16.mxu0 0
    %822 = vmatpush1.bf16.msra.mxu0 0
    %823 = vmatprep.subr.bf16.mxu0 0
    %824 = vmatpush1.bf16.msra.mxu0 0
    %825 = vmatprep.subr.bf16.mxu0 0
    %826 = vmatpush1.bf16.msra.mxu0 0
    %827 = vmatprep.subr.bf16.mxu0 0
    %828 = vmatpush1.bf16.msra.mxu0 0
    %829 = vmatprep.subr.bf16.mxu0 0
    %830 = vmatpush1.bf16.msra.mxu0 0
    %831 = vmatprep.subr.bf16.mxu0 0
    %832 = vmatpush1.bf16.msra.mxu0 0
    %833 = vmatprep.subr.bf16.mxu0 0
    %834 = vmatpush1.bf16.msra.mxu0 0
    %835 = vmatprep.subr.bf16.mxu0 0
    %836 = vmatpush1.bf16.msra.mxu0 0
    %837 = vmatprep.mubr.bf16.mxu0 0
    %838 = vmatmul.mubr.bf16.gmra.mrb[0].mxu0 %v763
    %v839 = vpop.f32.mrb[0].mxu0
    %v840 = vadd.f32 0.0, %v839
    %v841 = vpop.f32.mrb[0].mxu0
    %v842 = vadd.f32 0.0, %v841
    %v843 = vpop.f32.mrb[0].mxu0
    %v844 = vpop.f32.mrb[0].mxu0
    %845 = vdwg.mxu0
    %v850 = vrot.slane %v799, 6
    %v851 = vrot.slane %v801, 6
    %v852 = vrot.slane %v840, 6
    %v853 = vrot.slane %v842, 6
    %v858 = vadd.f32 %v442, %v850
    %v859 = vadd.f32 %v444, %v851
    %v860 = vadd.f32 %v485, %v852
    %v861 = vadd.f32 %v487, %v853
    %v862 = vxor.u32 %v858, 2147483648
    %v863 = vxor.u32 %v859, 2147483648
    %v864 = vxor.u32 %v860, 2147483648
    %v865 = vmul.f32 %v862, 1.442695
    %v866 = vpow.pop %v865
    %v867 = vmul.f32 %v863, 1.442695
    %v868 = vpow.pop %v867
    %v869 = vmul.f32 %v864, 1.442695
    %v870 = vpow.pop %v869
    %v871 = vadd.f32 %v866, 1.0
    %v872 = vadd.f32 %v868, 1.0
    %v873 = vadd.f32 %v870, 1.0
    %v874 = vrcp.pop %v871
    %v875 = vmul.f32 1.0, %v874
    %v876 = vrcp.pop %v872
    %v877 = vmul.f32 1.0, %v876
    %v878 = vrcp.pop %v873
    %v879 = vmul.f32 1.0, %v878
    %v880 = vtanh.pop %v861
    %v882 = vrot.slane %v760, 6
    %v884 = vmul.f32 %v877, %v882
    %v885 = vmul.f32 %v875, %v880
    %v886 = vadd.f32 %v884, %v885
    %v887 = vtanh.pop %v886
    %v888 = vmul.f32 %v879, %v887
    %v921 = vunpack.c.l.b16 %v184
    %v922 = vunpack.c.h.b16 %v184
    %v923 = vunpack.c.l.b16 %v185
    %v924 = vunpack.c.h.b16 %v185
    %v925 = vunpack.c.l.b16 %v186
    %v926 = vunpack.c.h.b16 %v186
    %v927 = vunpack.c.l.b16 %v187
    %v928 = vunpack.c.h.b16 %v187
    %v929 = vunpack.c.l.b16 %v188
    %v930 = vunpack.c.h.b16 %v188
    %v931 = vunpack.c.l.b16 %v189
    %v932 = vunpack.c.h.b16 %v189
    %v933 = vunpack.c.l.b16 %v190
    %v934 = vunpack.c.h.b16 %v190
    %v935 = vunpack.c.l.b16 %v191
    %v936 = vunpack.c.h.b16 %v191
    %v937 = vunpack.c.l.b16 %v192
    %v938 = vunpack.c.h.b16 %v192
    %v939 = vunpack.c.l.b16 %v193
    %v940 = vunpack.c.h.b16 %v193
    %v941 = vunpack.c.l.b16 %v194
    %v942 = vunpack.c.h.b16 %v194
    %v943 = vunpack.c.l.b16 %v195
    %v944 = vunpack.c.h.b16 %v195
    %v945 = vunpack.c.l.b16 %v196
    %v946 = vunpack.c.h.b16 %v196
    %v947 = vunpack.c.l.b16 %v197
    %v948 = vunpack.c.h.b16 %v197
    %v949 = vunpack.c.l.b16 %v198
    %v950 = vunpack.c.h.b16 %v198
    %v951 = vunpack.c.l.b16 %v199
    %v952 = vunpack.c.h.b16 %v199
    %v953 = vunpack.c.l.b16 %v200
    %v954 = vunpack.c.h.b16 %v200
    %v955 = vunpack.c.l.b16 %v201
    %v956 = vunpack.c.h.b16 %v201
    %v957 = vunpack.c.l.b16 %v202
    %v958 = vunpack.c.h.b16 %v202
    %v959 = vunpack.c.l.b16 %v203
    %v960 = vunpack.c.h.b16 %v203
    %v961 = vunpack.c.l.b16 %v204
    %v962 = vunpack.c.h.b16 %v204
    %v963 = vunpack.c.l.b16 %v205
    %v964 = vunpack.c.h.b16 %v205
    %v965 = vunpack.c.l.b16 %v206
    %v966 = vunpack.c.h.b16 %v206
    %v967 = vunpack.c.l.b16 %v207
    %v968 = vunpack.c.h.b16 %v207
    %v969 = vunpack.c.l.b16 %v208
    %v970 = vunpack.c.h.b16 %v208
    %v971 = vunpack.c.l.b16 %v209
    %v972 = vunpack.c.h.b16 %v209
    %v973 = vunpack.c.l.b16 %v210
    %v974 = vunpack.c.h.b16 %v210
    %v975 = vunpack.c.l.b16 %v211
    %v976 = vunpack.c.h.b16 %v211
    %v977 = vunpack.c.l.b16 %v212
    %v978 = vunpack.c.h.b16 %v212
    %v979 = vunpack.c.l.b16 %v213
    %v980 = vunpack.c.h.b16 %v213
    %v981 = vunpack.c.l.b16 %v214
    %v982 = vunpack.c.h.b16 %v214
    %v983 = vunpack.c.l.b16 %v215
    %v984 = vunpack.c.h.b16 %v215
    %v985 = vpack.c.b16 %v925, %v921
    %v986 = vpack.c.b16 %v926, %v922
    %v987 = vpack.c.b16 %v927, %v923
    %v988 = vpack.c.b16 %v928, %v924
    %v989 = vpack.c.b16 %v933, %v929
    %v990 = vpack.c.b16 %v934, %v930
    %v991 = vpack.c.b16 %v935, %v931
    %v992 = vpack.c.b16 %v936, %v932
    %v993 = vpack.c.b16 %v941, %v937
    %v994 = vpack.c.b16 %v942, %v938
    %v995 = vpack.c.b16 %v943, %v939
    %v996 = vpack.c.b16 %v944, %v940
    %v997 = vpack.c.b16 %v949, %v945
    %v998 = vpack.c.b16 %v950, %v946
    %v999 = vpack.c.b16 %v951, %v947
    %v1000 = vpack.c.b16 %v952, %v948
    %v1001 = vpack.c.b16 %v957, %v953
    %v1002 = vpack.c.b16 %v958, %v954
    %v1003 = vpack.c.b16 %v959, %v955
    %v1004 = vpack.c.b16 %v960, %v956
    %v1005 = vpack.c.b16 %v965, %v961
    %v1006 = vpack.c.b16 %v966, %v962
    %v1007 = vpack.c.b16 %v967, %v963
    %v1008 = vpack.c.b16 %v968, %v964
    %v1009 = vpack.c.b16 %v973, %v969
    %v1010 = vpack.c.b16 %v974, %v970
    %v1011 = vpack.c.b16 %v975, %v971
    %v1012 = vpack.c.b16 %v976, %v972
    %v1013 = vpack.c.b16 %v981, %v977
    %v1014 = vpack.c.b16 %v982, %v978
    %v1015 = vpack.c.b16 %v983, %v979
    %v1016 = vpack.c.b16 %v984, %v980
    %1049 = vmatprep.subr.bf16.mxu0 %v986
    %1050 = vmatpush1.bf16.msra.mxu0 %v985
    %1051 = vmatprep.subr.bf16.mxu0 %v990
    %1052 = vmatpush1.bf16.msra.mxu0 %v989
    %1053 = vmatprep.subr.bf16.mxu0 %v994
    %1054 = vmatpush1.bf16.msra.mxu0 %v993
    %1055 = vmatprep.subr.bf16.mxu0 %v998
    %1056 = vmatpush1.bf16.msra.mxu0 %v997
    %1057 = vmatprep.subr.bf16.mxu0 %v1002
    %1058 = vmatpush1.bf16.msra.mxu0 %v1001
    %1059 = vmatprep.subr.bf16.mxu0 %v1006
    %1060 = vmatpush1.bf16.msra.mxu0 %v1005
    %1061 = vmatprep.subr.bf16.mxu0 %v1010
    %1062 = vmatpush1.bf16.msra.mxu0 %v1009
    %1063 = vmatprep.subr.bf16.mxu0 %v1014
    %1064 = vmatpush1.bf16.msra.mxu0 %v1013
    %1065 = vmatprep.subr.bf16.mxu0 0
    %1066 = vmatpush1.bf16.msra.mxu0 0
    %1067 = vmatprep.subr.bf16.mxu0 0
    %1068 = vmatpush1.bf16.msra.mxu0 0
    %1069 = vmatprep.subr.bf16.mxu0 0
    %1070 = vmatpush1.bf16.msra.mxu0 0
    %1071 = vmatprep.subr.bf16.mxu0 0
    %1072 = vmatpush1.bf16.msra.mxu0 0
    %1073 = vmatprep.subr.bf16.mxu0 0
    %1074 = vmatpush1.bf16.msra.mxu0 0
    %1075 = vmatprep.subr.bf16.mxu0 0
    %1076 = vmatpush1.bf16.msra.mxu0 0
    %1077 = vmatprep.subr.bf16.mxu0 0
    %1078 = vmatpush1.bf16.msra.mxu0 0
    %1079 = vmatprep.subr.bf16.mxu0 0
    %1080 = vmatpush1.bf16.msra.mxu0 0
    %1081 = vmatprep.mubr.bf16.mxu0 0
    %1082 = vmatmul.mubr.bf16.gmra.mrb[0].mxu0 0
    %v1083 = vpop.f32.mrb[0].mxu0
    %v1084 = vadd.f32 0.0, %v1083
    %v1085 = vpop.f32.mrb[0].mxu0
    %v1086 = vadd.f32 0.0, %v1085
    %v1087 = vpop.f32.mrb[0].mxu0
    %v1088 = vpop.f32.mrb[0].mxu0
    %1089 = vdwg.mxu0
    %1090 = vmatprep.subr.bf16.mxu0 %v988
    %1091 = vmatpush1.bf16.msra.mxu0 %v987
    %1092 = vmatprep.subr.bf16.mxu0 %v992
    %1093 = vmatpush1.bf16.msra.mxu0 %v991
    %1094 = vmatprep.subr.bf16.mxu0 %v996
    %1095 = vmatpush1.bf16.msra.mxu0 %v995
    %1096 = vmatprep.subr.bf16.mxu0 %v1000
    %1097 = vmatpush1.bf16.msra.mxu0 %v999
    %1098 = vmatprep.subr.bf16.mxu0 %v1004
    %1099 = vmatpush1.bf16.msra.mxu0 %v1003
    %1100 = vmatprep.subr.bf16.mxu0 %v1008
    %1101 = vmatpush1.bf16.msra.mxu0 %v1007
    %1102 = vmatprep.subr.bf16.mxu0 %v1012
    %1103 = vmatpush1.bf16.msra.mxu0 %v1011
    %1104 = vmatprep.subr.bf16.mxu0 %v1016
    %1105 = vmatpush1.bf16.msra.mxu0 %v1015
    %1106 = vmatprep.subr.bf16.mxu0 0
    %1107 = vmatpush1.bf16.msra.mxu0 0
    %1108 = vmatprep.subr.bf16.mxu0 0
    %1109 = vmatpush1.bf16.msra.mxu0 0
    %1110 = vmatprep.subr.bf16.mxu0 0
    %1111 = vmatpush1.bf16.msra.mxu0 0
    %1112 = vmatprep.subr.bf16.mxu0 0
    %1113 = vmatpush1.bf16.msra.mxu0 0
    %1114 = vmatprep.subr.bf16.mxu0 0
    %1115 = vmatpush1.bf16.msra.mxu0 0
    %1116 = vmatprep.subr.bf16.mxu0 0
    %1117 = vmatpush1.bf16.msra.mxu0 0
    %1118 = vmatprep.subr.bf16.mxu0 0
    %1119 = vmatpush1.bf16.msra.mxu0 0
    %1120 = vmatprep.subr.bf16.mxu0 0
    %1121 = vmatpush1.bf16.msra.mxu0 0
    %1122 = vmatprep.mubr.bf16.mxu0 0
    %1123 = vmatmul.mubr.bf16.gmra.mrb[0].mxu0 0
    %v1124 = vpop.f32.mrb[0].mxu0
    %v1125 = vadd.f32 0.0, %v1124
    %v1126 = vpop.f32.mrb[0].mxu0
    %v1127 = vadd.f32 0.0, %v1126
    %v1128 = vpop.f32.mrb[0].mxu0
    %v1129 = vpop.f32.mrb[0].mxu0
    %1130 = vdwg.mxu0
    %v1163 = vunpack.c.l.b16 %v120
    %v1164 = vunpack.c.h.b16 %v120
    %v1165 = vunpack.c.l.b16 %v121
    %v1166 = vunpack.c.h.b16 %v121
    %v1167 = vunpack.c.l.b16 %v122
    %v1168 = vunpack.c.h.b16 %v122
    %v1169 = vunpack.c.l.b16 %v123
    %v1170 = vunpack.c.h.b16 %v123
    %v1171 = vunpack.c.l.b16 %v124
    %v1172 = vunpack.c.h.b16 %v124
    %v1173 = vunpack.c.l.b16 %v125
    %v1174 = vunpack.c.h.b16 %v125
    %v1175 = vunpack.c.l.b16 %v126
    %v1176 = vunpack.c.h.b16 %v126
    %v1177 = vunpack.c.l.b16 %v127
    %v1178 = vunpack.c.h.b16 %v127
    %v1179 = vunpack.c.l.b16 %v128
    %v1180 = vunpack.c.h.b16 %v128
    %v1181 = vunpack.c.l.b16 %v129
    %v1182 = vunpack.c.h.b16 %v129
    %v1183 = vunpack.c.l.b16 %v130
    %v1184 = vunpack.c.h.b16 %v130
    %v1185 = vunpack.c.l.b16 %v131
    %v1186 = vunpack.c.h.b16 %v131
    %v1187 = vunpack.c.l.b16 %v132
    %v1188 = vunpack.c.h.b16 %v132
    %v1189 = vunpack.c.l.b16 %v133
    %v1190 = vunpack.c.h.b16 %v133
    %v1191 = vunpack.c.l.b16 %v134
    %v1192 = vunpack.c.h.b16 %v134
    %v1193 = vunpack.c.l.b16 %v135
    %v1194 = vunpack.c.h.b16 %v135
    %v1195 = vunpack.c.l.b16 %v136
    %v1196 = vunpack.c.h.b16 %v136
    %v1197 = vunpack.c.l.b16 %v137
    %v1198 = vunpack.c.h.b16 %v137
    %v1199 = vunpack.c.l.b16 %v138
    %v1200 = vunpack.c.h.b16 %v138
    %v1201 = vunpack.c.l.b16 %v139
    %v1202 = vunpack.c.h.b16 %v139
    %v1203 = vunpack.c.l.b16 %v140
    %v1204 = vunpack.c.h.b16 %v140
    %v1205 = vunpack.c.l.b16 %v141
    %v1206 = vunpack.c.h.b16 %v141
    %v1207 = vunpack.c.l.b16 %v142
    %v1208 = vunpack.c.h.b16 %v142
    %v1209 = vunpack.c.l.b16 %v143
    %v1210 = vunpack.c.h.b16 %v143
    %v1211 = vunpack.c.l.b16 %v144
    %v1212 = vunpack.c.h.b16 %v144
    %v1213 = vunpack.c.l.b16 %v145
    %v1214 = vunpack.c.h.b16 %v145
    %v1215 = vunpack.c.l.b16 %v146
    %v1216 = vunpack.c.h.b16 %v146
    %v1217 = vunpack.c.l.b16 %v147
    %v1218 = vunpack.c.h.b16 %v147
    %v1219 = vunpack.c.l.b16 %v148
    %v1220 = vunpack.c.h.b16 %v148
    %v1221 = vunpack.c.l.b16 %v149
    %v1222 = vunpack.c.h.b16 %v149
    %v1223 = vunpack.c.l.b16 %v150
    %v1224 = vunpack.c.h.b16 %v150
    %v1225 = vunpack.c.l.b16 %v151
    %v1226 = vunpack.c.h.b16 %v151
    %v1227 = vpack.c.b16 %v1167, %v1163
    %v1228 = vpack.c.b16 %v1168, %v1164
    %v1229 = vpack.c.b16 %v1169, %v1165
    %v1230 = vpack.c.b16 %v1170, %v1166
    %v1231 = vpack.c.b16 %v1175, %v1171
    %v1232 = vpack.c.b16 %v1176, %v1172
    %v1233 = vpack.c.b16 %v1177, %v1173
    %v1234 = vpack.c.b16 %v1178, %v1174
    %v1235 = vpack.c.b16 %v1183, %v1179
    %v1236 = vpack.c.b16 %v1184, %v1180
    %v1237 = vpack.c.b16 %v1185, %v1181
    %v1238 = vpack.c.b16 %v1186, %v1182
    %v1239 = vpack.c.b16 %v1191, %v1187
    %v1240 = vpack.c.b16 %v1192, %v1188
    %v1241 = vpack.c.b16 %v1193, %v1189
    %v1242 = vpack.c.b16 %v1194, %v1190
    %v1243 = vpack.c.b16 %v1199, %v1195
    %v1244 = vpack.c.b16 %v1200, %v1196
    %v1245 = vpack.c.b16 %v1201, %v1197
    %v1246 = vpack.c.b16 %v1202, %v1198
    %v1247 = vpack.c.b16 %v1207, %v1203
    %v1248 = vpack.c.b16 %v1208, %v1204
    %v1249 = vpack.c.b16 %v1209, %v1205
    %v1250 = vpack.c.b16 %v1210, %v1206
    %v1251 = vpack.c.b16 %v1215, %v1211
    %v1252 = vpack.c.b16 %v1216, %v1212
    %v1253 = vpack.c.b16 %v1217, %v1213
    %v1254 = vpack.c.b16 %v1218, %v1214
    %v1255 = vpack.c.b16 %v1223, %v1219
    %v1256 = vpack.c.b16 %v1224, %v1220
    %v1257 = vpack.c.b16 %v1225, %v1221
    %v1258 = vpack.c.b16 %v1226, %v1222
    %1291 = vmatprep.subr.bf16.mxu0 %v1228
    %1292 = vmatpush1.bf16.msra.mxu0 %v1227
    %1293 = vmatprep.subr.bf16.mxu0 %v1232
    %1294 = vmatpush1.bf16.msra.mxu0 %v1231
    %1295 = vmatprep.subr.bf16.mxu0 %v1236
    %1296 = vmatpush1.bf16.msra.mxu0 %v1235
    %1297 = vmatprep.subr.bf16.mxu0 %v1240
    %1298 = vmatpush1.bf16.msra.mxu0 %v1239
    %1299 = vmatprep.subr.bf16.mxu0 %v1244
    %1300 = vmatpush1.bf16.msra.mxu0 %v1243
    %1301 = vmatprep.subr.bf16.mxu0 %v1248
    %1302 = vmatpush1.bf16.msra.mxu0 %v1247
    %1303 = vmatprep.subr.bf16.mxu0 %v1252
    %1304 = vmatpush1.bf16.msra.mxu0 %v1251
    %1305 = vmatprep.subr.bf16.mxu0 %v1256
    %1306 = vmatpush1.bf16.msra.mxu0 %v1255
    %1307 = vmatprep.subr.bf16.mxu0 0
    %1308 = vmatpush1.bf16.msra.mxu0 0
    %1309 = vmatprep.subr.bf16.mxu0 0
    %1310 = vmatpush1.bf16.msra.mxu0 0
    %1311 = vmatprep.subr.bf16.mxu0 0
    %1312 = vmatpush1.bf16.msra.mxu0 0
    %1313 = vmatprep.subr.bf16.mxu0 0
    %1314 = vmatpush1.bf16.msra.mxu0 0
    %1315 = vmatprep.subr.bf16.mxu0 0
    %1316 = vmatpush1.bf16.msra.mxu0 0
    %1317 = vmatprep.subr.bf16.mxu0 0
    %1318 = vmatpush1.bf16.msra.mxu0 0
    %1319 = vmatprep.subr.bf16.mxu0 0
    %1320 = vmatpush1.bf16.msra.mxu0 0
    %1321 = vmatprep.subr.bf16.mxu0 0
    %1322 = vmatpush1.bf16.msra.mxu0 0
    %1323 = vmatprep.mubr.bf16.mxu0 0
    %1324 = vmatmul.mubr.bf16.gmra.mrb[0].mxu0 %v763
    %v1325 = vpop.f32.mrb[0].mxu0
    %v1326 = vadd.f32 %v1084, %v1325
    %v1327 = vpop.f32.mrb[0].mxu0
    %v1328 = vadd.f32 %v1086, %v1327
    %v1329 = vpop.f32.mrb[0].mxu0
    %v1330 = vpop.f32.mrb[0].mxu0
    %1331 = vdwg.mxu0
    %1332 = vmatprep.subr.bf16.mxu0 %v1230
    %1333 = vmatpush1.bf16.msra.mxu0 %v1229
    %1334 = vmatprep.subr.bf16.mxu0 %v1234
    %1335 = vmatpush1.bf16.msra.mxu0 %v1233
    %1336 = vmatprep.subr.bf16.mxu0 %v1238
    %1337 = vmatpush1.bf16.msra.mxu0 %v1237
    %1338 = vmatprep.subr.bf16.mxu0 %v1242
    %1339 = vmatpush1.bf16.msra.mxu0 %v1241
    %1340 = vmatprep.subr.bf16.mxu0 %v1246
    %1341 = vmatpush1.bf16.msra.mxu0 %v1245
    %1342 = vmatprep.subr.bf16.mxu0 %v1250
    %1343 = vmatpush1.bf16.msra.mxu0 %v1249
    %1344 = vmatprep.subr.bf16.mxu0 %v1254
    %1345 = vmatpush1.bf16.msra.mxu0 %v1253
    %1346 = vmatprep.subr.bf16.mxu0 %v1258
    %1347 = vmatpush1.bf16.msra.mxu0 %v1257
    %1348 = vmatprep.subr.bf16.mxu0 0
    %1349 = vmatpush1.bf16.msra.mxu0 0
    %1350 = vmatprep.subr.bf16.mxu0 0
    %1351 = vmatpush1.bf16.msra.mxu0 0
    %1352 = vmatprep.subr.bf16.mxu0 0
    %1353 = vmatpush1.bf16.msra.mxu0 0
    %1354 = vmatprep.subr.bf16.mxu0 0
    %1355 = vmatpush1.bf16.msra.mxu0 0
    %1356 = vmatprep.subr.bf16.mxu0 0
    %1357 = vmatpush1.bf16.msra.mxu0 0
    %1358 = vmatprep.subr.bf16.mxu0 0
    %1359 = vmatpush1.bf16.msra.mxu0 0
    %1360 = vmatprep.subr.bf16.mxu0 0
    %1361 = vmatpush1.bf16.msra.mxu0 0
    %1362 = vmatprep.subr.bf16.mxu0 0
    %1363 = vmatpush1.bf16.msra.mxu0 0
    %1364 = vmatprep.mubr.bf16.mxu0 0
    %1365 = vmatmul.mubr.bf16.gmra.mrb[0].mxu0 %v763
    %v1366 = vpop.f32.mrb[0].mxu0
    %v1367 = vadd.f32 %v1125, %v1366
    %v1368 = vpop.f32.mrb[0].mxu0
    %v1369 = vadd.f32 %v1127, %v1368
    %v1370 = vpop.f32.mrb[0].mxu0
    %v1371 = vpop.f32.mrb[0].mxu0
    %1372 = vdwg.mxu0
    %v1374 = vlaneseq
    %v1375 = vshrl.u32 %v1374, 7
    %v1376 = vsub.s32 0, %v1375
    %v1377 = vrot.slane %v217, %v1376
    %v1378 = vlaneseq
    %v1379 = vshrl.u32 %v1378, 7
    %v1380 = vsub.s32 1, %v1379
    %v1381 = vrot.slane %v217, %v1380
    %v1382 = vlaneseq
    %v1383 = vshrl.u32 %v1382, 7
    %v1384 = vsub.s32 2, %v1383
    %v1385 = vrot.slane %v217, %v1384
    %v1386 = vlaneseq
    %v1387 = vshrl.u32 %v1386, 7
    %v1388 = vsub.s32 3, %v1387
    %v1389 = vrot.slane %v217, %v1388
    %v1394 = vadd.f32 %v1326, %v1377
    %v1395 = vadd.f32 %v1328, %v1381
    %v1396 = vadd.f32 %v1367, %v1385
    %v1397 = vadd.f32 %v1369, %v1389
    %v1398 = vxor.u32 %v1394, 2147483648
    %v1399 = vxor.u32 %v1395, 2147483648
    %v1400 = vxor.u32 %v1396, 2147483648
    %v1401 = vmul.f32 %v1398, 1.442695
    %v1402 = vpow.pop %v1401
    %v1403 = vmul.f32 %v1399, 1.442695
    %v1404 = vpow.pop %v1403
    %v1405 = vmul.f32 %v1400, 1.442695
    %v1406 = vpow.pop %v1405
    %v1407 = vadd.f32 %v1402, 1.0
    %v1408 = vadd.f32 %v1404, 1.0
    %v1409 = vadd.f32 %v1406, 1.0
    %v1410 = vrcp.pop %v1407
    %v1411 = vmul.f32 1.0, %v1410
    %v1412 = vrcp.pop %v1408
    %v1413 = vmul.f32 1.0, %v1412
    %v1414 = vrcp.pop %v1409
    %v1415 = vmul.f32 1.0, %v1414
    %v1416 = vtanh.pop %v1397
    %v1417 = vmul.f32 %v1413, 0.0
    %v1418 = vmul.f32 %v1411, %v1416
    %v1419 = vadd.f32 %v1417, %v1418
    %v1420 = vtanh.pop %v1419
    %v1421 = vmul.f32 %v1415, %v1420
    %v1422 = vpack.c.bf16 %v888, %v888
    %v1424 = vrot.slane %v1422, 1
    %1426 = vmatprep.subr.bf16.mxu0 %v590
    %1427 = vmatpush1.bf16.msra.mxu0 %v589
    %1428 = vmatprep.subr.bf16.mxu0 %v594
    %1429 = vmatpush1.bf16.msra.mxu0 %v593
    %1430 = vmatprep.subr.bf16.mxu0 %v598
    %1431 = vmatpush1.bf16.msra.mxu0 %v597
    %1432 = vmatprep.subr.bf16.mxu0 %v602
    %1433 = vmatpush1.bf16.msra.mxu0 %v601
    %1434 = vmatprep.subr.bf16.mxu0 %v606
    %1435 = vmatpush1.bf16.msra.mxu0 %v605
    %1436 = vmatprep.subr.bf16.mxu0 %v610
    %1437 = vmatpush1.bf16.msra.mxu0 %v609
    %1438 = vmatprep.subr.bf16.mxu0 %v614
    %1439 = vmatpush1.bf16.msra.mxu0 %v613
    %1440 = vmatprep.subr.bf16.mxu0 %v618
    %1441 = vmatpush1.bf16.msra.mxu0 %v617
    %1442 = vmatprep.subr.bf16.mxu0 0
    %1443 = vmatpush1.bf16.msra.mxu0 0
    %1444 = vmatprep.subr.bf16.mxu0 0
    %1445 = vmatpush1.bf16.msra.mxu0 0
    %1446 = vmatprep.subr.bf16.mxu0 0
    %1447 = vmatpush1.bf16.msra.mxu0 0
    %1448 = vmatprep.subr.bf16.mxu0 0
    %1449 = vmatpush1.bf16.msra.mxu0 0
    %1450 = vmatprep.subr.bf16.mxu0 0
    %1451 = vmatpush1.bf16.msra.mxu0 0
    %1452 = vmatprep.subr.bf16.mxu0 0
    %1453 = vmatpush1.bf16.msra.mxu0 0
    %1454 = vmatprep.subr.bf16.mxu0 0
    %1455 = vmatpush1.bf16.msra.mxu0 0
    %1456 = vmatprep.subr.bf16.mxu0 0
    %1457 = vmatpush1.bf16.msra.mxu0 0
    %1458 = vmatprep.mubr.bf16.mxu0 0
    %1459 = vmatmul.mubr.bf16.gmra.mrb[0].mxu0 %v1424
    %v1460 = vpop.f32.mrb[0].mxu0
    %v1461 = vadd.f32 0.0, %v1460
    %v1462 = vpop.f32.mrb[0].mxu0
    %v1463 = vadd.f32 0.0, %v1462
    %v1464 = vpop.f32.mrb[0].mxu0
    %v1465 = vpop.f32.mrb[0].mxu0
    %1466 = vdwg.mxu0
    %1467 = vmatprep.subr.bf16.mxu0 %v592
    %1468 = vmatpush1.bf16.msra.mxu0 %v591
    %1469 = vmatprep.subr.bf16.mxu0 %v596
    %1470 = vmatpush1.bf16.msra.mxu0 %v595
    %1471 = vmatprep.subr.bf16.mxu0 %v600
    %1472 = vmatpush1.bf16.msra.mxu0 %v599
    %1473 = vmatprep.subr.bf16.mxu0 %v604
    %1474 = vmatpush1.bf16.msra.mxu0 %v603
    %1475 = vmatprep.subr.bf16.mxu0 %v608
    %1476 = vmatpush1.bf16.msra.mxu0 %v607
    %1477 = vmatprep.subr.bf16.mxu0 %v612
    %1478 = vmatpush1.bf16.msra.mxu0 %v611
    %1479 = vmatprep.subr.bf16.mxu0 %v616
    %1480 = vmatpush1.bf16.msra.mxu0 %v615
    %1481 = vmatprep.subr.bf16.mxu0 %v620
    %1482 = vmatpush1.bf16.msra.mxu0 %v619
    %1483 = vmatprep.subr.bf16.mxu0 0
    %1484 = vmatpush1.bf16.msra.mxu0 0
    %1485 = vmatprep.subr.bf16.mxu0 0
    %1486 = vmatpush1.bf16.msra.mxu0 0
    %1487 = vmatprep.subr.bf16.mxu0 0
    %1488 = vmatpush1.bf16.msra.mxu0 0
    %1489 = vmatprep.subr.bf16.mxu0 0
    %1490 = vmatpush1.bf16.msra.mxu0 0
    %1491 = vmatprep.subr.bf16.mxu0 0
    %1492 = vmatpush1.bf16.msra.mxu0 0
    %1493 = vmatprep.subr.bf16.mxu0 0
    %1494 = vmatpush1.bf16.msra.mxu0 0
    %1495 = vmatprep.subr.bf16.mxu0 0
    %1496 = vmatpush1.bf16.msra.mxu0 0
    %1497 = vmatprep.subr.bf16.mxu0 0
    %1498 = vmatpush1.bf16.msra.mxu0 0
    %1499 = vmatprep.mubr.bf16.mxu0 0
    %1500 = vmatmul.mubr.bf16.gmra.mrb[0].mxu0 %v1424
    %v1501 = vpop.f32.mrb[0].mxu0
    %v1502 = vadd.f32 0.0, %v1501
    %v1503 = vpop.f32.mrb[0].mxu0
    %v1504 = vadd.f32 0.0, %v1503
    %v1505 = vpop.f32.mrb[0].mxu0
    %v1506 = vpop.f32.mrb[0].mxu0
    %1507 = vdwg.mxu0
    %v1512 = vrot.slane %v1461, 4
    %v1513 = vrot.slane %v1463, 4
    %v1514 = vrot.slane %v1502, 4
    %v1515 = vrot.slane %v1504, 4
    %v1520 = vadd.f32 %v442, %v1512
    %v1521 = vadd.f32 %v444, %v1513
    %v1522 = vadd.f32 %v485, %v1514
    %v1523 = vadd.f32 %v487, %v1515
    %v1524 = vxor.u32 %v1520, 2147483648
    %v1525 = vxor.u32 %v1521, 2147483648
    %v1526 = vxor.u32 %v1522, 2147483648
    %v1527 = vmul.f32 %v1524, 1.442695
    %v1528 = vpow.pop %v1527
    %v1529 = vmul.f32 %v1525, 1.442695
    %v1530 = vpow.pop %v1529
    %v1531 = vmul.f32 %v1526, 1.442695
    %v1532 = vpow.pop %v1531
    %v1533 = vadd.f32 %v1528, 1.0
    %v1534 = vadd.f32 %v1530, 1.0
    %v1535 = vadd.f32 %v1532, 1.0
    %v1536 = vrcp.pop %v1533
    %v1537 = vmul.f32 1.0, %v1536
    %v1538 = vrcp.pop %v1534
    %v1539 = vmul.f32 1.0, %v1538
    %v1540 = vrcp.pop %v1535
    %v1541 = vmul.f32 1.0, %v1540
    %v1542 = vtanh.pop %v1523
    %v1544 = vrot.slane %v886, 6
    %v1546 = vmul.f32 %v1539, %v1544
    %v1547 = vmul.f32 %v1537, %v1542
    %v1548 = vadd.f32 %v1546, %v1547
    %v1549 = vtanh.pop %v1548
    %v1550 = vmul.f32 %v1541, %v1549
    %v1551 = vpack.c.bf16 %v1421, %v1421
    %1552 = vmatprep.subr.bf16.mxu0 %v986
    %1553 = vmatpush1.bf16.msra.mxu0 %v985
    %1554 = vmatprep.subr.bf16.mxu0 %v990
    %1555 = vmatpush1.bf16.msra.mxu0 %v989
    %1556 = vmatprep.subr.bf16.mxu0 %v994
    %1557 = vmatpush1.bf16.msra.mxu0 %v993
    %1558 = vmatprep.subr.bf16.mxu0 %v998
    %1559 = vmatpush1.bf16.msra.mxu0 %v997
    %1560 = vmatprep.subr.bf16.mxu0 %v1002
    %1561 = vmatpush1.bf16.msra.mxu0 %v1001
    %1562 = vmatprep.subr.bf16.mxu0 %v1006
    %1563 = vmatpush1.bf16.msra.mxu0 %v1005
    %1564 = vmatprep.subr.bf16.mxu0 %v1010
    %1565 = vmatpush1.bf16.msra.mxu0 %v1009
    %1566 = vmatprep.subr.bf16.mxu0 %v1014
    %1567 = vmatpush1.bf16.msra.mxu0 %v1013
    %1568 = vmatprep.subr.bf16.mxu0 0
    %1569 = vmatpush1.bf16.msra.mxu0 0
    %1570 = vmatprep.subr.bf16.mxu0 0
    %1571 = vmatpush1.bf16.msra.mxu0 0
    %1572 = vmatprep.subr.bf16.mxu0 0
    %1573 = vmatpush1.bf16.msra.mxu0 0
    %1574 = vmatprep.subr.bf16.mxu0 0
    %1575 = vmatpush1.bf16.msra.mxu0 0
    %1576 = vmatprep.subr.bf16.mxu0 0
    %1577 = vmatpush1.bf16.msra.mxu0 0
    %1578 = vmatprep.subr.bf16.mxu0 0
    %1579 = vmatpush1.bf16.msra.mxu0 0
    %1580 = vmatprep.subr.bf16.mxu0 0
    %1581 = vmatpush1.bf16.msra.mxu0 0
    %1582 = vmatprep.subr.bf16.mxu0 0
    %1583 = vmatpush1.bf16.msra.mxu0 0
    %1584 = vmatprep.mubr.bf16.mxu0 0
    %1585 = vmatmul.mubr.bf16.gmra.mrb[0].mxu0 %v1551
    %v1586 = vpop.f32.mrb[0].mxu0
    %v1587 = vadd.f32 0.0, %v1586
    %v1588 = vpop.f32.mrb[0].mxu0
    %v1589 = vadd.f32 0.0, %v1588
    %v1590 = vpop.f32.mrb[0].mxu0
    %v1591 = vpop.f32.mrb[0].mxu0
    %1592 = vdwg.mxu0
    %1593 = vmatprep.subr.bf16.mxu0 %v988
    %1594 = vmatpush1.bf16.msra.mxu0 %v987
    %1595 = vmatprep.subr.bf16.mxu0 %v992
    %1596 = vmatpush1.bf16.msra.mxu0 %v991
    %1597 = vmatprep.subr.bf16.mxu0 %v996
    %1598 = vmatpush1.bf16.msra.mxu0 %v995
    %1599 = vmatprep.subr.bf16.mxu0 %v1000
    %1600 = vmatpush1.bf16.msra.mxu0 %v999
    %1601 = vmatprep.subr.bf16.mxu0 %v1004
    %1602 = vmatpush1.bf16.msra.mxu0 %v1003
    %1603 = vmatprep.subr.bf16.mxu0 %v1008
    %1604 = vmatpush1.bf16.msra.mxu0 %v1007
    %1605 = vmatprep.subr.bf16.mxu0 %v1012
    %1606 = vmatpush1.bf16.msra.mxu0 %v1011
    %1607 = vmatprep.subr.bf16.mxu0 %v1016
    %1608 = vmatpush1.bf16.msra.mxu0 %v1015
    %1609 = vmatprep.subr.bf16.mxu0 0
    %1610 = vmatpush1.bf16.msra.mxu0 0
    %1611 = vmatprep.subr.bf16.mxu0 0
    %1612 = vmatpush1.bf16.msra.mxu0 0
    %1613 = vmatprep.subr.bf16.mxu0 0
    %1614 = vmatpush1.bf16.msra.mxu0 0
    %1615 = vmatprep.subr.bf16.mxu0 0
    %1616 = vmatpush1.bf16.msra.mxu0 0
    %1617 = vmatprep.subr.bf16.mxu0 0
    %1618 = vmatpush1.bf16.msra.mxu0 0
    %1619 = vmatprep.subr.bf16.mxu0 0
    %1620 = vmatpush1.bf16.msra.mxu0 0
    %1621 = vmatprep.subr.bf16.mxu0 0
    %1622 = vmatpush1.bf16.msra.mxu0 0
    %1623 = vmatprep.subr.bf16.mxu0 0
    %1624 = vmatpush1.bf16.msra.mxu0 0
    %1625 = vmatprep.mubr.bf16.mxu0 0
    %1626 = vmatmul.mubr.bf16.gmra.mrb[0].mxu0 %v1551
    %v1627 = vpop.f32.mrb[0].mxu0
    %v1628 = vadd.f32 0.0, %v1627
    %v1629 = vpop.f32.mrb[0].mxu0
    %v1630 = vadd.f32 0.0, %v1629
    %v1631 = vpop.f32.mrb[0].mxu0
    %v1632 = vpop.f32.mrb[0].mxu0
    %1633 = vdwg.mxu0
    %1634 = vmatprep.subr.bf16.mxu0 %v1228
    %1635 = vmatpush1.bf16.msra.mxu0 %v1227
    %1636 = vmatprep.subr.bf16.mxu0 %v1232
    %1637 = vmatpush1.bf16.msra.mxu0 %v1231
    %1638 = vmatprep.subr.bf16.mxu0 %v1236
    %1639 = vmatpush1.bf16.msra.mxu0 %v1235
    %1640 = vmatprep.subr.bf16.mxu0 %v1240
    %1641 = vmatpush1.bf16.msra.mxu0 %v1239
    %1642 = vmatprep.subr.bf16.mxu0 %v1244
    %1643 = vmatpush1.bf16.msra.mxu0 %v1243
    %1644 = vmatprep.subr.bf16.mxu0 %v1248
    %1645 = vmatpush1.bf16.msra.mxu0 %v1247
    %1646 = vmatprep.subr.bf16.mxu0 %v1252
    %1647 = vmatpush1.bf16.msra.mxu0 %v1251
    %1648 = vmatprep.subr.bf16.mxu0 %v1256
    %1649 = vmatpush1.bf16.msra.mxu0 %v1255
    %1650 = vmatprep.subr.bf16.mxu0 0
    %1651 = vmatpush1.bf16.msra.mxu0 0
    %1652 = vmatprep.subr.bf16.mxu0 0
    %1653 = vmatpush1.bf16.msra.mxu0 0
    %1654 = vmatprep.subr.bf16.mxu0 0
    %1655 = vmatpush1.bf16.msra.mxu0 0
    %1656 = vmatprep.subr.bf16.mxu0 0
    %1657 = vmatpush1.bf16.msra.mxu0 0
    %1658 = vmatprep.subr.bf16.mxu0 0
    %1659 = vmatpush1.bf16.msra.mxu0 0
    %1660 = vmatprep.subr.bf16.mxu0 0
    %1661 = vmatpush1.bf16.msra.mxu0 0
    %1662 = vmatprep.subr.bf16.mxu0 0
    %1663 = vmatpush1.bf16.msra.mxu0 0
    %1664 = vmatprep.subr.bf16.mxu0 0
    %1665 = vmatpush1.bf16.msra.mxu0 0
    %1666 = vmatprep.mubr.bf16.mxu0 0
    %1667 = vmatmul.mubr.bf16.gmra.mrb[0].mxu0 %v1424
    %v1668 = vpop.f32.mrb[0].mxu0
    %v1669 = vadd.f32 %v1587, %v1668
    %v1670 = vpop.f32.mrb[0].mxu0
    %v1671 = vadd.f32 %v1589, %v1670
    %v1672 = vpop.f32.mrb[0].mxu0
    %v1673 = vpop.f32.mrb[0].mxu0
    %1674 = vdwg.mxu0
    %1675 = vmatprep.subr.bf16.mxu0 %v1230
    %1676 = vmatpush1.bf16.msra.mxu0 %v1229
    %1677 = vmatprep.subr.bf16.mxu0 %v1234
    %1678 = vmatpush1.bf16.msra.mxu0 %v1233
    %1679 = vmatprep.subr.bf16.mxu0 %v1238
    %1680 = vmatpush1.bf16.msra.mxu0 %v1237
    %1681 = vmatprep.subr.bf16.mxu0 %v1242
    %1682 = vmatpush1.bf16.msra.mxu0 %v1241
    %1683 = vmatprep.subr.bf16.mxu0 %v1246
    %1684 = vmatpush1.bf16.msra.mxu0 %v1245
    %1685 = vmatprep.subr.bf16.mxu0 %v1250
    %1686 = vmatpush1.bf16.msra.mxu0 %v1249
    %1687 = vmatprep.subr.bf16.mxu0 %v1254
    %1688 = vmatpush1.bf16.msra.mxu0 %v1253
    %1689 = vmatprep.subr.bf16.mxu0 %v1258
    %1690 = vmatpush1.bf16.msra.mxu0 %v1257
    %1691 = vmatprep.subr.bf16.mxu0 0
    %1692 = vmatpush1.bf16.msra.mxu0 0
    %1693 = vmatprep.subr.bf16.mxu0 0
    %1694 = vmatpush1.bf16.msra.mxu0 0
    %1695 = vmatprep.subr.bf16.mxu0 0
    %1696 = vmatpush1.bf16.msra.mxu0 0
    %1697 = vmatprep.subr.bf16.mxu0 0
    %1698 = vmatpush1.bf16.msra.mxu0 0
    %1699 = vmatprep.subr.bf16.mxu0 0
    %1700 = vmatpush1.bf16.msra.mxu0 0
    %1701 = vmatprep.subr.bf16.mxu0 0
    %1702 = vmatpush1.bf16.msra.mxu0 0
    %1703 = vmatprep.subr.bf16.mxu0 0
    %1704 = vmatpush1.bf16.msra.mxu0 0
    %1705 = vmatprep.subr.bf16.mxu0 0
    %1706 = vmatpush1.bf16.msra.mxu0 0
    %1707 = vmatprep.mubr.bf16.mxu0 0
    %1708 = vmatmul.mubr.bf16.gmra.mrb[0].mxu0 %v1424
    %v1709 = vpop.f32.mrb[0].mxu0
    %v1710 = vadd.f32 %v1628, %v1709
    %v1711 = vpop.f32.mrb[0].mxu0
    %v1712 = vadd.f32 %v1630, %v1711
    %v1713 = vpop.f32.mrb[0].mxu0
    %v1714 = vpop.f32.mrb[0].mxu0
    %1715 = vdwg.mxu0
    %v1716 = vadd.f32 %v1669, %v1377
    %v1717 = vadd.f32 %v1671, %v1381
    %v1718 = vadd.f32 %v1710, %v1385
    %v1719 = vadd.f32 %v1712, %v1389
    %v1720 = vxor.u32 %v1716, 2147483648
    %v1721 = vxor.u32 %v1717, 2147483648
    %v1722 = vxor.u32 %v1718, 2147483648
    %v1723 = vmul.f32 %v1720, 1.442695
    %v1724 = vpow.pop %v1723
    %v1725 = vmul.f32 %v1721, 1.442695
    %v1726 = vpow.pop %v1725
    %v1727 = vmul.f32 %v1722, 1.442695
    %v1728 = vpow.pop %v1727
    %v1729 = vadd.f32 %v1724, 1.0
    %v1730 = vadd.f32 %v1726, 1.0
    %v1731 = vadd.f32 %v1728, 1.0
    %v1732 = vrcp.pop %v1729
    %v1733 = vmul.f32 1.0, %v1732
    %v1734 = vrcp.pop %v1730
    %v1735 = vmul.f32 1.0, %v1734
    %v1736 = vrcp.pop %v1731
    %v1737 = vmul.f32 1.0, %v1736
    %v1738 = vtanh.pop %v1719
    %v1739 = vmul.f32 %v1735, %v1419
    %v1740 = vmul.f32 %v1733, %v1738
    %v1741 = vadd.f32 %v1739, %v1740
    %v1742 = vtanh.pop %v1741
    %v1743 = vmul.f32 %v1737, %v1742
    %v1744 = vpack.c.bf16 %v1550, %v1550
    %v1746 = vrot.slane %v1744, 2
    %1748 = vmatprep.subr.bf16.mxu0 %v590
    %1749 = vmatpush1.bf16.msra.mxu0 %v589
    %1750 = vmatprep.subr.bf16.mxu0 %v594
    %1751 = vmatpush1.bf16.msra.mxu0 %v593
    %1752 = vmatprep.subr.bf16.mxu0 %v598
    %1753 = vmatpush1.bf16.msra.mxu0 %v597
    %1754 = vmatprep.subr.bf16.mxu0 %v602
    %1755 = vmatpush1.bf16.msra.mxu0 %v601
    %1756 = vmatprep.subr.bf16.mxu0 %v606
    %1757 = vmatpush1.bf16.msra.mxu0 %v605
    %1758 = vmatprep.subr.bf16.mxu0 %v610
    %1759 = vmatpush1.bf16.msra.mxu0 %v609
    %1760 = vmatprep.subr.bf16.mxu0 %v614
    %1761 = vmatpush1.bf16.msra.mxu0 %v613
    %1762 = vmatprep.subr.bf16.mxu0 %v618
    %1763 = vmatpush1.bf16.msra.mxu0 %v617
    %1764 = vmatprep.subr.bf16.mxu0 0
    %1765 = vmatpush1.bf16.msra.mxu0 0
    %1766 = vmatprep.subr.bf16.mxu0 0
    %1767 = vmatpush1.bf16.msra.mxu0 0
    %1768 = vmatprep.subr.bf16.mxu0 0
    %1769 = vmatpush1.bf16.msra.mxu0 0
    %1770 = vmatprep.subr.bf16.mxu0 0
    %1771 = vmatpush1.bf16.msra.mxu0 0
    %1772 = vmatprep.subr.bf16.mxu0 0
    %1773 = vmatpush1.bf16.msra.mxu0 0
    %1774 = vmatprep.subr.bf16.mxu0 0
    %1775 = vmatpush1.bf16.msra.mxu0 0
    %1776 = vmatprep.subr.bf16.mxu0 0
    %1777 = vmatpush1.bf16.msra.mxu0 0
    %1778 = vmatprep.subr.bf16.mxu0 0
    %1779 = vmatpush1.bf16.msra.mxu0 0
    %1780 = vmatprep.mubr.bf16.mxu0 0
    %1781 = vmatmul.mubr.bf16.gmra.mrb[0].mxu0 %v1746
    %v1782 = vpop.f32.mrb[0].mxu0
    %v1783 = vadd.f32 0.0, %v1782
    %v1784 = vpop.f32.mrb[0].mxu0
    %v1785 = vadd.f32 0.0, %v1784
    %v1786 = vpop.f32.mrb[0].mxu0
    %v1787 = vpop.f32.mrb[0].mxu0
    %1788 = vdwg.mxu0
    %1789 = vmatprep.subr.bf16.mxu0 %v592
    %1790 = vmatpush1.bf16.msra.mxu0 %v591
    %1791 = vmatprep.subr.bf16.mxu0 %v596
    %1792 = vmatpush1.bf16.msra.mxu0 %v595
    %1793 = vmatprep.subr.bf16.mxu0 %v600
    %1794 = vmatpush1.bf16.msra.mxu0 %v599
    %1795 = vmatprep.subr.bf16.mxu0 %v604
    %1796 = vmatpush1.bf16.msra.mxu0 %v603
    %1797 = vmatprep.subr.bf16.mxu0 %v608
    %1798 = vmatpush1.bf16.msra.mxu0 %v607
    %1799 = vmatprep.subr.bf16.mxu0 %v612
    %1800 = vmatpush1.bf16.msra.mxu0 %v611
    %1801 = vmatprep.subr.bf16.mxu0 %v616
    %1802 = vmatpush1.bf16.msra.mxu0 %v615
    %1803 = vmatprep.subr.bf16.mxu0 %v620
    %1804 = vmatpush1.bf16.msra.mxu0 %v619
    %1805 = vmatprep.subr.bf16.mxu0 0
    %1806 = vmatpush1.bf16.msra.mxu0 0
    %1807 = vmatprep.subr.bf16.mxu0 0
    %1808 = vmatpush1.bf16.msra.mxu0 0
    %1809 = vmatprep.subr.bf16.mxu0 0
    %1810 = vmatpush1.bf16.msra.mxu0 0
    %1811 = vmatprep.subr.bf16.mxu0 0
    %1812 = vmatpush1.bf16.msra.mxu0 0
    %1813 = vmatprep.subr.bf16.mxu0 0
    %1814 = vmatpush1.bf16.msra.mxu0 0
    %1815 = vmatprep.subr.bf16.mxu0 0
    %1816 = vmatpush1.bf16.msra.mxu0 0
    %1817 = vmatprep.subr.bf16.mxu0 0
    %1818 = vmatpush1.bf16.msra.mxu0 0
    %1819 = vmatprep.subr.bf16.mxu0 0
    %1820 = vmatpush1.bf16.msra.mxu0 0
    %1821 = vmatprep.mubr.bf16.mxu0 0
    %1822 = vmatmul.mubr.bf16.gmra.mrb[0].mxu0 %v1746
    %v1823 = vpop.f32.mrb[0].mxu0
    %v1824 = vadd.f32 0.0, %v1823
    %v1825 = vpop.f32.mrb[0].mxu0
    %v1826 = vadd.f32 0.0, %v1825
    %v1827 = vpop.f32.mrb[0].mxu0
    %v1828 = vpop.f32.mrb[0].mxu0
    %1829 = vdwg.mxu0
    %v1834 = vrot.slane %v1783, 2
    %v1835 = vrot.slane %v1785, 2
    %v1836 = vrot.slane %v1824, 2
    %v1837 = vrot.slane %v1826, 2
    %v1842 = vadd.f32 %v442, %v1834
    %v1843 = vadd.f32 %v444, %v1835
    %v1844 = vadd.f32 %v485, %v1836
    %v1845 = vadd.f32 %v487, %v1837
    %v1846 = vxor.u32 %v1842, 2147483648
    %v1847 = vxor.u32 %v1843, 2147483648
    %v1848 = vxor.u32 %v1844, 2147483648
    %v1849 = vmul.f32 %v1846, 1.442695
    %v1850 = vpow.pop %v1849
    %v1851 = vmul.f32 %v1847, 1.442695
    %v1852 = vpow.pop %v1851
    %v1853 = vmul.f32 %v1848, 1.442695
    %v1854 = vpow.pop %v1853
    %v1855 = vadd.f32 %v1850, 1.0
    %v1856 = vadd.f32 %v1852, 1.0
    %v1857 = vadd.f32 %v1854, 1.0
    %v1858 = vrcp.pop %v1855
    %v1859 = vmul.f32 1.0, %v1858
    %v1860 = vrcp.pop %v1856
    %v1861 = vmul.f32 1.0, %v1860
    %v1862 = vrcp.pop %v1857
    %v1863 = vmul.f32 1.0, %v1862
    %v1864 = vtanh.pop %v1845
    %v1866 = vrot.slane %v1548, 6
    %v1868 = vmul.f32 %v1861, %v1866
    %v1869 = vmul.f32 %v1859, %v1864
    %v1870 = vadd.f32 %v1868, %v1869
    %v1871 = vtanh.pop %v1870
    %v1872 = vmul.f32 %v1863, %v1871
    %v1873 = vpack.c.bf16 %v1743, %v1743
    %1874 = vmatprep.subr.bf16.mxu0 %v986
    %1875 = vmatpush1.bf16.msra.mxu0 %v985
    %1876 = vmatprep.subr.bf16.mxu0 %v990
    %1877 = vmatpush1.bf16.msra.mxu0 %v989
    %1878 = vmatprep.subr.bf16.mxu0 %v994
    %1879 = vmatpush1.bf16.msra.mxu0 %v993
    %1880 = vmatprep.subr.bf16.mxu0 %v998
    %1881 = vmatpush1.bf16.msra.mxu0 %v997
    %1882 = vmatprep.subr.bf16.mxu0 %v1002
    %1883 = vmatpush1.bf16.msra.mxu0 %v1001
    %1884 = vmatprep.subr.bf16.mxu0 %v1006
    %1885 = vmatpush1.bf16.msra.mxu0 %v1005
    %1886 = vmatprep.subr.bf16.mxu0 %v1010
    %1887 = vmatpush1.bf16.msra.mxu0 %v1009
    %1888 = vmatprep.subr.bf16.mxu0 %v1014
    %1889 = vmatpush1.bf16.msra.mxu0 %v1013
    %1890 = vmatprep.subr.bf16.mxu0 0
    %1891 = vmatpush1.bf16.msra.mxu0 0
    %1892 = vmatprep.subr.bf16.mxu0 0
    %1893 = vmatpush1.bf16.msra.mxu0 0
    %1894 = vmatprep.subr.bf16.mxu0 0
    %1895 = vmatpush1.bf16.msra.mxu0 0
    %1896 = vmatprep.subr.bf16.mxu0 0
    %1897 = vmatpush1.bf16.msra.mxu0 0
    %1898 = vmatprep.subr.bf16.mxu0 0
    %1899 = vmatpush1.bf16.msra.mxu0 0
    %1900 = vmatprep.subr.bf16.mxu0 0
    %1901 = vmatpush1.bf16.msra.mxu0 0
    %1902 = vmatprep.subr.bf16.mxu0 0
    %1903 = vmatpush1.bf16.msra.mxu0 0
    %1904 = vmatprep.subr.bf16.mxu0 0
    %1905 = vmatpush1.bf16.msra.mxu0 0
    %1906 = vmatprep.mubr.bf16.mxu0 0
    %1907 = vmatmul.mubr.bf16.gmra.mrb[0].mxu0 %v1873
    %v1908 = vpop.f32.mrb[0].mxu0
    %v1909 = vadd.f32 0.0, %v1908
    %v1910 = vpop.f32.mrb[0].mxu0
    %v1911 = vadd.f32 0.0, %v1910
    %v1912 = vpop.f32.mrb[0].mxu0
    %v1913 = vpop.f32.mrb[0].mxu0
    %1914 = vdwg.mxu0
    %1915 = vmatprep.subr.bf16.mxu0 %v988
    %1916 = vmatpush1.bf16.msra.mxu0 %v987
    %1917 = vmatprep.subr.bf16.mxu0 %v992
    %1918 = vmatpush1.bf16.msra.mxu0 %v991
    %1919 = vmatprep.subr.bf16.mxu0 %v996
    %1920 = vmatpush1.bf16.msra.mxu0 %v995
    %1921 = vmatprep.subr.bf16.mxu0 %v1000
    %1922 = vmatpush1.bf16.msra.mxu0 %v999
    %1923 = vmatprep.subr.bf16.mxu0 %v1004
    %1924 = vmatpush1.bf16.msra.mxu0 %v1003
    %1925 = vmatprep.subr.bf16.mxu0 %v1008
    %1926 = vmatpush1.bf16.msra.mxu0 %v1007
    %1927 = vmatprep.subr.bf16.mxu0 %v1012
    %1928 = vmatpush1.bf16.msra.mxu0 %v1011
    %1929 = vmatprep.subr.bf16.mxu0 %v1016
    %1930 = vmatpush1.bf16.msra.mxu0 %v1015
    %1931 = vmatprep.subr.bf16.mxu0 0
    %1932 = vmatpush1.bf16.msra.mxu0 0
    %1933 = vmatprep.subr.bf16.mxu0 0
    %1934 = vmatpush1.bf16.msra.mxu0 0
    %1935 = vmatprep.subr.bf16.mxu0 0
    %1936 = vmatpush1.bf16.msra.mxu0 0
    %1937 = vmatprep.subr.bf16.mxu0 0
    %1938 = vmatpush1.bf16.msra.mxu0 0
    %1939 = vmatprep.subr.bf16.mxu0 0
    %1940 = vmatpush1.bf16.msra.mxu0 0
    %1941 = vmatprep.subr.bf16.mxu0 0
    %1942 = vmatpush1.bf16.msra.mxu0 0
    %1943 = vmatprep.subr.bf16.mxu0 0
    %1944 = vmatpush1.bf16.msra.mxu0 0
    %1945 = vmatprep.subr.bf16.mxu0 0
    %1946 = vmatpush1.bf16.msra.mxu0 0
    %1947 = vmatprep.mubr.bf16.mxu0 0
    %1948 = vmatmul.mubr.bf16.gmra.mrb[0].mxu0 %v1873
    %v1949 = vpop.f32.mrb[0].mxu0
    %v1950 = vadd.f32 0.0, %v1949
    %v1951 = vpop.f32.mrb[0].mxu0
    %v1952 = vadd.f32 0.0, %v1951
    %v1953 = vpop.f32.mrb[0].mxu0
    %v1954 = vpop.f32.mrb[0].mxu0
    %1955 = vdwg.mxu0
    %1956 = vmatprep.subr.bf16.mxu0 %v1228
    %1957 = vmatpush1.bf16.msra.mxu0 %v1227
    %1958 = vmatprep.subr.bf16.mxu0 %v1232
    %1959 = vmatpush1.bf16.msra.mxu0 %v1231
    %1960 = vmatprep.subr.bf16.mxu0 %v1236
    %1961 = vmatpush1.bf16.msra.mxu0 %v1235
    %1962 = vmatprep.subr.bf16.mxu0 %v1240
    %1963 = vmatpush1.bf16.msra.mxu0 %v1239
    %1964 = vmatprep.subr.bf16.mxu0 %v1244
    %1965 = vmatpush1.bf16.msra.mxu0 %v1243
    %1966 = vmatprep.subr.bf16.mxu0 %v1248
    %1967 = vmatpush1.bf16.msra.mxu0 %v1247
    %1968 = vmatprep.subr.bf16.mxu0 %v1252
    %1969 = vmatpush1.bf16.msra.mxu0 %v1251
    %1970 = vmatprep.subr.bf16.mxu0 %v1256
    %1971 = vmatpush1.bf16.msra.mxu0 %v1255
    %1972 = vmatprep.subr.bf16.mxu0 0
    %1973 = vmatpush1.bf16.msra.mxu0 0
    %1974 = vmatprep.subr.bf16.mxu0 0
    %1975 = vmatpush1.bf16.msra.mxu0 0
    %1976 = vmatprep.subr.bf16.mxu0 0
    %1977 = vmatpush1.bf16.msra.mxu0 0
    %1978 = vmatprep.subr.bf16.mxu0 0
    %1979 = vmatpush1.bf16.msra.mxu0 0
    %1980 = vmatprep.subr.bf16.mxu0 0
    %1981 = vmatpush1.bf16.msra.mxu0 0
    %1982 = vmatprep.subr.bf16.mxu0 0
    %1983 = vmatpush1.bf16.msra.mxu0 0
    %1984 = vmatprep.subr.bf16.mxu0 0
    %1985 = vmatpush1.bf16.msra.mxu0 0
    %1986 = vmatprep.subr.bf16.mxu0 0
    %1987 = vmatpush1.bf16.msra.mxu0 0
    %1988 = vmatprep.mubr.bf16.mxu0 0
    %1989 = vmatmul.mubr.bf16.gmra.mrb[0].mxu0 %v1746
    %v1990 = vpop.f32.mrb[0].mxu0
    %v1991 = vadd.f32 %v1909, %v1990
    %v1992 = vpop.f32.mrb[0].mxu0
    %v1993 = vadd.f32 %v1911, %v1992
    %v1994 = vpop.f32.mrb[0].mxu0
    %v1995 = vpop.f32.mrb[0].mxu0
    %1996 = vdwg.mxu0
    %1997 = vmatprep.subr.bf16.mxu0 %v1230
    %1998 = vmatpush1.bf16.msra.mxu0 %v1229
    %1999 = vmatprep.subr.bf16.mxu0 %v1234
    %2000 = vmatpush1.bf16.msra.mxu0 %v1233
    %2001 = vmatprep.subr.bf16.mxu0 %v1238
    %2002 = vmatpush1.bf16.msra.mxu0 %v1237
    %2003 = vmatprep.subr.bf16.mxu0 %v1242
    %2004 = vmatpush1.bf16.msra.mxu0 %v1241
    %2005 = vmatprep.subr.bf16.mxu0 %v1246
    %2006 = vmatpush1.bf16.msra.mxu0 %v1245
    %2007 = vmatprep.subr.bf16.mxu0 %v1250
    %2008 = vmatpush1.bf16.msra.mxu0 %v1249
    %2009 = vmatprep.subr.bf16.mxu0 %v1254
    %2010 = vmatpush1.bf16.msra.mxu0 %v1253
    %2011 = vmatprep.subr.bf16.mxu0 %v1258
    %2012 = vmatpush1.bf16.msra.mxu0 %v1257
    %2013 = vmatprep.subr.bf16.mxu0 0
    %2014 = vmatpush1.bf16.msra.mxu0 0
    %2015 = vmatprep.subr.bf16.mxu0 0
    %2016 = vmatpush1.bf16.msra.mxu0 0
    %2017 = vmatprep.subr.bf16.mxu0 0
    %2018 = vmatpush1.bf16.msra.mxu0 0
    %2019 = vmatprep.subr.bf16.mxu0 0
    %2020 = vmatpush1.bf16.msra.mxu0 0
    %2021 = vmatprep.subr.bf16.mxu0 0
    %2022 = vmatpush1.bf16.msra.mxu0 0
    %2023 = vmatprep.subr.bf16.mxu0 0
    %2024 = vmatpush1.bf16.msra.mxu0 0
    %2025 = vmatprep.subr.bf16.mxu0 0
    %2026 = vmatpush1.bf16.msra.mxu0 0
    %2027 = vmatprep.subr.bf16.mxu0 0
    %2028 = vmatpush1.bf16.msra.mxu0 0
    %2029 = vmatprep.mubr.bf16.mxu0 0
    %2030 = vmatmul.mubr.bf16.gmra.mrb[0].mxu0 %v1746
    %v2031 = vpop.f32.mrb[0].mxu0
    %v2032 = vadd.f32 %v1950, %v2031
    %v2033 = vpop.f32.mrb[0].mxu0
    %v2034 = vadd.f32 %v1952, %v2033
    %v2035 = vpop.f32.mrb[0].mxu0
    %v2036 = vpop.f32.mrb[0].mxu0
    %2037 = vdwg.mxu0
    %v2038 = vadd.f32 %v1991, %v1377
    %v2039 = vadd.f32 %v1993, %v1381
    %v2040 = vadd.f32 %v2032, %v1385
    %v2041 = vadd.f32 %v2034, %v1389
    %v2042 = vxor.u32 %v2038, 2147483648
    %v2043 = vxor.u32 %v2039, 2147483648
    %v2044 = vxor.u32 %v2040, 2147483648
    %v2045 = vmul.f32 %v2042, 1.442695
    %v2046 = vpow.pop %v2045
    %v2047 = vmul.f32 %v2043, 1.442695
    %v2048 = vpow.pop %v2047
    %v2049 = vmul.f32 %v2044, 1.442695
    %v2050 = vpow.pop %v2049
    %v2051 = vadd.f32 %v2046, 1.0
    %v2052 = vadd.f32 %v2048, 1.0
    %v2053 = vadd.f32 %v2050, 1.0
    %v2054 = vrcp.pop %v2051
    %v2055 = vmul.f32 1.0, %v2054
    %v2056 = vrcp.pop %v2052
    %v2057 = vmul.f32 1.0, %v2056
    %v2058 = vrcp.pop %v2053
    %v2059 = vmul.f32 1.0, %v2058
    %v2060 = vtanh.pop %v2041
    %v2061 = vmul.f32 %v2057, %v1741
    %v2062 = vmul.f32 %v2055, %v2060
    %v2063 = vadd.f32 %v2061, %v2062
    %v2064 = vtanh.pop %v2063
    %v2065 = vmul.f32 %v2059, %v2064
    %v2066 = vpack.c.bf16 %v1872, %v1872
    %v2068 = vrot.slane %v2066, 3
    %2070 = vmatprep.subr.bf16.mxu0 %v590
    %2071 = vmatpush1.bf16.msra.mxu0 %v589
    %2072 = vmatprep.subr.bf16.mxu0 %v594
    %2073 = vmatpush1.bf16.msra.mxu0 %v593
    %2074 = vmatprep.subr.bf16.mxu0 %v598
    %2075 = vmatpush1.bf16.msra.mxu0 %v597
    %2076 = vmatprep.subr.bf16.mxu0 %v602
    %2077 = vmatpush1.bf16.msra.mxu0 %v601
    %2078 = vmatprep.subr.bf16.mxu0 %v606
    %2079 = vmatpush1.bf16.msra.mxu0 %v605
    %2080 = vmatprep.subr.bf16.mxu0 %v610
    %2081 = vmatpush1.bf16.msra.mxu0 %v609
    %2082 = vmatprep.subr.bf16.mxu0 %v614
    %2083 = vmatpush1.bf16.msra.mxu0 %v613
    %2084 = vmatprep.subr.bf16.mxu0 %v618
    %2085 = vmatpush1.bf16.msra.mxu0 %v617
    %2086 = vmatprep.subr.bf16.mxu0 0
    %2087 = vmatpush1.bf16.msra.mxu0 0
    %2088 = vmatprep.subr.bf16.mxu0 0
    %2089 = vmatpush1.bf16.msra.mxu0 0
    %2090 = vmatprep.subr.bf16.mxu0 0
    %2091 = vmatpush1.bf16.msra.mxu0 0
    %2092 = vmatprep.subr.bf16.mxu0 0
    %2093 = vmatpush1.bf16.msra.mxu0 0
    %2094 = vmatprep.subr.bf16.mxu0 0
    %2095 = vmatpush1.bf16.msra.mxu0 0
    %2096 = vmatprep.subr.bf16.mxu0 0
    %2097 = vmatpush1.bf16.msra.mxu0 0
    %2098 = vmatprep.subr.bf16.mxu0 0
    %2099 = vmatpush1.bf16.msra.mxu0 0
    %2100 = vmatprep.subr.bf16.mxu0 0
    %2101 = vmatpush1.bf16.msra.mxu0 0
    %2102 = vmatprep.mubr.bf16.mxu0 0
    %2103 = vmatmul.mubr.bf16.gmra.mrb[0].mxu0 %v2068
    %v2104 = vpop.f32.mrb[0].mxu0
    %v2105 = vadd.f32 0.0, %v2104
    %v2106 = vpop.f32.mrb[0].mxu0
    %v2107 = vadd.f32 0.0, %v2106
    %v2108 = vpop.f32.mrb[0].mxu0
    %v2109 = vpop.f32.mrb[0].mxu0
    %2110 = vdwg.mxu0
    %2111 = vmatprep.subr.bf16.mxu0 %v592
    %2112 = vmatpush1.bf16.msra.mxu0 %v591
    %2113 = vmatprep.subr.bf16.mxu0 %v596
    %2114 = vmatpush1.bf16.msra.mxu0 %v595
    %2115 = vmatprep.subr.bf16.mxu0 %v600
    %2116 = vmatpush1.bf16.msra.mxu0 %v599
    %2117 = vmatprep.subr.bf16.mxu0 %v604
    %2118 = vmatpush1.bf16.msra.mxu0 %v603
    %2119 = vmatprep.subr.bf16.mxu0 %v608
    %2120 = vmatpush1.bf16.msra.mxu0 %v607
    %2121 = vmatprep.subr.bf16.mxu0 %v612
    %2122 = vmatpush1.bf16.msra.mxu0 %v611
    %2123 = vmatprep.subr.bf16.mxu0 %v616
    %2124 = vmatpush1.bf16.msra.mxu0 %v615
    %2125 = vmatprep.subr.bf16.mxu0 %v620
    %2126 = vmatpush1.bf16.msra.mxu0 %v619
    %2127 = vmatprep.subr.bf16.mxu0 0
    %2128 = vmatpush1.bf16.msra.mxu0 0
    %2129 = vmatprep.subr.bf16.mxu0 0
    %2130 = vmatpush1.bf16.msra.mxu0 0
    %2131 = vmatprep.subr.bf16.mxu0 0
    %2132 = vmatpush1.bf16.msra.mxu0 0
    %2133 = vmatprep.subr.bf16.mxu0 0
    %2134 = vmatpush1.bf16.msra.mxu0 0
    %2135 = vmatprep.subr.bf16.mxu0 0
    %2136 = vmatpush1.bf16.msra.mxu0 0
    %2137 = vmatprep.subr.bf16.mxu0 0
    %2138 = vmatpush1.bf16.msra.mxu0 0
    %2139 = vmatprep.subr.bf16.mxu0 0
    %2140 = vmatpush1.bf16.msra.mxu0 0
    %2141 = vmatprep.subr.bf16.mxu0 0
    %2142 = vmatpush1.bf16.msra.mxu0 0
    %2143 = vmatprep.mubr.bf16.mxu0 0
    %2144 = vmatmul.mubr.bf16.gmra.mrb[0].mxu0 %v2068
    %v2145 = vpop.f32.mrb[0].mxu0
    %v2146 = vadd.f32 0.0, %v2145
    %v2147 = vpop.f32.mrb[0].mxu0
    %v2148 = vadd.f32 0.0, %v2147
    %v2149 = vpop.f32.mrb[0].mxu0
    %v2150 = vpop.f32.mrb[0].mxu0
    %2151 = vdwg.mxu0
    %v2152 = vadd.f32 %v446, %v2105
    %v2153 = vadd.f32 %v448, %v2107
    %v2154 = vadd.f32 %v489, %v2146
    %v2155 = vadd.f32 %v491, %v2148
    %v2156 = vxor.u32 %v2152, 2147483648
    %v2157 = vxor.u32 %v2153, 2147483648
    %v2158 = vxor.u32 %v2154, 2147483648
    %v2159 = vmul.f32 %v2156, 1.442695
    %v2160 = vpow.pop %v2159
    %v2161 = vmul.f32 %v2157, 1.442695
    %v2162 = vpow.pop %v2161
    %v2163 = vmul.f32 %v2158, 1.442695
    %v2164 = vpow.pop %v2163
    %v2165 = vadd.f32 %v2160, 1.0
    %v2166 = vadd.f32 %v2162, 1.0
    %v2167 = vadd.f32 %v2164, 1.0
    %v2168 = vrcp.pop %v2165
    %v2169 = vmul.f32 1.0, %v2168
    %v2170 = vrcp.pop %v2166
    %v2171 = vmul.f32 1.0, %v2170
    %v2172 = vrcp.pop %v2167
    %v2173 = vmul.f32 1.0, %v2172
    %v2174 = vtanh.pop %v2155
    %v2176 = vrot.slane %v1870, 6
    %v2178 = vmul.f32 %v2171, %v2176
    %v2179 = vmul.f32 %v2169, %v2174
    %v2180 = vadd.f32 %v2178, %v2179
    %v2181 = vtanh.pop %v2180
    %v2182 = vmul.f32 %v2173, %v2181
    %v2183 = vpack.c.bf16 %v2065, %v2065
    %2184 = vmatprep.subr.bf16.mxu0 %v986
    %2185 = vmatpush1.bf16.msra.mxu0 %v985
    %2186 = vmatprep.subr.bf16.mxu0 %v990
    %2187 = vmatpush1.bf16.msra.mxu0 %v989
    %2188 = vmatprep.subr.bf16.mxu0 %v994
    %2189 = vmatpush1.bf16.msra.mxu0 %v993
    %2190 = vmatprep.subr.bf16.mxu0 %v998
    %2191 = vmatpush1.bf16.msra.mxu0 %v997
    %2192 = vmatprep.subr.bf16.mxu0 %v1002
    %2193 = vmatpush1.bf16.msra.mxu0 %v1001
    %2194 = vmatprep.subr.bf16.mxu0 %v1006
    %2195 = vmatpush1.bf16.msra.mxu0 %v1005
    %2196 = vmatprep.subr.bf16.mxu0 %v1010
    %2197 = vmatpush1.bf16.msra.mxu0 %v1009
    %2198 = vmatprep.subr.bf16.mxu0 %v1014
    %2199 = vmatpush1.bf16.msra.mxu0 %v1013
    %2200 = vmatprep.subr.bf16.mxu0 0
    %2201 = vmatpush1.bf16.msra.mxu0 0
    %2202 = vmatprep.subr.bf16.mxu0 0
    %2203 = vmatpush1.bf16.msra.mxu0 0
    %2204 = vmatprep.subr.bf16.mxu0 0
    %2205 = vmatpush1.bf16.msra.mxu0 0
    %2206 = vmatprep.subr.bf16.mxu0 0
    %2207 = vmatpush1.bf16.msra.mxu0 0
    %2208 = vmatprep.subr.bf16.mxu0 0
    %2209 = vmatpush1.bf16.msra.mxu0 0
    %2210 = vmatprep.subr.bf16.mxu0 0
    %2211 = vmatpush1.bf16.msra.mxu0 0
    %2212 = vmatprep.subr.bf16.mxu0 0
    %2213 = vmatpush1.bf16.msra.mxu0 0
    %2214 = vmatprep.subr.bf16.mxu0 0
    %2215 = vmatpush1.bf16.msra.mxu0 0
    %2216 = vmatprep.mubr.bf16.mxu0 0
    %2217 = vmatmul.mubr.bf16.gmra.mrb[0].mxu0 %v2183
    %v2218 = vpop.f32.mrb[0].mxu0
    %v2219 = vadd.f32 0.0, %v2218
    %v2220 = vpop.f32.mrb[0].mxu0
    %v2221 = vadd.f32 0.0, %v2220
    %v2222 = vpop.f32.mrb[0].mxu0
    %v2223 = vpop.f32.mrb[0].mxu0
    %2224 = vdwg.mxu0
    %2225 = vmatprep.subr.bf16.mxu0 %v988
    %2226 = vmatpush1.bf16.msra.mxu0 %v987
    %2227 = vmatprep.subr.bf16.mxu0 %v992
    %2228 = vmatpush1.bf16.msra.mxu0 %v991
    %2229 = vmatprep.subr.bf16.mxu0 %v996
    %2230 = vmatpush1.bf16.msra.mxu0 %v995
    %2231 = vmatprep.subr.bf16.mxu0 %v1000
    %2232 = vmatpush1.bf16.msra.mxu0 %v999
    %2233 = vmatprep.subr.bf16.mxu0 %v1004
    %2234 = vmatpush1.bf16.msra.mxu0 %v1003
    %2235 = vmatprep.subr.bf16.mxu0 %v1008
    %2236 = vmatpush1.bf16.msra.mxu0 %v1007
    %2237 = vmatprep.subr.bf16.mxu0 %v1012
    %2238 = vmatpush1.bf16.msra.mxu0 %v1011
    %2239 = vmatprep.subr.bf16.mxu0 %v1016
    %2240 = vmatpush1.bf16.msra.mxu0 %v1015
    %2241 = vmatprep.subr.bf16.mxu0 0
    %2242 = vmatpush1.bf16.msra.mxu0 0
    %2243 = vmatprep.subr.bf16.mxu0 0
    %2244 = vmatpush1.bf16.msra.mxu0 0
    %2245 = vmatprep.subr.bf16.mxu0 0
    %2246 = vmatpush1.bf16.msra.mxu0 0
    %2247 = vmatprep.subr.bf16.mxu0 0
    %2248 = vmatpush1.bf16.msra.mxu0 0
    %2249 = vmatprep.subr.bf16.mxu0 0
    %2250 = vmatpush1.bf16.msra.mxu0 0
    %2251 = vmatprep.subr.bf16.mxu0 0
    %2252 = vmatpush1.bf16.msra.mxu0 0
    %2253 = vmatprep.subr.bf16.mxu0 0
    %2254 = vmatpush1.bf16.msra.mxu0 0
    %2255 = vmatprep.subr.bf16.mxu0 0
    %2256 = vmatpush1.bf16.msra.mxu0 0
    %2257 = vmatprep.mubr.bf16.mxu0 0
    %2258 = vmatmul.mubr.bf16.gmra.mrb[0].mxu0 %v2183
    %v2259 = vpop.f32.mrb[0].mxu0
    %v2260 = vadd.f32 0.0, %v2259
    %v2261 = vpop.f32.mrb[0].mxu0
    %v2262 = vadd.f32 0.0, %v2261
    %v2263 = vpop.f32.mrb[0].mxu0
    %v2264 = vpop.f32.mrb[0].mxu0
    %2265 = vdwg.mxu0
    %2266 = vmatprep.subr.bf16.mxu0 %v1228
    %2267 = vmatpush1.bf16.msra.mxu0 %v1227
    %2268 = vmatprep.subr.bf16.mxu0 %v1232
    %2269 = vmatpush1.bf16.msra.mxu0 %v1231
    %2270 = vmatprep.subr.bf16.mxu0 %v1236
    %2271 = vmatpush1.bf16.msra.mxu0 %v1235
    %2272 = vmatprep.subr.bf16.mxu0 %v1240
    %2273 = vmatpush1.bf16.msra.mxu0 %v1239
    %2274 = vmatprep.subr.bf16.mxu0 %v1244
    %2275 = vmatpush1.bf16.msra.mxu0 %v1243
    %2276 = vmatprep.subr.bf16.mxu0 %v1248
    %2277 = vmatpush1.bf16.msra.mxu0 %v1247
    %2278 = vmatprep.subr.bf16.mxu0 %v1252
    %2279 = vmatpush1.bf16.msra.mxu0 %v1251
    %2280 = vmatprep.subr.bf16.mxu0 %v1256
    %2281 = vmatpush1.bf16.msra.mxu0 %v1255
    %2282 = vmatprep.subr.bf16.mxu0 0
    %2283 = vmatpush1.bf16.msra.mxu0 0
    %2284 = vmatprep.subr.bf16.mxu0 0
    %2285 = vmatpush1.bf16.msra.mxu0 0
    %2286 = vmatprep.subr.bf16.mxu0 0
    %2287 = vmatpush1.bf16.msra.mxu0 0
    %2288 = vmatprep.subr.bf16.mxu0 0
    %2289 = vmatpush1.bf16.msra.mxu0 0
    %2290 = vmatprep.subr.bf16.mxu0 0
    %2291 = vmatpush1.bf16.msra.mxu0 0
    %2292 = vmatprep.subr.bf16.mxu0 0
    %2293 = vmatpush1.bf16.msra.mxu0 0
    %2294 = vmatprep.subr.bf16.mxu0 0
    %2295 = vmatpush1.bf16.msra.mxu0 0
    %2296 = vmatprep.subr.bf16.mxu0 0
    %2297 = vmatpush1.bf16.msra.mxu0 0
    %2298 = vmatprep.mubr.bf16.mxu0 0
    %2299 = vmatmul.mubr.bf16.gmra.mrb[0].mxu0 %v2068
    %v2300 = vpop.f32.mrb[0].mxu0
    %v2301 = vadd.f32 %v2219, %v2300
    %v2302 = vpop.f32.mrb[0].mxu0
    %v2303 = vadd.f32 %v2221, %v2302
    %v2304 = vpop.f32.mrb[0].mxu0
    %v2305 = vpop.f32.mrb[0].mxu0
    %2306 = vdwg.mxu0
    %2307 = vmatprep.subr.bf16.mxu0 %v1230
    %2308 = vmatpush1.bf16.msra.mxu0 %v1229
    %2309 = vmatprep.subr.bf16.mxu0 %v1234
    %2310 = vmatpush1.bf16.msra.mxu0 %v1233
    %2311 = vmatprep.subr.bf16.mxu0 %v1238
    %2312 = vmatpush1.bf16.msra.mxu0 %v1237
    %2313 = vmatprep.subr.bf16.mxu0 %v1242
    %2314 = vmatpush1.bf16.msra.mxu0 %v1241
    %2315 = vmatprep.subr.bf16.mxu0 %v1246
    %2316 = vmatpush1.bf16.msra.mxu0 %v1245
    %2317 = vmatprep.subr.bf16.mxu0 %v1250
    %2318 = vmatpush1.bf16.msra.mxu0 %v1249
    %2319 = vmatprep.subr.bf16.mxu0 %v1254
    %2320 = vmatpush1.bf16.msra.mxu0 %v1253
    %2321 = vmatprep.subr.bf16.mxu0 %v1258
    %2322 = vmatpush1.bf16.msra.mxu0 %v1257
    %2323 = vmatprep.subr.bf16.mxu0 0
    %2324 = vmatpush1.bf16.msra.mxu0 0
    %2325 = vmatprep.subr.bf16.mxu0 0
    %2326 = vmatpush1.bf16.msra.mxu0 0
    %2327 = vmatprep.subr.bf16.mxu0 0
    %2328 = vmatpush1.bf16.msra.mxu0 0
    %2329 = vmatprep.subr.bf16.mxu0 0
    %2330 = vmatpush1.bf16.msra.mxu0 0
    %2331 = vmatprep.subr.bf16.mxu0 0
    %2332 = vmatpush1.bf16.msra.mxu0 0
    %2333 = vmatprep.subr.bf16.mxu0 0
    %2334 = vmatpush1.bf16.msra.mxu0 0
    %2335 = vmatprep.subr.bf16.mxu0 0
    %2336 = vmatpush1.bf16.msra.mxu0 0
    %2337 = vmatprep.subr.bf16.mxu0 0
    %2338 = vmatpush1.bf16.msra.mxu0 0
    %2339 = vmatprep.mubr.bf16.mxu0 0
    %2340 = vmatmul.mubr.bf16.gmra.mrb[0].mxu0 %v2068
    %v2341 = vpop.f32.mrb[0].mxu0
    %v2342 = vadd.f32 %v2260, %v2341
    %v2343 = vpop.f32.mrb[0].mxu0
    %v2344 = vadd.f32 %v2262, %v2343
    %v2345 = vpop.f32.mrb[0].mxu0
    %v2346 = vpop.f32.mrb[0].mxu0
    %2347 = vdwg.mxu0
    %v2348 = vadd.f32 %v2301, %v1377
    %v2349 = vadd.f32 %v2303, %v1381
    %v2350 = vadd.f32 %v2342, %v1385
    %v2351 = vadd.f32 %v2344, %v1389
    %v2352 = vxor.u32 %v2348, 2147483648
    %v2353 = vxor.u32 %v2349, 2147483648
    %v2354 = vxor.u32 %v2350, 2147483648
    %v2355 = vmul.f32 %v2352, 1.442695
    %v2356 = vpow.pop %v2355
    %v2357 = vmul.f32 %v2353, 1.442695
    %v2358 = vpow.pop %v2357
    %v2359 = vmul.f32 %v2354, 1.442695
    %v2360 = vpow.pop %v2359
    %v2361 = vadd.f32 %v2356, 1.0
    %v2362 = vadd.f32 %v2358, 1.0
    %v2363 = vadd.f32 %v2360, 1.0
    %v2364 = vrcp.pop %v2361
    %v2365 = vmul.f32 1.0, %v2364
    %v2366 = vrcp.pop %v2362
    %v2367 = vmul.f32 1.0, %v2366
    %v2368 = vrcp.pop %v2363
    %v2369 = vmul.f32 1.0, %v2368
    %v2370 = vtanh.pop %v2351
    %v2371 = vmul.f32 %v2367, %v2063
    %v2372 = vmul.f32 %v2365, %v2370
    %v2373 = vadd.f32 %v2371, %v2372
    %v2374 = vtanh.pop %v2373
    %v2375 = vmul.f32 %v2369, %v2374
    %v2376 = vpack.c.bf16 %v2182, %v2182
    %2377 = vmatprep.subr.bf16.mxu0 %v590
    %2378 = vmatpush1.bf16.msra.mxu0 %v589
    %2379 = vmatprep.subr.bf16.mxu0 %v594
    %2380 = vmatpush1.bf16.msra.mxu0 %v593
    %2381 = vmatprep.subr.bf16.mxu0 %v598
    %2382 = vmatpush1.bf16.msra.mxu0 %v597
    %2383 = vmatprep.subr.bf16.mxu0 %v602
    %2384 = vmatpush1.bf16.msra.mxu0 %v601
    %2385 = vmatprep.subr.bf16.mxu0 %v606
    %2386 = vmatpush1.bf16.msra.mxu0 %v605
    %2387 = vmatprep.subr.bf16.mxu0 %v610
    %2388 = vmatpush1.bf16.msra.mxu0 %v609
    %2389 = vmatprep.subr.bf16.mxu0 %v614
    %2390 = vmatpush1.bf16.msra.mxu0 %v613
    %2391 = vmatprep.subr.bf16.mxu0 %v618
    %2392 = vmatpush1.bf16.msra.mxu0 %v617
    %2393 = vmatprep.subr.bf16.mxu0 0
    %2394 = vmatpush1.bf16.msra.mxu0 0
    %2395 = vmatprep.subr.bf16.mxu0 0
    %2396 = vmatpush1.bf16.msra.mxu0 0
    %2397 = vmatprep.subr.bf16.mxu0 0
    %2398 = vmatpush1.bf16.msra.mxu0 0
    %2399 = vmatprep.subr.bf16.mxu0 0
    %2400 = vmatpush1.bf16.msra.mxu0 0
    %2401 = vmatprep.subr.bf16.mxu0 0
    %2402 = vmatpush1.bf16.msra.mxu0 0
    %2403 = vmatprep.subr.bf16.mxu0 0
    %2404 = vmatpush1.bf16.msra.mxu0 0
    %2405 = vmatprep.subr.bf16.mxu0 0
    %2406 = vmatpush1.bf16.msra.mxu0 0
    %2407 = vmatprep.subr.bf16.mxu0 0
    %2408 = vmatpush1.bf16.msra.mxu0 0
    %2409 = vmatprep.mubr.bf16.mxu0 0
    %2410 = vmatmul.mubr.bf16.gmra.mrb[0].mxu0 %v2376
    %v2411 = vpop.f32.mrb[0].mxu0
    %v2412 = vadd.f32 0.0, %v2411
    %v2413 = vpop.f32.mrb[0].mxu0
    %v2414 = vadd.f32 0.0, %v2413
    %v2415 = vpop.f32.mrb[0].mxu0
    %v2416 = vpop.f32.mrb[0].mxu0
    %2417 = vdwg.mxu0
    %2418 = vmatprep.subr.bf16.mxu0 %v592
    %2419 = vmatpush1.bf16.msra.mxu0 %v591
    %2420 = vmatprep.subr.bf16.mxu0 %v596
    %2421 = vmatpush1.bf16.msra.mxu0 %v595
    %2422 = vmatprep.subr.bf16.mxu0 %v600
    %2423 = vmatpush1.bf16.msra.mxu0 %v599
    %2424 = vmatprep.subr.bf16.mxu0 %v604
    %2425 = vmatpush1.bf16.msra.mxu0 %v603
    %2426 = vmatprep.subr.bf16.mxu0 %v608
    %2427 = vmatpush1.bf16.msra.mxu0 %v607
    %2428 = vmatprep.subr.bf16.mxu0 %v612
    %2429 = vmatpush1.bf16.msra.mxu0 %v611
    %2430 = vmatprep.subr.bf16.mxu0 %v616
    %2431 = vmatpush1.bf16.msra.mxu0 %v615
    %2432 = vmatprep.subr.bf16.mxu0 %v620
    %2433 = vmatpush1.bf16.msra.mxu0 %v619
    %2434 = vmatprep.subr.bf16.mxu0 0
    %2435 = vmatpush1.bf16.msra.mxu0 0
    %2436 = vmatprep.subr.bf16.mxu0 0
    %2437 = vmatpush1.bf16.msra.mxu0 0
    %2438 = vmatprep.subr.bf16.mxu0 0
    %2439 = vmatpush1.bf16.msra.mxu0 0
    %2440 = vmatprep.subr.bf16.mxu0 0
    %2441 = vmatpush1.bf16.msra.mxu0 0
    %2442 = vmatprep.subr.bf16.mxu0 0
    %2443 = vmatpush1.bf16.msra.mxu0 0
    %2444 = vmatprep.subr.bf16.mxu0 0
    %2445 = vmatpush1.bf16.msra.mxu0 0
    %2446 = vmatprep.subr.bf16.mxu0 0
    %2447 = vmatpush1.bf16.msra.mxu0 0
    %2448 = vmatprep.subr.bf16.mxu0 0
    %2449 = vmatpush1.bf16.msra.mxu0 0
    %2450 = vmatprep.mubr.bf16.mxu0 0
    %2451 = vmatmul.mubr.bf16.gmra.mrb[0].mxu0 %v2376
    %v2452 = vpop.f32.mrb[0].mxu0
    %v2453 = vadd.f32 0.0, %v2452
    %v2454 = vpop.f32.mrb[0].mxu0
    %v2455 = vadd.f32 0.0, %v2454
    %v2456 = vpop.f32.mrb[0].mxu0
    %v2457 = vpop.f32.mrb[0].mxu0
    %2458 = vdwg.mxu0
    %v2463 = vrot.slane %v2412, 6
    %v2464 = vrot.slane %v2414, 6
    %v2465 = vrot.slane %v2453, 6
    %v2466 = vrot.slane %v2455, 6
    %v2471 = vadd.f32 %v446, %v2463
    %v2472 = vadd.f32 %v448, %v2464
    %v2473 = vadd.f32 %v489, %v2465
    %v2474 = vadd.f32 %v491, %v2466
    %v2475 = vxor.u32 %v2471, 2147483648
    %v2476 = vxor.u32 %v2472, 2147483648
    %v2477 = vxor.u32 %v2473, 2147483648
    %v2478 = vmul.f32 %v2475, 1.442695
    %v2479 = vpow.pop %v2478
    %v2480 = vmul.f32 %v2476, 1.442695
    %v2481 = vpow.pop %v2480
    %v2482 = vmul.f32 %v2477, 1.442695
    %v2483 = vpow.pop %v2482
    %v2484 = vadd.f32 %v2479, 1.0
    %v2485 = vadd.f32 %v2481, 1.0
    %v2486 = vadd.f32 %v2483, 1.0
    %v2487 = vrcp.pop %v2484
    %v2488 = vmul.f32 1.0, %v2487
    %v2489 = vrcp.pop %v2485
    %v2490 = vmul.f32 1.0, %v2489
    %v2491 = vrcp.pop %v2486
    %v2492 = vmul.f32 1.0, %v2491
    %v2493 = vtanh.pop %v2474
    %v2495 = vrot.slane %v2180, 6
    %v2497 = vmul.f32 %v2490, %v2495
    %v2498 = vmul.f32 %v2488, %v2493
    %v2499 = vadd.f32 %v2497, %v2498
    %v2500 = vtanh.pop %v2499
    %v2501 = vmul.f32 %v2492, %v2500
    %v2502 = vpack.c.bf16 %v2375, %v2375
    %2503 = vmatprep.subr.bf16.mxu0 %v986
    %2504 = vmatpush1.bf16.msra.mxu0 %v985
    %2505 = vmatprep.subr.bf16.mxu0 %v990
    %2506 = vmatpush1.bf16.msra.mxu0 %v989
    %2507 = vmatprep.subr.bf16.mxu0 %v994
    %2508 = vmatpush1.bf16.msra.mxu0 %v993
    %2509 = vmatprep.subr.bf16.mxu0 %v998
    %2510 = vmatpush1.bf16.msra.mxu0 %v997
    %2511 = vmatprep.subr.bf16.mxu0 %v1002
    %2512 = vmatpush1.bf16.msra.mxu0 %v1001
    %2513 = vmatprep.subr.bf16.mxu0 %v1006
    %2514 = vmatpush1.bf16.msra.mxu0 %v1005
    %2515 = vmatprep.subr.bf16.mxu0 %v1010
    %2516 = vmatpush1.bf16.msra.mxu0 %v1009
    %2517 = vmatprep.subr.bf16.mxu0 %v1014
    %2518 = vmatpush1.bf16.msra.mxu0 %v1013
    %2519 = vmatprep.subr.bf16.mxu0 0
    %2520 = vmatpush1.bf16.msra.mxu0 0
    %2521 = vmatprep.subr.bf16.mxu0 0
    %2522 = vmatpush1.bf16.msra.mxu0 0
    %2523 = vmatprep.subr.bf16.mxu0 0
    %2524 = vmatpush1.bf16.msra.mxu0 0
    %2525 = vmatprep.subr.bf16.mxu0 0
    %2526 = vmatpush1.bf16.msra.mxu0 0
    %2527 = vmatprep.subr.bf16.mxu0 0
    %2528 = vmatpush1.bf16.msra.mxu0 0
    %2529 = vmatprep.subr.bf16.mxu0 0
    %2530 = vmatpush1.bf16.msra.mxu0 0
    %2531 = vmatprep.subr.bf16.mxu0 0
    %2532 = vmatpush1.bf16.msra.mxu0 0
    %2533 = vmatprep.subr.bf16.mxu0 0
    %2534 = vmatpush1.bf16.msra.mxu0 0
    %2535 = vmatprep.mubr.bf16.mxu0 0
    %2536 = vmatmul.mubr.bf16.gmra.mrb[0].mxu0 %v2502
    %v2537 = vpop.f32.mrb[0].mxu0
    %v2538 = vadd.f32 0.0, %v2537
    %v2539 = vpop.f32.mrb[0].mxu0
    %v2540 = vadd.f32 0.0, %v2539
    %v2541 = vpop.f32.mrb[0].mxu0
    %v2542 = vpop.f32.mrb[0].mxu0
    %2543 = vdwg.mxu0
    %2544 = vmatprep.subr.bf16.mxu0 %v988
    %2545 = vmatpush1.bf16.msra.mxu0 %v987
    %2546 = vmatprep.subr.bf16.mxu0 %v992
    %2547 = vmatpush1.bf16.msra.mxu0 %v991
    %2548 = vmatprep.subr.bf16.mxu0 %v996
    %2549 = vmatpush1.bf16.msra.mxu0 %v995
    %2550 = vmatprep.subr.bf16.mxu0 %v1000
    %2551 = vmatpush1.bf16.msra.mxu0 %v999
    %2552 = vmatprep.subr.bf16.mxu0 %v1004
    %2553 = vmatpush1.bf16.msra.mxu0 %v1003
    %2554 = vmatprep.subr.bf16.mxu0 %v1008
    %2555 = vmatpush1.bf16.msra.mxu0 %v1007
    %2556 = vmatprep.subr.bf16.mxu0 %v1012
    %2557 = vmatpush1.bf16.msra.mxu0 %v1011
    %2558 = vmatprep.subr.bf16.mxu0 %v1016
    %2559 = vmatpush1.bf16.msra.mxu0 %v1015
    %2560 = vmatprep.subr.bf16.mxu0 0
    %2561 = vmatpush1.bf16.msra.mxu0 0
    %2562 = vmatprep.subr.bf16.mxu0 0
    %2563 = vmatpush1.bf16.msra.mxu0 0
    %2564 = vmatprep.subr.bf16.mxu0 0
    %2565 = vmatpush1.bf16.msra.mxu0 0
    %2566 = vmatprep.subr.bf16.mxu0 0
    %2567 = vmatpush1.bf16.msra.mxu0 0
    %2568 = vmatprep.subr.bf16.mxu0 0
    %2569 = vmatpush1.bf16.msra.mxu0 0
    %2570 = vmatprep.subr.bf16.mxu0 0
    %2571 = vmatpush1.bf16.msra.mxu0 0
    %2572 = vmatprep.subr.bf16.mxu0 0
    %2573 = vmatpush1.bf16.msra.mxu0 0
    %2574 = vmatprep.subr.bf16.mxu0 0
    %2575 = vmatpush1.bf16.msra.mxu0 0
    %2576 = vmatprep.mubr.bf16.mxu0 0
    %2577 = vmatmul.mubr.bf16.gmra.mrb[0].mxu0 %v2502
    %v2578 = vpop.f32.mrb[0].mxu0
    %v2579 = vadd.f32 0.0, %v2578
    %v2580 = vpop.f32.mrb[0].mxu0
    %v2581 = vadd.f32 0.0, %v2580
    %v2582 = vpop.f32.mrb[0].mxu0
    %v2583 = vpop.f32.mrb[0].mxu0
    %2584 = vdwg.mxu0
    %2585 = vmatprep.subr.bf16.mxu0 %v1228
    %2586 = vmatpush1.bf16.msra.mxu0 %v1227
    %2587 = vmatprep.subr.bf16.mxu0 %v1232
    %2588 = vmatpush1.bf16.msra.mxu0 %v1231
    %2589 = vmatprep.subr.bf16.mxu0 %v1236
    %2590 = vmatpush1.bf16.msra.mxu0 %v1235
    %2591 = vmatprep.subr.bf16.mxu0 %v1240
    %2592 = vmatpush1.bf16.msra.mxu0 %v1239
    %2593 = vmatprep.subr.bf16.mxu0 %v1244
    %2594 = vmatpush1.bf16.msra.mxu0 %v1243
    %2595 = vmatprep.subr.bf16.mxu0 %v1248
    %2596 = vmatpush1.bf16.msra.mxu0 %v1247
    %2597 = vmatprep.subr.bf16.mxu0 %v1252
    %2598 = vmatpush1.bf16.msra.mxu0 %v1251
    %2599 = vmatprep.subr.bf16.mxu0 %v1256
    %2600 = vmatpush1.bf16.msra.mxu0 %v1255
    %2601 = vmatprep.subr.bf16.mxu0 0
    %2602 = vmatpush1.bf16.msra.mxu0 0
    %2603 = vmatprep.subr.bf16.mxu0 0
    %2604 = vmatpush1.bf16.msra.mxu0 0
    %2605 = vmatprep.subr.bf16.mxu0 0
    %2606 = vmatpush1.bf16.msra.mxu0 0
    %2607 = vmatprep.subr.bf16.mxu0 0
    %2608 = vmatpush1.bf16.msra.mxu0 0
    %2609 = vmatprep.subr.bf16.mxu0 0
    %2610 = vmatpush1.bf16.msra.mxu0 0
    %2611 = vmatprep.subr.bf16.mxu0 0
    %2612 = vmatpush1.bf16.msra.mxu0 0
    %2613 = vmatprep.subr.bf16.mxu0 0
    %2614 = vmatpush1.bf16.msra.mxu0 0
    %2615 = vmatprep.subr.bf16.mxu0 0
    %2616 = vmatpush1.bf16.msra.mxu0 0
    %2617 = vmatprep.mubr.bf16.mxu0 0
    %2618 = vmatmul.mubr.bf16.gmra.mrb[0].mxu0 %v2376
    %v2619 = vpop.f32.mrb[0].mxu0
    %v2620 = vadd.f32 %v2538, %v2619
    %v2621 = vpop.f32.mrb[0].mxu0
    %v2622 = vadd.f32 %v2540, %v2621
    %v2623 = vpop.f32.mrb[0].mxu0
    %v2624 = vpop.f32.mrb[0].mxu0
    %2625 = vdwg.mxu0
    %2626 = vmatprep.subr.bf16.mxu0 %v1230
    %2627 = vmatpush1.bf16.msra.mxu0 %v1229
    %2628 = vmatprep.subr.bf16.mxu0 %v1234
    %2629 = vmatpush1.bf16.msra.mxu0 %v1233
    %2630 = vmatprep.subr.bf16.mxu0 %v1238
    %2631 = vmatpush1.bf16.msra.mxu0 %v1237
    %2632 = vmatprep.subr.bf16.mxu0 %v1242
    %2633 = vmatpush1.bf16.msra.mxu0 %v1241
    %2634 = vmatprep.subr.bf16.mxu0 %v1246
    %2635 = vmatpush1.bf16.msra.mxu0 %v1245
    %2636 = vmatprep.subr.bf16.mxu0 %v1250
    %2637 = vmatpush1.bf16.msra.mxu0 %v1249
    %2638 = vmatprep.subr.bf16.mxu0 %v1254
    %2639 = vmatpush1.bf16.msra.mxu0 %v1253
    %2640 = vmatprep.subr.bf16.mxu0 %v1258
    %2641 = vmatpush1.bf16.msra.mxu0 %v1257
    %2642 = vmatprep.subr.bf16.mxu0 0
    %2643 = vmatpush1.bf16.msra.mxu0 0
    %2644 = vmatprep.subr.bf16.mxu0 0
    %2645 = vmatpush1.bf16.msra.mxu0 0
    %2646 = vmatprep.subr.bf16.mxu0 0
    %2647 = vmatpush1.bf16.msra.mxu0 0
    %2648 = vmatprep.subr.bf16.mxu0 0
    %2649 = vmatpush1.bf16.msra.mxu0 0
    %2650 = vmatprep.subr.bf16.mxu0 0
    %2651 = vmatpush1.bf16.msra.mxu0 0
    %2652 = vmatprep.subr.bf16.mxu0 0
    %2653 = vmatpush1.bf16.msra.mxu0 0
    %2654 = vmatprep.subr.bf16.mxu0 0
    %2655 = vmatpush1.bf16.msra.mxu0 0
    %2656 = vmatprep.subr.bf16.mxu0 0
    %2657 = vmatpush1.bf16.msra.mxu0 0
    %2658 = vmatprep.mubr.bf16.mxu0 0
    %2659 = vmatmul.mubr.bf16.gmra.mrb[0].mxu0 %v2376
    %v2660 = vpop.f32.mrb[0].mxu0
    %v2661 = vadd.f32 %v2579, %v2660
    %v2662 = vpop.f32.mrb[0].mxu0
    %v2663 = vadd.f32 %v2581, %v2662
    %v2664 = vpop.f32.mrb[0].mxu0
    %v2665 = vpop.f32.mrb[0].mxu0
    %2666 = vdwg.mxu0
    %v2667 = vadd.f32 %v2620, %v1377
    %v2668 = vadd.f32 %v2622, %v1381
    %v2669 = vadd.f32 %v2661, %v1385
    %v2670 = vadd.f32 %v2663, %v1389
    %v2671 = vxor.u32 %v2667, 2147483648
    %v2672 = vxor.u32 %v2668, 2147483648
    %v2673 = vxor.u32 %v2669, 2147483648
    %v2674 = vmul.f32 %v2671, 1.442695
    %v2675 = vpow.pop %v2674
    %v2676 = vmul.f32 %v2672, 1.442695
    %v2677 = vpow.pop %v2676
    %v2678 = vmul.f32 %v2673, 1.442695
    %v2679 = vpow.pop %v2678
    %v2680 = vadd.f32 %v2675, 1.0
    %v2681 = vadd.f32 %v2677, 1.0
    %v2682 = vadd.f32 %v2679, 1.0
    %v2683 = vrcp.pop %v2680
    %v2684 = vmul.f32 1.0, %v2683
    %v2685 = vrcp.pop %v2681
    %v2686 = vmul.f32 1.0, %v2685
    %v2687 = vrcp.pop %v2682
    %v2688 = vmul.f32 1.0, %v2687
    %v2689 = vtanh.pop %v2670
    %v2690 = vmul.f32 %v2686, %v2373
    %v2691 = vmul.f32 %v2684, %v2689
    %v2692 = vadd.f32 %v2690, %v2691
    %v2693 = vtanh.pop %v2692
    %v2694 = vmul.f32 %v2688, %v2693
    %v2695 = vpack.c.bf16 %v2501, %v2501
    %v2697 = vrot.slane %v2695, 1
    %2699 = vmatprep.subr.bf16.mxu0 %v590
    %2700 = vmatpush1.bf16.msra.mxu0 %v589
    %2701 = vmatprep.subr.bf16.mxu0 %v594
    %2702 = vmatpush1.bf16.msra.mxu0 %v593
    %2703 = vmatprep.subr.bf16.mxu0 %v598
    %2704 = vmatpush1.bf16.msra.mxu0 %v597
    %2705 = vmatprep.subr.bf16.mxu0 %v602
    %2706 = vmatpush1.bf16.msra.mxu0 %v601
    %2707 = vmatprep.subr.bf16.mxu0 %v606
    %2708 = vmatpush1.bf16.msra.mxu0 %v605
    %2709 = vmatprep.subr.bf16.mxu0 %v610
    %2710 = vmatpush1.bf16.msra.mxu0 %v609
    %2711 = vmatprep.subr.bf16.mxu0 %v614
    %2712 = vmatpush1.bf16.msra.mxu0 %v613
    %2713 = vmatprep.subr.bf16.mxu0 %v618
    %2714 = vmatpush1.bf16.msra.mxu0 %v617
    %2715 = vmatprep.subr.bf16.mxu0 0
    %2716 = vmatpush1.bf16.msra.mxu0 0
    %2717 = vmatprep.subr.bf16.mxu0 0
    %2718 = vmatpush1.bf16.msra.mxu0 0
    %2719 = vmatprep.subr.bf16.mxu0 0
    %2720 = vmatpush1.bf16.msra.mxu0 0
    %2721 = vmatprep.subr.bf16.mxu0 0
    %2722 = vmatpush1.bf16.msra.mxu0 0
    %2723 = vmatprep.subr.bf16.mxu0 0
    %2724 = vmatpush1.bf16.msra.mxu0 0
    %2725 = vmatprep.subr.bf16.mxu0 0
    %2726 = vmatpush1.bf16.msra.mxu0 0
    %2727 = vmatprep.subr.bf16.mxu0 0
    %2728 = vmatpush1.bf16.msra.mxu0 0
    %2729 = vmatprep.subr.bf16.mxu0 0
    %2730 = vmatpush1.bf16.msra.mxu0 0
    %2731 = vmatprep.mubr.bf16.mxu0 0
    %2732 = vmatmul.mubr.bf16.gmra.mrb[0].mxu0 %v2697
    %v2733 = vpop.f32.mrb[0].mxu0
    %v2734 = vadd.f32 0.0, %v2733
    %v2735 = vpop.f32.mrb[0].mxu0
    %v2736 = vadd.f32 0.0, %v2735
    %v2737 = vpop.f32.mrb[0].mxu0
    %v2738 = vpop.f32.mrb[0].mxu0
    %2739 = vdwg.mxu0
    %2740 = vmatprep.subr.bf16.mxu0 %v592
    %2741 = vmatpush1.bf16.msra.mxu0 %v591
    %2742 = vmatprep.subr.bf16.mxu0 %v596
    %2743 = vmatpush1.bf16.msra.mxu0 %v595
    %2744 = vmatprep.subr.bf16.mxu0 %v600
    %2745 = vmatpush1.bf16.msra.mxu0 %v599
    %2746 = vmatprep.subr.bf16.mxu0 %v604
    %2747 = vmatpush1.bf16.msra.mxu0 %v603
    %2748 = vmatprep.subr.bf16.mxu0 %v608
    %2749 = vmatpush1.bf16.msra.mxu0 %v607
    %2750 = vmatprep.subr.bf16.mxu0 %v612
    %2751 = vmatpush1.bf16.msra.mxu0 %v611
    %2752 = vmatprep.subr.bf16.mxu0 %v616
    %2753 = vmatpush1.bf16.msra.mxu0 %v615
    %2754 = vmatprep.subr.bf16.mxu0 %v620
    %2755 = vmatpush1.bf16.msra.mxu0 %v619
    %2756 = vmatprep.subr.bf16.mxu0 0
    %2757 = vmatpush1.bf16.msra.mxu0 0
    %2758 = vmatprep.subr.bf16.mxu0 0
    %2759 = vmatpush1.bf16.msra.mxu0 0
    %2760 = vmatprep.subr.bf16.mxu0 0
    %2761 = vmatpush1.bf16.msra.mxu0 0
    %2762 = vmatprep.subr.bf16.mxu0 0
    %2763 = vmatpush1.bf16.msra.mxu0 0
    %2764 = vmatprep.subr.bf16.mxu0 0
    %2765 = vmatpush1.bf16.msra.mxu0 0
    %2766 = vmatprep.subr.bf16.mxu0 0
    %2767 = vmatpush1.bf16.msra.mxu0 0
    %2768 = vmatprep.subr.bf16.mxu0 0
    %2769 = vmatpush1.bf16.msra.mxu0 0
    %2770 = vmatprep.subr.bf16.mxu0 0
    %2771 = vmatpush1.bf16.msra.mxu0 0
    %2772 = vmatprep.mubr.bf16.mxu0 0
    %2773 = vmatmul.mubr.bf16.gmra.mrb[0].mxu0 %v2697
    %v2774 = vpop.f32.mrb[0].mxu0
    %v2775 = vadd.f32 0.0, %v2774
    %v2776 = vpop.f32.mrb[0].mxu0
    %v2777 = vadd.f32 0.0, %v2776
    %v2778 = vpop.f32.mrb[0].mxu0
    %v2779 = vpop.f32.mrb[0].mxu0
    %2780 = vdwg.mxu0
    %v2785 = vrot.slane %v2734, 4
    %v2786 = vrot.slane %v2736, 4
    %v2787 = vrot.slane %v2775, 4
    %v2788 = vrot.slane %v2777, 4
    %v2793 = vadd.f32 %v446, %v2785
    %v2794 = vadd.f32 %v448, %v2786
    %v2795 = vadd.f32 %v489, %v2787
    %v2796 = vadd.f32 %v491, %v2788
    %v2797 = vxor.u32 %v2793, 2147483648
    %v2798 = vxor.u32 %v2794, 2147483648
    %v2799 = vxor.u32 %v2795, 2147483648
    %v2800 = vmul.f32 %v2797, 1.442695
    %v2801 = vpow.pop %v2800
    %v2802 = vmul.f32 %v2798, 1.442695
    %v2803 = vpow.pop %v2802
    %v2804 = vmul.f32 %v2799, 1.442695
    %v2805 = vpow.pop %v2804
    %v2806 = vadd.f32 %v2801, 1.0
    %v2807 = vadd.f32 %v2803, 1.0
    %v2808 = vadd.f32 %v2805, 1.0
    %v2809 = vrcp.pop %v2806
    %v2810 = vmul.f32 1.0, %v2809
    %v2811 = vrcp.pop %v2807
    %v2812 = vmul.f32 1.0, %v2811
    %v2813 = vrcp.pop %v2808
    %v2814 = vmul.f32 1.0, %v2813
    %v2815 = vtanh.pop %v2796
    %v2817 = vrot.slane %v2499, 6
    %v2819 = vmul.f32 %v2812, %v2817
    %v2820 = vmul.f32 %v2810, %v2815
    %v2821 = vadd.f32 %v2819, %v2820
    %v2822 = vtanh.pop %v2821
    %v2823 = vmul.f32 %v2814, %v2822
    %v2824 = vpack.c.bf16 %v2694, %v2694
    %2825 = vmatprep.subr.bf16.mxu0 %v986
    %2826 = vmatpush1.bf16.msra.mxu0 %v985
    %2827 = vmatprep.subr.bf16.mxu0 %v990
    %2828 = vmatpush1.bf16.msra.mxu0 %v989
    %2829 = vmatprep.subr.bf16.mxu0 %v994
    %2830 = vmatpush1.bf16.msra.mxu0 %v993
    %2831 = vmatprep.subr.bf16.mxu0 %v998
    %2832 = vmatpush1.bf16.msra.mxu0 %v997
    %2833 = vmatprep.subr.bf16.mxu0 %v1002
    %2834 = vmatpush1.bf16.msra.mxu0 %v1001
    %2835 = vmatprep.subr.bf16.mxu0 %v1006
    %2836 = vmatpush1.bf16.msra.mxu0 %v1005
    %2837 = vmatprep.subr.bf16.mxu0 %v1010
    %2838 = vmatpush1.bf16.msra.mxu0 %v1009
    %2839 = vmatprep.subr.bf16.mxu0 %v1014
    %2840 = vmatpush1.bf16.msra.mxu0 %v1013
    %2841 = vmatprep.subr.bf16.mxu0 0
    %2842 = vmatpush1.bf16.msra.mxu0 0
    %2843 = vmatprep.subr.bf16.mxu0 0
    %2844 = vmatpush1.bf16.msra.mxu0 0
    %2845 = vmatprep.subr.bf16.mxu0 0
    %2846 = vmatpush1.bf16.msra.mxu0 0
    %2847 = vmatprep.subr.bf16.mxu0 0
    %2848 = vmatpush1.bf16.msra.mxu0 0
    %2849 = vmatprep.subr.bf16.mxu0 0
    %2850 = vmatpush1.bf16.msra.mxu0 0
    %2851 = vmatprep.subr.bf16.mxu0 0
    %2852 = vmatpush1.bf16.msra.mxu0 0
    %2853 = vmatprep.subr.bf16.mxu0 0
    %2854 = vmatpush1.bf16.msra.mxu0 0
    %2855 = vmatprep.subr.bf16.mxu0 0
    %2856 = vmatpush1.bf16.msra.mxu0 0
    %2857 = vmatprep.mubr.bf16.mxu0 0
    %2858 = vmatmul.mubr.bf16.gmra.mrb[0].mxu0 %v2824
    %v2859 = vpop.f32.mrb[0].mxu0
    %v2860 = vadd.f32 0.0, %v2859
    %v2861 = vpop.f32.mrb[0].mxu0
    %v2862 = vadd.f32 0.0, %v2861
    %v2863 = vpop.f32.mrb[0].mxu0
    %v2864 = vpop.f32.mrb[0].mxu0
    %2865 = vdwg.mxu0
    %2866 = vmatprep.subr.bf16.mxu0 %v988
    %2867 = vmatpush1.bf16.msra.mxu0 %v987
    %2868 = vmatprep.subr.bf16.mxu0 %v992
    %2869 = vmatpush1.bf16.msra.mxu0 %v991
    %2870 = vmatprep.subr.bf16.mxu0 %v996
    %2871 = vmatpush1.bf16.msra.mxu0 %v995
    %2872 = vmatprep.subr.bf16.mxu0 %v1000
    %2873 = vmatpush1.bf16.msra.mxu0 %v999
    %2874 = vmatprep.subr.bf16.mxu0 %v1004
    %2875 = vmatpush1.bf16.msra.mxu0 %v1003
    %2876 = vmatprep.subr.bf16.mxu0 %v1008
    %2877 = vmatpush1.bf16.msra.mxu0 %v1007
    %2878 = vmatprep.subr.bf16.mxu0 %v1012
    %2879 = vmatpush1.bf16.msra.mxu0 %v1011
    %2880 = vmatprep.subr.bf16.mxu0 %v1016
    %2881 = vmatpush1.bf16.msra.mxu0 %v1015
    %2882 = vmatprep.subr.bf16.mxu0 0
    %2883 = vmatpush1.bf16.msra.mxu0 0
    %2884 = vmatprep.subr.bf16.mxu0 0
    %2885 = vmatpush1.bf16.msra.mxu0 0
    %2886 = vmatprep.subr.bf16.mxu0 0
    %2887 = vmatpush1.bf16.msra.mxu0 0
    %2888 = vmatprep.subr.bf16.mxu0 0
    %2889 = vmatpush1.bf16.msra.mxu0 0
    %2890 = vmatprep.subr.bf16.mxu0 0
    %2891 = vmatpush1.bf16.msra.mxu0 0
    %2892 = vmatprep.subr.bf16.mxu0 0
    %2893 = vmatpush1.bf16.msra.mxu0 0
    %2894 = vmatprep.subr.bf16.mxu0 0
    %2895 = vmatpush1.bf16.msra.mxu0 0
    %2896 = vmatprep.subr.bf16.mxu0 0
    %2897 = vmatpush1.bf16.msra.mxu0 0
    %2898 = vmatprep.mubr.bf16.mxu0 0
    %2899 = vmatmul.mubr.bf16.gmra.mrb[0].mxu0 %v2824
    %v2900 = vpop.f32.mrb[0].mxu0
    %v2901 = vadd.f32 0.0, %v2900
    %v2902 = vpop.f32.mrb[0].mxu0
    %v2903 = vadd.f32 0.0, %v2902
    %v2904 = vpop.f32.mrb[0].mxu0
    %v2905 = vpop.f32.mrb[0].mxu0
    %2906 = vdwg.mxu0
    %2907 = vmatprep.subr.bf16.mxu0 %v1228
    %2908 = vmatpush1.bf16.msra.mxu0 %v1227
    %2909 = vmatprep.subr.bf16.mxu0 %v1232
    %2910 = vmatpush1.bf16.msra.mxu0 %v1231
    %2911 = vmatprep.subr.bf16.mxu0 %v1236
    %2912 = vmatpush1.bf16.msra.mxu0 %v1235
    %2913 = vmatprep.subr.bf16.mxu0 %v1240
    %2914 = vmatpush1.bf16.msra.mxu0 %v1239
    %2915 = vmatprep.subr.bf16.mxu0 %v1244
    %2916 = vmatpush1.bf16.msra.mxu0 %v1243
    %2917 = vmatprep.subr.bf16.mxu0 %v1248
    %2918 = vmatpush1.bf16.msra.mxu0 %v1247
    %2919 = vmatprep.subr.bf16.mxu0 %v1252
    %2920 = vmatpush1.bf16.msra.mxu0 %v1251
    %2921 = vmatprep.subr.bf16.mxu0 %v1256
    %2922 = vmatpush1.bf16.msra.mxu0 %v1255
    %2923 = vmatprep.subr.bf16.mxu0 0
    %2924 = vmatpush1.bf16.msra.mxu0 0
    %2925 = vmatprep.subr.bf16.mxu0 0
    %2926 = vmatpush1.bf16.msra.mxu0 0
    %2927 = vmatprep.subr.bf16.mxu0 0
    %2928 = vmatpush1.bf16.msra.mxu0 0
    %2929 = vmatprep.subr.bf16.mxu0 0
    %2930 = vmatpush1.bf16.msra.mxu0 0
    %2931 = vmatprep.subr.bf16.mxu0 0
    %2932 = vmatpush1.bf16.msra.mxu0 0
    %2933 = vmatprep.subr.bf16.mxu0 0
    %2934 = vmatpush1.bf16.msra.mxu0 0
    %2935 = vmatprep.subr.bf16.mxu0 0
    %2936 = vmatpush1.bf16.msra.mxu0 0
    %2937 = vmatprep.subr.bf16.mxu0 0
    %2938 = vmatpush1.bf16.msra.mxu0 0
    %2939 = vmatprep.mubr.bf16.mxu0 0
    %2940 = vmatmul.mubr.bf16.gmra.mrb[0].mxu0 %v2697
    %v2941 = vpop.f32.mrb[0].mxu0
    %v2942 = vadd.f32 %v2860, %v2941
    %v2943 = vpop.f32.mrb[0].mxu0
    %v2944 = vadd.f32 %v2862, %v2943
    %v2945 = vpop.f32.mrb[0].mxu0
    %v2946 = vpop.f32.mrb[0].mxu0
    %2947 = vdwg.mxu0
    %2948 = vmatprep.subr.bf16.mxu0 %v1230
    %2949 = vmatpush1.bf16.msra.mxu0 %v1229
    %2950 = vmatprep.subr.bf16.mxu0 %v1234
    %2951 = vmatpush1.bf16.msra.mxu0 %v1233
    %2952 = vmatprep.subr.bf16.mxu0 %v1238
    %2953 = vmatpush1.bf16.msra.mxu0 %v1237
    %2954 = vmatprep.subr.bf16.mxu0 %v1242
    %2955 = vmatpush1.bf16.msra.mxu0 %v1241
    %2956 = vmatprep.subr.bf16.mxu0 %v1246
    %2957 = vmatpush1.bf16.msra.mxu0 %v1245
    %2958 = vmatprep.subr.bf16.mxu0 %v1250
    %2959 = vmatpush1.bf16.msra.mxu0 %v1249
    %2960 = vmatprep.subr.bf16.mxu0 %v1254
    %2961 = vmatpush1.bf16.msra.mxu0 %v1253
    %2962 = vmatprep.subr.bf16.mxu0 %v1258
    %2963 = vmatpush1.bf16.msra.mxu0 %v1257
    %2964 = vmatprep.subr.bf16.mxu0 0
    %2965 = vmatpush1.bf16.msra.mxu0 0
    %2966 = vmatprep.subr.bf16.mxu0 0
    %2967 = vmatpush1.bf16.msra.mxu0 0
    %2968 = vmatprep.subr.bf16.mxu0 0
    %2969 = vmatpush1.bf16.msra.mxu0 0
    %2970 = vmatprep.subr.bf16.mxu0 0
    %2971 = vmatpush1.bf16.msra.mxu0 0
    %2972 = vmatprep.subr.bf16.mxu0 0
    %2973 = vmatpush1.bf16.msra.mxu0 0
    %2974 = vmatprep.subr.bf16.mxu0 0
    %2975 = vmatpush1.bf16.msra.mxu0 0
    %2976 = vmatprep.subr.bf16.mxu0 0
    %2977 = vmatpush1.bf16.msra.mxu0 0
    %2978 = vmatprep.subr.bf16.mxu0 0
    %2979 = vmatpush1.bf16.msra.mxu0 0
    %2980 = vmatprep.mubr.bf16.mxu0 0
    %2981 = vmatmul.mubr.bf16.gmra.mrb[0].mxu0 %v2697
    %v2982 = vpop.f32.mrb[0].mxu0
    %v2983 = vadd.f32 %v2901, %v2982
    %v2984 = vpop.f32.mrb[0].mxu0
    %v2985 = vadd.f32 %v2903, %v2984
    %v2986 = vpop.f32.mrb[0].mxu0
    %v2987 = vpop.f32.mrb[0].mxu0
    %2988 = vdwg.mxu0
    %v2989 = vadd.f32 %v2942, %v1377
    %v2990 = vadd.f32 %v2944, %v1381
    %v2991 = vadd.f32 %v2983, %v1385
    %v2992 = vadd.f32 %v2985, %v1389
    %v2993 = vxor.u32 %v2989, 2147483648
    %v2994 = vxor.u32 %v2990, 2147483648
    %v2995 = vxor.u32 %v2991, 2147483648
    %v2996 = vmul.f32 %v2993, 1.442695
    %v2997 = vpow.pop %v2996
    %v2998 = vmul.f32 %v2994, 1.442695
    %v2999 = vpow.pop %v2998
    %v3000 = vmul.f32 %v2995, 1.442695
    %v3001 = vpow.pop %v3000
    %v3002 = vadd.f32 %v2997, 1.0
    %v3003 = vadd.f32 %v2999, 1.0
    %v3004 = vadd.f32 %v3001, 1.0
    %v3005 = vrcp.pop %v3002
    %v3006 = vmul.f32 1.0, %v3005
    %v3007 = vrcp.pop %v3003
    %v3008 = vmul.f32 1.0, %v3007
    %v3009 = vrcp.pop %v3004
    %v3010 = vmul.f32 1.0, %v3009
    %v3011 = vtanh.pop %v2992
    %v3012 = vmul.f32 %v3008, %v2692
    %v3013 = vmul.f32 %v3006, %v3011
    %v3014 = vadd.f32 %v3012, %v3013
    %v3015 = vtanh.pop %v3014
    %v3016 = vmul.f32 %v3010, %v3015
    %v3017 = vpack.c.bf16 %v2823, %v2823
    %v3019 = vrot.slane %v3017, 2
    %3021 = vmatprep.subr.bf16.mxu0 %v590
    %3022 = vmatpush1.bf16.msra.mxu0 %v589
    %3023 = vmatprep.subr.bf16.mxu0 %v594
    %3024 = vmatpush1.bf16.msra.mxu0 %v593
    %3025 = vmatprep.subr.bf16.mxu0 %v598
    %3026 = vmatpush1.bf16.msra.mxu0 %v597
    %3027 = vmatprep.subr.bf16.mxu0 %v602
    %3028 = vmatpush1.bf16.msra.mxu0 %v601
    %3029 = vmatprep.subr.bf16.mxu0 %v606
    %3030 = vmatpush1.bf16.msra.mxu0 %v605
    %3031 = vmatprep.subr.bf16.mxu0 %v610
    %3032 = vmatpush1.bf16.msra.mxu0 %v609
    %3033 = vmatprep.subr.bf16.mxu0 %v614
    %3034 = vmatpush1.bf16.msra.mxu0 %v613
    %3035 = vmatprep.subr.bf16.mxu0 %v618
    %3036 = vmatpush1.bf16.msra.mxu0 %v617
    %3037 = vmatprep.subr.bf16.mxu0 0
    %3038 = vmatpush1.bf16.msra.mxu0 0
    %3039 = vmatprep.subr.bf16.mxu0 0
    %3040 = vmatpush1.bf16.msra.mxu0 0
    %3041 = vmatprep.subr.bf16.mxu0 0
    %3042 = vmatpush1.bf16.msra.mxu0 0
    %3043 = vmatprep.subr.bf16.mxu0 0
    %3044 = vmatpush1.bf16.msra.mxu0 0
    %3045 = vmatprep.subr.bf16.mxu0 0
    %3046 = vmatpush1.bf16.msra.mxu0 0
    %3047 = vmatprep.subr.bf16.mxu0 0
    %3048 = vmatpush1.bf16.msra.mxu0 0
    %3049 = vmatprep.subr.bf16.mxu0 0
    %3050 = vmatpush1.bf16.msra.mxu0 0
    %3051 = vmatprep.subr.bf16.mxu0 0
    %3052 = vmatpush1.bf16.msra.mxu0 0
    %3053 = vmatprep.mubr.bf16.mxu0 0
    %3054 = vmatmul.mubr.bf16.gmra.mrb[0].mxu0 %v3019
    %v3055 = vpop.f32.mrb[0].mxu0
    %v3056 = vadd.f32 0.0, %v3055
    %v3057 = vpop.f32.mrb[0].mxu0
    %v3058 = vadd.f32 0.0, %v3057
    %v3059 = vpop.f32.mrb[0].mxu0
    %v3060 = vpop.f32.mrb[0].mxu0
    %3061 = vdwg.mxu0
    %3062 = vmatprep.subr.bf16.mxu0 %v592
    %3063 = vmatpush1.bf16.msra.mxu0 %v591
    %3064 = vmatprep.subr.bf16.mxu0 %v596
    %3065 = vmatpush1.bf16.msra.mxu0 %v595
    %3066 = vmatprep.subr.bf16.mxu0 %v600
    %3067 = vmatpush1.bf16.msra.mxu0 %v599
    %3068 = vmatprep.subr.bf16.mxu0 %v604
    %3069 = vmatpush1.bf16.msra.mxu0 %v603
    %3070 = vmatprep.subr.bf16.mxu0 %v608
    %3071 = vmatpush1.bf16.msra.mxu0 %v607
    %3072 = vmatprep.subr.bf16.mxu0 %v612
    %3073 = vmatpush1.bf16.msra.mxu0 %v611
    %3074 = vmatprep.subr.bf16.mxu0 %v616
    %3075 = vmatpush1.bf16.msra.mxu0 %v615
    %3076 = vmatprep.subr.bf16.mxu0 %v620
    %3077 = vmatpush1.bf16.msra.mxu0 %v619
    %3078 = vmatprep.subr.bf16.mxu0 0
    %3079 = vmatpush1.bf16.msra.mxu0 0
    %3080 = vmatprep.subr.bf16.mxu0 0
    %3081 = vmatpush1.bf16.msra.mxu0 0
    %3082 = vmatprep.subr.bf16.mxu0 0
    %3083 = vmatpush1.bf16.msra.mxu0 0
    %3084 = vmatprep.subr.bf16.mxu0 0
    %3085 = vmatpush1.bf16.msra.mxu0 0
    %3086 = vmatprep.subr.bf16.mxu0 0
    %3087 = vmatpush1.bf16.msra.mxu0 0
    %3088 = vmatprep.subr.bf16.mxu0 0
    %3089 = vmatpush1.bf16.msra.mxu0 0
    %3090 = vmatprep.subr.bf16.mxu0 0
    %3091 = vmatpush1.bf16.msra.mxu0 0
    %3092 = vmatprep.subr.bf16.mxu0 0
    %3093 = vmatpush1.bf16.msra.mxu0 0
    %3094 = vmatprep.mubr.bf16.mxu0 0
    %3095 = vmatmul.mubr.bf16.gmra.mrb[0].mxu0 %v3019
    %v3096 = vpop.f32.mrb[0].mxu0
    %v3097 = vadd.f32 0.0, %v3096
    %v3098 = vpop.f32.mrb[0].mxu0
    %v3099 = vadd.f32 0.0, %v3098
    %v3100 = vpop.f32.mrb[0].mxu0
    %v3101 = vpop.f32.mrb[0].mxu0
    %3102 = vdwg.mxu0
    %v3107 = vrot.slane %v3056, 2
    %v3108 = vrot.slane %v3058, 2
    %v3109 = vrot.slane %v3097, 2
    %v3110 = vrot.slane %v3099, 2
    %v3115 = vadd.f32 %v446, %v3107
    %v3116 = vadd.f32 %v448, %v3108
    %v3117 = vadd.f32 %v489, %v3109
    %v3118 = vadd.f32 %v491, %v3110
    %v3119 = vxor.u32 %v3115, 2147483648
    %v3120 = vxor.u32 %v3116, 2147483648
    %v3121 = vxor.u32 %v3117, 2147483648
    %v3122 = vmul.f32 %v3119, 1.442695
    %v3123 = vpow.pop %v3122
    %v3124 = vmul.f32 %v3120, 1.442695
    %v3125 = vpow.pop %v3124
    %v3126 = vmul.f32 %v3121, 1.442695
    %v3127 = vpow.pop %v3126
    %v3128 = vadd.f32 %v3123, 1.0
    %v3129 = vadd.f32 %v3125, 1.0
    %v3130 = vadd.f32 %v3127, 1.0
    %v3131 = vrcp.pop %v3128
    %v3132 = vmul.f32 1.0, %v3131
    %v3133 = vrcp.pop %v3129
    %v3134 = vmul.f32 1.0, %v3133
    %v3135 = vrcp.pop %v3130
    %v3136 = vmul.f32 1.0, %v3135
    %v3137 = vtanh.pop %v3118
    %v3139 = vrot.slane %v2821, 6
    %v3141 = vmul.f32 %v3134, %v3139
    %v3142 = vmul.f32 %v3132, %v3137
    %v3143 = vadd.f32 %v3141, %v3142
    %v3144 = vtanh.pop %v3143
    %v3145 = vmul.f32 %v3136, %v3144
    %v3146 = vpack.c.bf16 %v3016, %v3016
    %3147 = vmatprep.subr.bf16.mxu0 %v986
    %3148 = vmatpush1.bf16.msra.mxu0 %v985
    %3149 = vmatprep.subr.bf16.mxu0 %v990
    %3150 = vmatpush1.bf16.msra.mxu0 %v989
    %3151 = vmatprep.subr.bf16.mxu0 %v994
    %3152 = vmatpush1.bf16.msra.mxu0 %v993
    %3153 = vmatprep.subr.bf16.mxu0 %v998
    %3154 = vmatpush1.bf16.msra.mxu0 %v997
    %3155 = vmatprep.subr.bf16.mxu0 %v1002
    %3156 = vmatpush1.bf16.msra.mxu0 %v1001
    %3157 = vmatprep.subr.bf16.mxu0 %v1006
    %3158 = vmatpush1.bf16.msra.mxu0 %v1005
    %3159 = vmatprep.subr.bf16.mxu0 %v1010
    %3160 = vmatpush1.bf16.msra.mxu0 %v1009
    %3161 = vmatprep.subr.bf16.mxu0 %v1014
    %3162 = vmatpush1.bf16.msra.mxu0 %v1013
    %3163 = vmatprep.subr.bf16.mxu0 0
    %3164 = vmatpush1.bf16.msra.mxu0 0
    %3165 = vmatprep.subr.bf16.mxu0 0
    %3166 = vmatpush1.bf16.msra.mxu0 0
    %3167 = vmatprep.subr.bf16.mxu0 0
    %3168 = vmatpush1.bf16.msra.mxu0 0
    %3169 = vmatprep.subr.bf16.mxu0 0
    %3170 = vmatpush1.bf16.msra.mxu0 0
    %3171 = vmatprep.subr.bf16.mxu0 0
    %3172 = vmatpush1.bf16.msra.mxu0 0
    %3173 = vmatprep.subr.bf16.mxu0 0
    %3174 = vmatpush1.bf16.msra.mxu0 0
    %3175 = vmatprep.subr.bf16.mxu0 0
    %3176 = vmatpush1.bf16.msra.mxu0 0
    %3177 = vmatprep.subr.bf16.mxu0 0
    %3178 = vmatpush1.bf16.msra.mxu0 0
    %3179 = vmatprep.mubr.bf16.mxu0 0
    %3180 = vmatmul.mubr.bf16.gmra.mrb[0].mxu0 %v3146
    %v3181 = vpop.f32.mrb[0].mxu0
    %v3182 = vadd.f32 0.0, %v3181
    %v3183 = vpop.f32.mrb[0].mxu0
    %v3184 = vadd.f32 0.0, %v3183
    %v3185 = vpop.f32.mrb[0].mxu0
    %v3186 = vpop.f32.mrb[0].mxu0
    %3187 = vdwg.mxu0
    %3188 = vmatprep.subr.bf16.mxu0 %v988
    %3189 = vmatpush1.bf16.msra.mxu0 %v987
    %3190 = vmatprep.subr.bf16.mxu0 %v992
    %3191 = vmatpush1.bf16.msra.mxu0 %v991
    %3192 = vmatprep.subr.bf16.mxu0 %v996
    %3193 = vmatpush1.bf16.msra.mxu0 %v995
    %3194 = vmatprep.subr.bf16.mxu0 %v1000
    %3195 = vmatpush1.bf16.msra.mxu0 %v999
    %3196 = vmatprep.subr.bf16.mxu0 %v1004
    %3197 = vmatpush1.bf16.msra.mxu0 %v1003
    %3198 = vmatprep.subr.bf16.mxu0 %v1008
    %3199 = vmatpush1.bf16.msra.mxu0 %v1007
    %3200 = vmatprep.subr.bf16.mxu0 %v1012
    %3201 = vmatpush1.bf16.msra.mxu0 %v1011
    %3202 = vmatprep.subr.bf16.mxu0 %v1016
    %3203 = vmatpush1.bf16.msra.mxu0 %v1015
    %3204 = vmatprep.subr.bf16.mxu0 0
    %3205 = vmatpush1.bf16.msra.mxu0 0
    %3206 = vmatprep.subr.bf16.mxu0 0
    %3207 = vmatpush1.bf16.msra.mxu0 0
    %3208 = vmatprep.subr.bf16.mxu0 0
    %3209 = vmatpush1.bf16.msra.mxu0 0
    %3210 = vmatprep.subr.bf16.mxu0 0
    %3211 = vmatpush1.bf16.msra.mxu0 0
    %3212 = vmatprep.subr.bf16.mxu0 0
    %3213 = vmatpush1.bf16.msra.mxu0 0
    %3214 = vmatprep.subr.bf16.mxu0 0
    %3215 = vmatpush1.bf16.msra.mxu0 0
    %3216 = vmatprep.subr.bf16.mxu0 0
    %3217 = vmatpush1.bf16.msra.mxu0 0
    %3218 = vmatprep.subr.bf16.mxu0 0
    %3219 = vmatpush1.bf16.msra.mxu0 0
    %3220 = vmatprep.mubr.bf16.mxu0 0
    %3221 = vmatmul.mubr.bf16.gmra.mrb[0].mxu0 %v3146
    %v3222 = vpop.f32.mrb[0].mxu0
    %v3223 = vadd.f32 0.0, %v3222
    %v3224 = vpop.f32.mrb[0].mxu0
    %v3225 = vadd.f32 0.0, %v3224
    %v3226 = vpop.f32.mrb[0].mxu0
    %v3227 = vpop.f32.mrb[0].mxu0
    %3228 = vdwg.mxu0
    %3229 = vmatprep.subr.bf16.mxu0 %v1228
    %3230 = vmatpush1.bf16.msra.mxu0 %v1227
    %3231 = vmatprep.subr.bf16.mxu0 %v1232
    %3232 = vmatpush1.bf16.msra.mxu0 %v1231
    %3233 = vmatprep.subr.bf16.mxu0 %v1236
    %3234 = vmatpush1.bf16.msra.mxu0 %v1235
    %3235 = vmatprep.subr.bf16.mxu0 %v1240
    %3236 = vmatpush1.bf16.msra.mxu0 %v1239
    %3237 = vmatprep.subr.bf16.mxu0 %v1244
    %3238 = vmatpush1.bf16.msra.mxu0 %v1243
    %3239 = vmatprep.subr.bf16.mxu0 %v1248
    %3240 = vmatpush1.bf16.msra.mxu0 %v1247
    %3241 = vmatprep.subr.bf16.mxu0 %v1252
    %3242 = vmatpush1.bf16.msra.mxu0 %v1251
    %3243 = vmatprep.subr.bf16.mxu0 %v1256
    %3244 = vmatpush1.bf16.msra.mxu0 %v1255
    %3245 = vmatprep.subr.bf16.mxu0 0
    %3246 = vmatpush1.bf16.msra.mxu0 0
    %3247 = vmatprep.subr.bf16.mxu0 0
    %3248 = vmatpush1.bf16.msra.mxu0 0
    %3249 = vmatprep.subr.bf16.mxu0 0
    %3250 = vmatpush1.bf16.msra.mxu0 0
    %3251 = vmatprep.subr.bf16.mxu0 0
    %3252 = vmatpush1.bf16.msra.mxu0 0
    %3253 = vmatprep.subr.bf16.mxu0 0
    %3254 = vmatpush1.bf16.msra.mxu0 0
    %3255 = vmatprep.subr.bf16.mxu0 0
    %3256 = vmatpush1.bf16.msra.mxu0 0
    %3257 = vmatprep.subr.bf16.mxu0 0
    %3258 = vmatpush1.bf16.msra.mxu0 0
    %3259 = vmatprep.subr.bf16.mxu0 0
    %3260 = vmatpush1.bf16.msra.mxu0 0
    %3261 = vmatprep.mubr.bf16.mxu0 0
    %3262 = vmatmul.mubr.bf16.gmra.mrb[0].mxu0 %v3019
    %v3263 = vpop.f32.mrb[0].mxu0
    %v3264 = vadd.f32 %v3182, %v3263
    %v3265 = vpop.f32.mrb[0].mxu0
    %v3266 = vadd.f32 %v3184, %v3265
    %v3267 = vpop.f32.mrb[0].mxu0
    %v3268 = vpop.f32.mrb[0].mxu0
    %3269 = vdwg.mxu0
    %3270 = vmatprep.subr.bf16.mxu0 %v1230
    %3271 = vmatpush1.bf16.msra.mxu0 %v1229
    %3272 = vmatprep.subr.bf16.mxu0 %v1234
    %3273 = vmatpush1.bf16.msra.mxu0 %v1233
    %3274 = vmatprep.subr.bf16.mxu0 %v1238
    %3275 = vmatpush1.bf16.msra.mxu0 %v1237
    %3276 = vmatprep.subr.bf16.mxu0 %v1242
    %3277 = vmatpush1.bf16.msra.mxu0 %v1241
    %3278 = vmatprep.subr.bf16.mxu0 %v1246
    %3279 = vmatpush1.bf16.msra.mxu0 %v1245
    %3280 = vmatprep.subr.bf16.mxu0 %v1250
    %3281 = vmatpush1.bf16.msra.mxu0 %v1249
    %3282 = vmatprep.subr.bf16.mxu0 %v1254
    %3283 = vmatpush1.bf16.msra.mxu0 %v1253
    %3284 = vmatprep.subr.bf16.mxu0 %v1258
    %3285 = vmatpush1.bf16.msra.mxu0 %v1257
    %3286 = vmatprep.subr.bf16.mxu0 0
    %3287 = vmatpush1.bf16.msra.mxu0 0
    %3288 = vmatprep.subr.bf16.mxu0 0
    %3289 = vmatpush1.bf16.msra.mxu0 0
    %3290 = vmatprep.subr.bf16.mxu0 0
    %3291 = vmatpush1.bf16.msra.mxu0 0
    %3292 = vmatprep.subr.bf16.mxu0 0
    %3293 = vmatpush1.bf16.msra.mxu0 0
    %3294 = vmatprep.subr.bf16.mxu0 0
    %3295 = vmatpush1.bf16.msra.mxu0 0
    %3296 = vmatprep.subr.bf16.mxu0 0
    %3297 = vmatpush1.bf16.msra.mxu0 0
    %3298 = vmatprep.subr.bf16.mxu0 0
    %3299 = vmatpush1.bf16.msra.mxu0 0
    %3300 = vmatprep.subr.bf16.mxu0 0
    %3301 = vmatpush1.bf16.msra.mxu0 0
    %3302 = vmatprep.mubr.bf16.mxu0 0
    %3303 = vmatmul.mubr.bf16.gmra.mrb[0].mxu0 %v3019
    %v3304 = vpop.f32.mrb[0].mxu0
    %v3305 = vadd.f32 %v3223, %v3304
    %v3306 = vpop.f32.mrb[0].mxu0
    %v3307 = vadd.f32 %v3225, %v3306
    %v3308 = vpop.f32.mrb[0].mxu0
    %v3309 = vpop.f32.mrb[0].mxu0
    %3310 = vdwg.mxu0
    %v3311 = vadd.f32 %v3264, %v1377
    %v3312 = vadd.f32 %v3266, %v1381
    %v3313 = vadd.f32 %v3305, %v1385
    %v3314 = vadd.f32 %v3307, %v1389
    %v3315 = vxor.u32 %v3311, 2147483648
    %v3316 = vxor.u32 %v3312, 2147483648
    %v3317 = vxor.u32 %v3313, 2147483648
    %v3318 = vmul.f32 %v3315, 1.442695
    %v3319 = vpow.pop %v3318
    %v3320 = vmul.f32 %v3316, 1.442695
    %v3321 = vpow.pop %v3320
    %v3322 = vmul.f32 %v3317, 1.442695
    %v3323 = vpow.pop %v3322
    %v3324 = vadd.f32 %v3319, 1.0
    %v3325 = vadd.f32 %v3321, 1.0
    %v3326 = vadd.f32 %v3323, 1.0
    %v3327 = vrcp.pop %v3324
    %v3328 = vmul.f32 1.0, %v3327
    %v3329 = vrcp.pop %v3325
    %v3330 = vmul.f32 1.0, %v3329
    %v3331 = vrcp.pop %v3326
    %v3332 = vmul.f32 1.0, %v3331
    %v3333 = vtanh.pop %v3314
    %v3334 = vmul.f32 %v3330, %v3014
    %v3335 = vmul.f32 %v3328, %v3333
    %v3336 = vadd.f32 %v3334, %v3335
    %v3337 = vtanh.pop %v3336
    %v3338 = vmul.f32 %v3332, %v3337
    %v3339 = vpack.c.bf16 %v3145, %v3145
    %v3340 = vpack.c.bf16 %v3338, %v3338
    %3341 = vmatprep.subr.bf16.mxu0 %v986
    %3342 = vmatpush1.bf16.msra.mxu0 %v985
    %3343 = vmatprep.subr.bf16.mxu0 %v990
    %3344 = vmatpush1.bf16.msra.mxu0 %v989
    %3345 = vmatprep.subr.bf16.mxu0 %v994
    %3346 = vmatpush1.bf16.msra.mxu0 %v993
    %3347 = vmatprep.subr.bf16.mxu0 %v998
    %3348 = vmatpush1.bf16.msra.mxu0 %v997
    %3349 = vmatprep.subr.bf16.mxu0 %v1002
    %3350 = vmatpush1.bf16.msra.mxu0 %v1001
    %3351 = vmatprep.subr.bf16.mxu0 %v1006
    %3352 = vmatpush1.bf16.msra.mxu0 %v1005
    %3353 = vmatprep.subr.bf16.mxu0 %v1010
    %3354 = vmatpush1.bf16.msra.mxu0 %v1009
    %3355 = vmatprep.subr.bf16.mxu0 %v1014
    %3356 = vmatpush1.bf16.msra.mxu0 %v1013
    %3357 = vmatprep.subr.bf16.mxu0 0
    %3358 = vmatpush1.bf16.msra.mxu0 0
    %3359 = vmatprep.subr.bf16.mxu0 0
    %3360 = vmatpush1.bf16.msra.mxu0 0
    %3361 = vmatprep.subr.bf16.mxu0 0
    %3362 = vmatpush1.bf16.msra.mxu0 0
    %3363 = vmatprep.subr.bf16.mxu0 0
    %3364 = vmatpush1.bf16.msra.mxu0 0
    %3365 = vmatprep.subr.bf16.mxu0 0
    %3366 = vmatpush1.bf16.msra.mxu0 0
    %3367 = vmatprep.subr.bf16.mxu0 0
    %3368 = vmatpush1.bf16.msra.mxu0 0
    %3369 = vmatprep.subr.bf16.mxu0 0
    %3370 = vmatpush1.bf16.msra.mxu0 0
    %3371 = vmatprep.subr.bf16.mxu0 0
    %3372 = vmatpush1.bf16.msra.mxu0 0
    %3373 = vmatprep.mubr.bf16.mxu0 0
    %3374 = vmatmul.mubr.bf16.gmra.mrb[0].mxu0 %v3340
    %v3375 = vpop.f32.mrb[0].mxu0
    %v3376 = vadd.f32 0.0, %v3375
    %v3377 = vpop.f32.mrb[0].mxu0
    %v3378 = vadd.f32 0.0, %v3377
    %v3379 = vpop.f32.mrb[0].mxu0
    %v3380 = vpop.f32.mrb[0].mxu0
    %3381 = vdwg.mxu0
    %3382 = vmatprep.subr.bf16.mxu0 %v988
    %3383 = vmatpush1.bf16.msra.mxu0 %v987
    %3384 = vmatprep.subr.bf16.mxu0 %v992
    %3385 = vmatpush1.bf16.msra.mxu0 %v991
    %3386 = vmatprep.subr.bf16.mxu0 %v996
    %3387 = vmatpush1.bf16.msra.mxu0 %v995
    %3388 = vmatprep.subr.bf16.mxu0 %v1000
    %3389 = vmatpush1.bf16.msra.mxu0 %v999
    %3390 = vmatprep.subr.bf16.mxu0 %v1004
    %3391 = vmatpush1.bf16.msra.mxu0 %v1003
    %3392 = vmatprep.subr.bf16.mxu0 %v1008
    %3393 = vmatpush1.bf16.msra.mxu0 %v1007
    %3394 = vmatprep.subr.bf16.mxu0 %v1012
    %3395 = vmatpush1.bf16.msra.mxu0 %v1011
    %3396 = vmatprep.subr.bf16.mxu0 %v1016
    %3397 = vmatpush1.bf16.msra.mxu0 %v1015
    %3398 = vmatprep.subr.bf16.mxu0 0
    %3399 = vmatpush1.bf16.msra.mxu0 0
    %3400 = vmatprep.subr.bf16.mxu0 0
    %3401 = vmatpush1.bf16.msra.mxu0 0
    %3402 = vmatprep.subr.bf16.mxu0 0
    %3403 = vmatpush1.bf16.msra.mxu0 0
    %3404 = vmatprep.subr.bf16.mxu0 0
    %3405 = vmatpush1.bf16.msra.mxu0 0
    %3406 = vmatprep.subr.bf16.mxu0 0
    %3407 = vmatpush1.bf16.msra.mxu0 0
    %3408 = vmatprep.subr.bf16.mxu0 0
    %3409 = vmatpush1.bf16.msra.mxu0 0
    %3410 = vmatprep.subr.bf16.mxu0 0
    %3411 = vmatpush1.bf16.msra.mxu0 0
    %3412 = vmatprep.subr.bf16.mxu0 0
    %3413 = vmatpush1.bf16.msra.mxu0 0
    %3414 = vmatprep.mubr.bf16.mxu0 0
    %3415 = vmatmul.mubr.bf16.gmra.mrb[0].mxu0 %v3340
    %v3416 = vpop.f32.mrb[0].mxu0
    %v3417 = vadd.f32 0.0, %v3416
    %v3418 = vpop.f32.mrb[0].mxu0
    %v3419 = vadd.f32 0.0, %v3418
    %v3420 = vpop.f32.mrb[0].mxu0
    %v3421 = vpop.f32.mrb[0].mxu0
    %3422 = vdwg.mxu0
    %v3424 = vrot.slane %v3339, 3
    %3426 = vmatprep.subr.bf16.mxu0 %v1228
    %3427 = vmatpush1.bf16.msra.mxu0 %v1227
    %3428 = vmatprep.subr.bf16.mxu0 %v1232
    %3429 = vmatpush1.bf16.msra.mxu0 %v1231
    %3430 = vmatprep.subr.bf16.mxu0 %v1236
    %3431 = vmatpush1.bf16.msra.mxu0 %v1235
    %3432 = vmatprep.subr.bf16.mxu0 %v1240
    %3433 = vmatpush1.bf16.msra.mxu0 %v1239
    %3434 = vmatprep.subr.bf16.mxu0 %v1244
    %3435 = vmatpush1.bf16.msra.mxu0 %v1243
    %3436 = vmatprep.subr.bf16.mxu0 %v1248
    %3437 = vmatpush1.bf16.msra.mxu0 %v1247
    %3438 = vmatprep.subr.bf16.mxu0 %v1252
    %3439 = vmatpush1.bf16.msra.mxu0 %v1251
    %3440 = vmatprep.subr.bf16.mxu0 %v1256
    %3441 = vmatpush1.bf16.msra.mxu0 %v1255
    %3442 = vmatprep.subr.bf16.mxu0 0
    %3443 = vmatpush1.bf16.msra.mxu0 0
    %3444 = vmatprep.subr.bf16.mxu0 0
    %3445 = vmatpush1.bf16.msra.mxu0 0
    %3446 = vmatprep.subr.bf16.mxu0 0
    %3447 = vmatpush1.bf16.msra.mxu0 0
    %3448 = vmatprep.subr.bf16.mxu0 0
    %3449 = vmatpush1.bf16.msra.mxu0 0
    %3450 = vmatprep.subr.bf16.mxu0 0
    %3451 = vmatpush1.bf16.msra.mxu0 0
    %3452 = vmatprep.subr.bf16.mxu0 0
    %3453 = vmatpush1.bf16.msra.mxu0 0
    %3454 = vmatprep.subr.bf16.mxu0 0
    %3455 = vmatpush1.bf16.msra.mxu0 0
    %3456 = vmatprep.subr.bf16.mxu0 0
    %3457 = vmatpush1.bf16.msra.mxu0 0
    %3458 = vmatprep.mubr.bf16.mxu0 0
    %3459 = vmatmul.mubr.bf16.gmra.mrb[0].mxu0 %v3424
    %v3460 = vpop.f32.mrb[0].mxu0
    %v3461 = vadd.f32 %v3376, %v3460
    %v3462 = vpop.f32.mrb[0].mxu0
    %v3463 = vadd.f32 %v3378, %v3462
    %v3464 = vpop.f32.mrb[0].mxu0
    %v3465 = vpop.f32.mrb[0].mxu0
    %3466 = vdwg.mxu0
    %3467 = vmatprep.subr.bf16.mxu0 %v1230
    %3468 = vmatpush1.bf16.msra.mxu0 %v1229
    %3469 = vmatprep.subr.bf16.mxu0 %v1234
    %3470 = vmatpush1.bf16.msra.mxu0 %v1233
    %3471 = vmatprep.subr.bf16.mxu0 %v1238
    %3472 = vmatpush1.bf16.msra.mxu0 %v1237
    %3473 = vmatprep.subr.bf16.mxu0 %v1242
    %3474 = vmatpush1.bf16.msra.mxu0 %v1241
    %3475 = vmatprep.subr.bf16.mxu0 %v1246
    %3476 = vmatpush1.bf16.msra.mxu0 %v1245
    %3477 = vmatprep.subr.bf16.mxu0 %v1250
    %3478 = vmatpush1.bf16.msra.mxu0 %v1249
    %3479 = vmatprep.subr.bf16.mxu0 %v1254
    %3480 = vmatpush1.bf16.msra.mxu0 %v1253
    %3481 = vmatprep.subr.bf16.mxu0 %v1258
    %3482 = vmatpush1.bf16.msra.mxu0 %v1257
    %3483 = vmatprep.subr.bf16.mxu0 0
    %3484 = vmatpush1.bf16.msra.mxu0 0
    %3485 = vmatprep.subr.bf16.mxu0 0
    %3486 = vmatpush1.bf16.msra.mxu0 0
    %3487 = vmatprep.subr.bf16.mxu0 0
    %3488 = vmatpush1.bf16.msra.mxu0 0
    %3489 = vmatprep.subr.bf16.mxu0 0
    %3490 = vmatpush1.bf16.msra.mxu0 0
    %3491 = vmatprep.subr.bf16.mxu0 0
    %3492 = vmatpush1.bf16.msra.mxu0 0
    %3493 = vmatprep.subr.bf16.mxu0 0
    %3494 = vmatpush1.bf16.msra.mxu0 0
    %3495 = vmatprep.subr.bf16.mxu0 0
    %3496 = vmatpush1.bf16.msra.mxu0 0
    %3497 = vmatprep.subr.bf16.mxu0 0
    %3498 = vmatpush1.bf16.msra.mxu0 0
    %3499 = vmatprep.mubr.bf16.mxu0 0
    %3500 = vmatmul.mubr.bf16.gmra.mrb[0].mxu0 %v3424
    %v3501 = vpop.f32.mrb[0].mxu0
    %v3502 = vadd.f32 %v3417, %v3501
    %v3503 = vpop.f32.mrb[0].mxu0
    %v3504 = vadd.f32 %v3419, %v3503
    %v3505 = vpop.f32.mrb[0].mxu0
    %v3506 = vpop.f32.mrb[0].mxu0
    %3507 = vdwg.mxu0
    %v3508 = vadd.f32 %v3461, %v1377
    %v3509 = vadd.f32 %v3463, %v1381
    %v3510 = vadd.f32 %v3502, %v1385
    %v3511 = vadd.f32 %v3504, %v1389
    %v3512 = vxor.u32 %v3508, 2147483648
    %v3513 = vxor.u32 %v3509, 2147483648
    %v3514 = vxor.u32 %v3510, 2147483648
    %v3515 = vmul.f32 %v3512, 1.442695
    %v3516 = vpow.pop %v3515
    %v3517 = vmul.f32 %v3513, 1.442695
    %v3518 = vpow.pop %v3517
    %v3519 = vmul.f32 %v3514, 1.442695
    %v3520 = vpow.pop %v3519
    %v3521 = vadd.f32 %v3516, 1.0
    %v3522 = vadd.f32 %v3518, 1.0
    %v3523 = vadd.f32 %v3520, 1.0
    %v3524 = vrcp.pop %v3521
    %v3525 = vmul.f32 1.0, %v3524
    %v3526 = vrcp.pop %v3522
    %v3527 = vmul.f32 1.0, %v3526
    %v3528 = vrcp.pop %v3523
    %v3529 = vmul.f32 1.0, %v3528
    %v3530 = vtanh.pop %v3511
    %v3531 = vmul.f32 %v3527, %v3336
    %v3532 = vmul.f32 %v3525, %v3530
    %v3533 = vadd.f32 %v3531, %v3532
    %v3534 = vtanh.pop %v3533
    %v3535 = vmul.f32 %v3529, %v3534
    %v3537 = vrot.slane %v1743, 6
    %v3540 = vrot.slane %v2065, 4
    %v3543 = vrot.slane %v2375, 2
    %v3546 = vrot.slane %v3016, 6
    %v3549 = vrot.slane %v3338, 4
    %v3552 = vrot.slane %v3535, 2
    %vm3554 = vcmask 1041408
    %v3555 = vsel %vm3554, %v1421, %v3537
    %vm3556 = vcmask 1043456
    %v3557 = vsel %vm3556, %v3555, %v3540
    %vm3558 = vcmask 1045504
    %v3559 = vsel %vm3558, %v3557, %v3543
    %v3560 = vsel %vm3554, %v2694, %v3546
    %v3561 = vsel %vm3556, %v3560, %v3549
    %v3562 = vsel %vm3558, %v3561, %v3552
    %v3563 = vpack.c.bf16 %v3562, %v3559
    %v3564 = vld [vmem:[%s7] sm:$0xf]
    %v3565 = vld [vmem:[%s7 + $0x4] sm:$0xf]
    %v3566 = vld [vmem:[%s7 + $0x8] sm:$0xf]
    %v3567 = vld [vmem:[%s7 + $0xc] sm:$0xf]
    %v3568 = vld [vmem:[%s7 + $0x10] sm:$0xf]
    %v3569 = vld [vmem:[%s7 + $0x14] sm:$0xf]
    %v3570 = vld [vmem:[%s7 + $0x18] sm:$0xf]
    %v3571 = vld [vmem:[%s7 + $0x1c] sm:$0xf]
    %v3572 = vld [vmem:[%s7 + $0x20] sm:$0xf]
    %v3573 = vld [vmem:[%s7 + $0x24] sm:$0xf]
    %v3574 = vld [vmem:[%s7 + $0x28] sm:$0xf]
    %v3575 = vld [vmem:[%s7 + $0x2c] sm:$0xf]
    %v3576 = vld [vmem:[%s7 + $0x30] sm:$0xf]
    %v3577 = vld [vmem:[%s7 + $0x34] sm:$0xf]
    %v3578 = vld [vmem:[%s7 + $0x38] sm:$0xf]
    %v3579 = vld [vmem:[%s7 + $0x3c] sm:$0xf]
    %v3580 = vld [vmem:[%s8] sm:$0x1]
    %v3582 = vlaneseq
    %v3583 = vshrl.u32 %v3582, 7
    %v3584 = vsub.s32 0, %v3583
    %v3585 = vrot.slane %v3580, %v3584
    %v3603 = vunpack.c.l.b16 %v3564
    %v3604 = vunpack.c.l.b16 %v3565
    %v3605 = vunpack.c.l.b16 %v3566
    %v3606 = vunpack.c.l.b16 %v3567
    %v3607 = vunpack.c.l.b16 %v3568
    %v3608 = vunpack.c.l.b16 %v3569
    %v3609 = vunpack.c.l.b16 %v3570
    %v3610 = vunpack.c.l.b16 %v3571
    %v3611 = vunpack.c.l.b16 %v3572
    %v3612 = vunpack.c.l.b16 %v3573
    %v3613 = vunpack.c.l.b16 %v3574
    %v3614 = vunpack.c.l.b16 %v3575
    %v3615 = vunpack.c.l.b16 %v3576
    %v3616 = vunpack.c.l.b16 %v3577
    %v3617 = vunpack.c.l.b16 %v3578
    %v3618 = vunpack.c.l.b16 %v3579
    %v3619 = vpack.c.b16 %v3604, %v3603
    %v3620 = vpack.c.b16 %v3606, %v3605
    %v3621 = vpack.c.b16 %v3608, %v3607
    %v3622 = vpack.c.b16 %v3610, %v3609
    %v3623 = vpack.c.b16 %v3612, %v3611
    %v3624 = vpack.c.b16 %v3614, %v3613
    %v3625 = vpack.c.b16 %v3616, %v3615
    %v3626 = vpack.c.b16 %v3618, %v3617
    %3635 = vmatprep.subr.bf16.mxu0 0
    %3636 = vmatpush1.bf16.msra.mxu0 %v3619
    %3637 = vmatprep.subr.bf16.mxu0 0
    %3638 = vmatpush1.bf16.msra.mxu0 %v3620
    %3639 = vmatprep.subr.bf16.mxu0 0
    %3640 = vmatpush1.bf16.msra.mxu0 %v3621
    %3641 = vmatprep.subr.bf16.mxu0 0
    %3642 = vmatpush1.bf16.msra.mxu0 %v3622
    %3643 = vmatprep.subr.bf16.mxu0 0
    %3644 = vmatpush1.bf16.msra.mxu0 %v3623
    %3645 = vmatprep.subr.bf16.mxu0 0
    %3646 = vmatpush1.bf16.msra.mxu0 %v3624
    %3647 = vmatprep.subr.bf16.mxu0 0
    %3648 = vmatpush1.bf16.msra.mxu0 %v3625
    %3649 = vmatprep.subr.bf16.mxu0 0
    %3650 = vmatpush1.bf16.msra.mxu0 %v3626
    %3651 = vmatprep.subr.bf16.mxu0 0
    %3652 = vmatpush1.bf16.msra.mxu0 0
    %3653 = vmatprep.subr.bf16.mxu0 0
    %3654 = vmatpush1.bf16.msra.mxu0 0
    %3655 = vmatprep.subr.bf16.mxu0 0
    %3656 = vmatpush1.bf16.msra.mxu0 0
    %3657 = vmatprep.subr.bf16.mxu0 0
    %3658 = vmatpush1.bf16.msra.mxu0 0
    %3659 = vmatprep.subr.bf16.mxu0 0
    %3660 = vmatpush1.bf16.msra.mxu0 0
    %3661 = vmatprep.subr.bf16.mxu0 0
    %3662 = vmatpush1.bf16.msra.mxu0 0
    %3663 = vmatprep.subr.bf16.mxu0 0
    %3664 = vmatpush1.bf16.msra.mxu0 0
    %3665 = vmatprep.subr.bf16.mxu0 0
    %3666 = vmatpush1.bf16.msra.mxu0 0
    %3667 = vmatprep.mubr.bf16.mxu0 0
    %3668 = vmatmul.mubr.bf16.gmra.mrb[0].mxu0 %v3563
    %v3669 = vpop.f32.mrb[0].mxu0
    %v3670 = vadd.f32 %v3585, %v3669
    %v3671 = vpop.f32.mrb[0].mxu0
    %v3672 = vpop.f32.mrb[0].mxu0
    %v3673 = vadd.f32 %v3585, %v3672
    %v3674 = vpop.f32.mrb[0].mxu0
    %3675 = vdwg.mxu0
    %3676 = vst [vmem:[%s9] sm:$0xff] %v3670
    %3677 = vst [vmem:[%s9 + $0x8] sm:$0xff] %v3673
    // Predicated region
    $region54: #{forward.1} parent=1 // pred_check
      _
    $region55: #{forward.1} parent=1 // pred_check_branch
      %3679 = sbr.rel (0) target = $region57
    $region56: #{forward.1} parent=1 // pred_region
      _
    $region57: #{forward.1} parent=1 // pred_fallthru
      _
    // Predicated region
    $region58: #{forward.1} parent=1 // pred_check
      _
    $region59: #{forward.1} parent=1 // pred_check_branch
      %3681 = sbr.rel (0) target = $region61
    $region60: #{forward.1} parent=1 // pred_region
      _
    $region61: #{forward.1} parent=1 // pred_fallthru
      _
    %3682 = vsyncpa [#allocation3], 1
    %3683 = vsyncpa [#allocation5], 1
    %3684 = vsyncpa [#allocation8], 1

</llo_original>
